<compile_context>
chip_gen: v6e
topology: v6e:2x2x1
jax: 0.10.0
libtpu: 0.0.40
codegen_flags: <defaults>
</compile_context>

<pallas_src>
import inspect

import jax
import jax.numpy as jnp
from jax.experimental import pallas as pl
from jax.experimental.pallas import tpu as pltpu

IN_DIM = 28 * 28      # 784
H1 = 1024
H2 = 512
OUT_DIM = 10
OUT_PAD = 128         # lane-dense output slab; real logits are [:, :10]

_HAS_PIPELINE_MODE = (
    "pipeline_mode" in inspect.signature(pl.BlockSpec).parameters
    and hasattr(pl, "Buffered")
)


def _round_up(x, m):
    return (x + m - 1) // m * m


def _tm_cap():
    """Per-chip batch-tile cap: 512 on v5e-and-older (16 MiB scoped VMEM
    default), 1024 on v6e/v7x (32 MiB scoped; amortizes per-step overhead)."""
    try:
        kind = jax.devices()[0].device_kind.lower()
    except Exception:
        return 512
    if any(v in kind for v in ("v2", "v3", "v4", "v5")):
        return 512
    return 1024


def _pick_tm(bp):
    """Batch tile size for a (8-aligned) padded batch `bp`."""
    if bp <= 128:
        return bp                        # tiny batch: weight-DMA bound, 1 tile
    # >= 2 'parallel' grid steps so both v7x TensorCores get work; tile is a
    # multiple of 128 (MXU M dimension), capped per-chip by VMEM budget.
    return min(_tm_cap(), _round_up(pl.cdiv(bp, 2), 128))


def _const_spec(shape):
    """BlockSpec for a grid-invariant (weight/bias) operand, single-buffered."""
    if _HAS_PIPELINE_MODE:
        return pl.BlockSpec(shape, lambda i: (0, 0), pipeline_mode=pl.Buffered(1))
    return pl.BlockSpec(shape, lambda i: (0, 0))


def mlp_kernel(x_ref, w1_ref, b1_ref, w2_ref, b2_ref, w3_ref, b3_ref, o_ref):
    # fc1 + ReLU  (bf16 MXU operands, f32 accumulate / VPU epilogue; the bf16
    # cast of x happens here so the wrapper does no extra HBM pass).
    x = x_ref[...].astype(jnp.bfloat16)
    h1 = jnp.dot(x, w1_ref[...], preferred_element_type=jnp.float32)
    h1 = jnp.maximum(h1 + b1_ref[...], 0.0)
    # fc2 + ReLU
    h2 = jnp.dot(h1.astype(jnp.bfloat16), w2_ref[...],
                 preferred_element_type=jnp.float32)
    h2 = jnp.maximum(h2 + b2_ref[...], 0.0)
    # fc3 (output padded to 128 lanes; extra columns are zero)
    o = jnp.dot(h2.astype(jnp.bfloat16), w3_ref[...],
                preferred_element_type=jnp.float32) + b3_ref[...]
    o_ref[...] = o.astype(o_ref.dtype)


@jax.jit
def simple_mlp_forward(x, w1p, b1, w2p, b2, w3p, b3p):
    """Forward pass. x: anything flattening to (B, 784); params from prepare_params."""
    x2d = x.reshape(-1, IN_DIM).astype(jnp.float32)
    B = x2d.shape[0]
    tm = _pick_tm(_round_up(B, 8))
    Bp = _round_up(B, tm)                # every grid step sees a full tile
    if Bp != B:
        x2d = jnp.pad(x2d, ((0, Bp - B), (0, 0)))

    out = pl.pallas_call(
        mlp_kernel,
        out_shape=jax.ShapeDtypeStruct((Bp, OUT_PAD), jnp.bfloat16),
        grid_spec=pltpu.PrefetchScalarGridSpec(
            num_scalar_prefetch=0,
            grid=(Bp // tm,),
            in_specs=[
                pl.BlockSpec((tm, IN_DIM), lambda i: (i, 0)),   # x tile (f32)
                _const_spec((IN_DIM, H1)),                      # w1 (bf16)
                _const_spec((1, H1)),                           # b1 (f32)
                _const_spec((H1, H2)),                          # w2 (bf16)
                _const_spec((1, H2)),                           # b2 (f32)
                _const_spec((H2, OUT_PAD)),                     # w3 (bf16, padded)
                _const_spec((1, OUT_PAD)),                      # b3 (f32, padded)
            ],
            out_specs=pl.BlockSpec((tm, OUT_PAD), lambda i: (i, 0)),
        ),
        compiler_params=pltpu.CompilerParams(
            dimension_semantics=("parallel",),
        ),
    )(x2d, w1p, b1, w2p, b2, w3p, b3p)

    return out[:B, :OUT_DIM].astype(jnp.float32)


def prepare_params(w1, b1, w2, b2, w3, b3):
    """Convert logical f32 (in, out) params into kernel-ready bf16/f32 params."""
    w1p = w1.astype(jnp.bfloat16)
    w2p = w2.astype(jnp.bfloat16)
    w3p = jnp.pad(w3, ((0, 0), (0, OUT_PAD - OUT_DIM))).astype(jnp.bfloat16)
    b3p = jnp.pad(b3, ((0, 0), (0, OUT_PAD - OUT_DIM))).astype(jnp.float32)
    return w1p, b1.astype(jnp.float32), w2p, b2.astype(jnp.float32), w3p, b3p


def init_params(key):
    """Deterministic init mirroring nn.Linear shapes (stored as (in, out), f32)."""
    ks = jax.random.split(key, 6)

    def linear_init(kw, kb, fan_in, fan_out):
        bound = 1.0 / jnp.sqrt(fan_in)
        w = jax.random.uniform(kw, (fan_in, fan_out), jnp.float32, -bound, bound)
        b = jax.random.uniform(kb, (1, fan_out), jnp.float32, -bound, bound)
        return w, b

    w1, b1 = linear_init(ks[0], ks[1], IN_DIM, H1)
    w2, b2 = linear_init(ks[2], ks[3], H1, H2)
    w3, b3 = linear_init(ks[4], ks[5], H2, OUT_DIM)
    return w1, b1, w2, b2, w3, b3


def reference_forward(x, w1, b1, w2, b2, w3, b3):
    """Plain-JAX reference using the same bf16-operand / f32-accumulate recipe."""
    xf = x.reshape(-1, IN_DIM)
    h1 = jnp.maximum(
        jnp.dot(xf.astype(jnp.bfloat16), w1.astype(jnp.bfloat16),
                preferred_element_type=jnp.float32) + b1, 0.0)
    h2 = jnp.maximum(
        jnp.dot(h1.astype(jnp.bfloat16), w2.astype(jnp.bfloat16),
                preferred_element_type=jnp.float32) + b2, 0.0)
    return jnp.dot(h2.astype(jnp.bfloat16), w3.astype(jnp.bfloat16),
                   preferred_element_type=jnp.float32) + b3


if __name__ == "__main__":
    key = jax.random.PRNGKey(0)
    k_x, k_p = jax.random.split(key)

    # Small MNIST-like batch: NCHW (B=8, C=1, H=28, W=28)
    x = jax.random.normal(k_x, (8, 1, 28, 28), dtype=jnp.float32)
    params = init_params(k_p)
    kparams = prepare_params(*params)

    out = simple_mlp_forward(x, *kparams)
    out = jax.block_until_ready(out)
    assert out.shape == (8, OUT_DIM)

    ref = reference_forward(x, *params)
    assert jnp.allclose(out, ref, atol=2e-2, rtol=2e-2), \
        float(jnp.max(jnp.abs(out - ref)))

    print("KERNEL_OK")
</pallas_src>

<mosaic_0001>
module attributes {stable_mosaic.version = 11 : i64} {
  func.func @mlp_kernel(%arg0: i32, %arg1: memref<8x784xf32, #tpu.memory_space<vmem>>, %arg2: memref<784x1024xbf16, #tpu.memory_space<vmem>>, %arg3: memref<1x1024xf32, #tpu.memory_space<vmem>>, %arg4: memref<1024x512xbf16, #tpu.memory_space<vmem>>, %arg5: memref<1x512xf32, #tpu.memory_space<vmem>>, %arg6: memref<512x128xbf16, #tpu.memory_space<vmem>>, %arg7: memref<1x128xf32, #tpu.memory_space<vmem>>, %arg8: memref<8x128xbf16, #tpu.memory_space<vmem>>) attributes {dimension_semantics = [#tpu.dimension_semantics<parallel>], iteration_bounds = array<i64: 1>, scalar_prefetch = 0 : i64, scratch_operands = 0 : i64, tpu.core_type = #tpu.core_type<tc>, window_params = [{transform_indices = @transform_0, window_bounds = array<i64: 8, 784>}, {pipeline_mode = #tpu.pipeline_mode<synchronous>, transform_indices = @transform_1, window_bounds = array<i64: 784, 1024>}, {pipeline_mode = #tpu.pipeline_mode<synchronous>, transform_indices = @transform_2, window_bounds = array<i64: 1, 1024>}, {pipeline_mode = #tpu.pipeline_mode<synchronous>, transform_indices = @transform_3, window_bounds = array<i64: 1024, 512>}, {pipeline_mode = #tpu.pipeline_mode<synchronous>, transform_indices = @transform_4, window_bounds = array<i64: 1, 512>}, {pipeline_mode = #tpu.pipeline_mode<synchronous>, transform_indices = @transform_5, window_bounds = array<i64: 512, 128>}, {pipeline_mode = #tpu.pipeline_mode<synchronous>, transform_indices = @transform_6, window_bounds = array<i64: 1, 128>}, {transform_indices = @transform_7, window_bounds = array<i64: 8, 128>}]} {
    %c0 = arith.constant 0 : index
    %c0_0 = arith.constant 0 : index
    %0 = vector.load %arg1[%c0, %c0_0] : memref<8x784xf32, #tpu.memory_space<vmem>>, vector<8x784xf32>
    %1 = arith.truncf %0 : vector<8x784xf32> to vector<8x784xbf16>
    %c0_1 = arith.constant 0 : index
    %c0_2 = arith.constant 0 : index
    %2 = vector.load %arg2[%c0_1, %c0_2] : memref<784x1024xbf16, #tpu.memory_space<vmem>>, vector<784x1024xbf16>
    %cst = arith.constant dense<0.000000e+00> : vector<8x1024xf32>
    %3 = tpu.matmul %1, %2, %cst {dimension_numbers = #tpu.dot_dimension_numbers<[1], [0], [0], [1], [0, 0, 1, 1], [], []>} : vector<8x784xbf16>, vector<784x1024xbf16>, vector<8x1024xf32> -> vector<8x1024xf32>
    %c0_3 = arith.constant 0 : index
    %c0_4 = arith.constant 0 : index
    %4 = vector.load %arg3[%c0_3, %c0_4] : memref<1x1024xf32, #tpu.memory_space<vmem>>, vector<1x1024xf32>
    %5 = vector.broadcast %4 : vector<1x1024xf32> to vector<8x1024xf32>
    %6 = arith.addf %3, %5 : vector<8x1024xf32>
    %cst_5 = arith.constant 0.000000e+00 : f32
    %7 = vector.broadcast %cst_5 : f32 to vector<8x1024xf32>
    %8 = arith.maximumf %6, %7 : vector<8x1024xf32>
    %9 = arith.truncf %8 : vector<8x1024xf32> to vector<8x1024xbf16>
    %c0_6 = arith.constant 0 : index
    %c0_7 = arith.constant 0 : index
    %10 = vector.load %arg4[%c0_6, %c0_7] : memref<1024x512xbf16, #tpu.memory_space<vmem>>, vector<1024x512xbf16>
    %cst_8 = arith.constant dense<0.000000e+00> : vector<8x512xf32>
    %11 = tpu.matmul %9, %10, %cst_8 {dimension_numbers = #tpu.dot_dimension_numbers<[1], [0], [0], [1], [0, 0, 1, 1], [], []>} : vector<8x1024xbf16>, vector<1024x512xbf16>, vector<8x512xf32> -> vector<8x512xf32>
    %c0_9 = arith.constant 0 : index
    %c0_10 = arith.constant 0 : index
    %12 = vector.load %arg5[%c0_9, %c0_10] : memref<1x512xf32, #tpu.memory_space<vmem>>, vector<1x512xf32>
    %13 = vector.broadcast %12 : vector<1x512xf32> to vector<8x512xf32>
    %14 = arith.addf %11, %13 : vector<8x512xf32>
    %cst_11 = arith.constant 0.000000e+00 : f32
    %15 = vector.broadcast %cst_11 : f32 to vector<8x512xf32>
    %16 = arith.maximumf %14, %15 : vector<8x512xf32>
    %17 = arith.truncf %16 : vector<8x512xf32> to vector<8x512xbf16>
    %c0_12 = arith.constant 0 : index
    %c0_13 = arith.constant 0 : index
    %18 = vector.load %arg6[%c0_12, %c0_13] : memref<512x128xbf16, #tpu.memory_space<vmem>>, vector<512x128xbf16>
    %cst_14 = arith.constant dense<0.000000e+00> : vector<8x128xf32>
    %19 = tpu.matmul %17, %18, %cst_14 {dimension_numbers = #tpu.dot_dimension_numbers<[1], [0], [0], [1], [0, 0, 1, 1], [], []>} : vector<8x512xbf16>, vector<512x128xbf16>, vector<8x128xf32> -> vector<8x128xf32>
    %c0_15 = arith.constant 0 : index
    %c0_16 = arith.constant 0 : index
    %20 = vector.load %arg7[%c0_15, %c0_16] : memref<1x128xf32, #tpu.memory_space<vmem>>, vector<1x128xf32>
    %21 = vector.broadcast %20 : vector<1x128xf32> to vector<8x128xf32>
    %22 = arith.addf %19, %21 : vector<8x128xf32>
    %23 = arith.truncf %22 : vector<8x128xf32> to vector<8x128xbf16>
    %c0_17 = arith.constant 0 : index
    %c0_18 = arith.constant 0 : index
    %24 = vector.load %arg8[%c0_17, %c0_18] : memref<8x128xbf16, #tpu.memory_space<vmem>>, vector<8x128xbf16>
    tpu.vector_store %arg8[%c0_17, %c0_18], %23 {strides = array<i32>} : memref<8x128xbf16, #tpu.memory_space<vmem>>, vector<8x128xbf16>,
    return
  }
  func.func @transform_0(%arg0: i32) -> (i32, i32) {
    %c0_i32 = arith.constant 0 : i32
    %c0_i32_0 = arith.constant 0 : i32
    return %arg0, %c0_i32 : i32, i32
  }
  func.func @transform_1(%arg0: i32) -> (i32, i32) {
    %c0_i32 = arith.constant 0 : i32
    %c0_i32_0 = arith.constant 0 : i32
    %c0_i32_1 = arith.constant 0 : i32
    return %c0_i32, %c0_i32_0 : i32, i32
  }
  func.func @transform_2(%arg0: i32) -> (i32, i32) {
    %c0_i32 = arith.constant 0 : i32
    %c0_i32_0 = arith.constant 0 : i32
    %c0_i32_1 = arith.constant 0 : i32
    return %c0_i32, %c0_i32_0 : i32, i32
  }
  func.func @transform_3(%arg0: i32) -> (i32, i32) {
    %c0_i32 = arith.constant 0 : i32
    %c0_i32_0 = arith.constant 0 : i32
    %c0_i32_1 = arith.constant 0 : i32
    return %c0_i32, %c0_i32_0 : i32, i32
  }
  func.func @transform_4(%arg0: i32) -> (i32, i32) {
    %c0_i32 = arith.constant 0 : i32
    %c0_i32_0 = arith.constant 0 : i32
    %c0_i32_1 = arith.constant 0 : i32
    return %c0_i32, %c0_i32_0 : i32, i32
  }
  func.func @transform_5(%arg0: i32) -> (i32, i32) {
    %c0_i32 = arith.constant 0 : i32
    %c0_i32_0 = arith.constant 0 : i32
    %c0_i32_1 = arith.constant 0 : i32
    return %c0_i32, %c0_i32_0 : i32, i32
  }
  func.func @transform_6(%arg0: i32) -> (i32, i32) {
    %c0_i32 = arith.constant 0 : i32
    %c0_i32_0 = arith.constant 0 : i32
    %c0_i32_1 = arith.constant 0 : i32
    return %c0_i32, %c0_i32_0 : i32, i32
  }
  func.func @transform_7(%arg0: i32) -> (i32, i32) {
    %c0_i32 = arith.constant 0 : i32
    %c0_i32_0 = arith.constant 0 : i32
    return %arg0, %c0_i32 : i32, i32
  }
}

</mosaic_0001>

<llo_original>
// kernel: simple_mlp_forward.1
$region0: #{simple_mlp_forward.1}
  #allocation0 [shape = 'u32[]', space=smem, size = 0x4, offset = 0x4, fixed_abs, tag = 'smem constant byte address 0x4 - core index']
  #allocation1 [shape = 'u32[144,128]{1,0:T(1,128)}', space=vmem, size = 0x12000, scoped, tag = 'internal scratch']
  %s0 = inlined_call_operand.vmem [shape: f32[8,784], index: 0, kind: input, shape index: {}]
  %s1 = inlined_call_operand.hbm [shape: bf16[784,1024], index: 1, kind: input, shape index: {}]
  %s2 = inlined_call_operand.hbm [shape: f32[1,1024], index: 2, kind: input, shape index: {}]
  %s3 = inlined_call_operand.hbm [shape: bf16[1024,512], index: 3, kind: input, shape index: {}]
  %s4 = inlined_call_operand.hbm [shape: f32[1,512], index: 4, kind: input, shape index: {}]
  %s5 = inlined_call_operand.hbm [shape: bf16[512,128], index: 5, kind: input, shape index: {}]
  %s6 = inlined_call_operand.hbm [shape: f32[1,128], index: 6, kind: input, shape index: {}]
  %s7 = inlined_call_operand.vmem [shape: bf16[8,128], index: 7, kind: output, shape index: {}]
  %s8 = sld [smem:[#allocation0]]
  $region62: #{simple_mlp_forward.1} parent=0
    _
  %s10 = ssub.s32 1, %s8
  %s11 = scalar_select 0, %s10, %s8
  $region1: #{simple_mlp_forward.1} parent=0
    #allocation2 [shape = 'u8[1605632]{0}', space=vmem, size = 0x188000, scoped, tag = 'input window, operand 1, single buffered']
    #allocation3 [shape = 's32[1]{0}', space=sflag, size = 0x4, scoped, tag = 'scoped memory for simple_mlp_forward.1']
    #allocation4 [shape = 'u8[4096]{0}', space=vmem, size = 0x1000, scoped, tag = 'input window, operand 2, single buffered']
    #allocation5 [shape = 's32[1]{0}', space=sflag, size = 0x4, scoped, tag = 'scoped memory for simple_mlp_forward.1']
    #allocation6 [shape = 'u8[1048576]{0}', space=vmem, size = 0x100000, scoped, tag = 'input window, operand 3, single buffered']
    #allocation7 [shape = 'u8[2048]{0}', space=vmem, size = 0x800, scoped, tag = 'input window, operand 4, single buffered']
    #allocation8 [shape = 's32[1]{0}', space=sflag, size = 0x4, scoped, tag = 'scoped memory for simple_mlp_forward.1']
    #allocation9 [shape = 'u8[131072]{0}', space=vmem, size = 0x20000, scoped, tag = 'input window, operand 5, single buffered']
    #allocation10 [shape = 'u8[512]{0}', space=vmem, size = 0x400, scoped, tag = 'input window, operand 6, single buffered']
    #allocation11 [shape = 's32[1]{0}', space=sflag, size = 0x4, scoped, tag = 'scoped memory for simple_mlp_forward.1']
    %12 = vsyncpa [#allocation3], 0
    %13 = vsyncpa [#allocation5], 0
    %14 = vsyncpa [#allocation8], 0
    %15 = vsyncpa [#allocation11], 0
    // Predicated region
    $region2: #{simple_mlp_forward.1} parent=1 // pred_check
      _
    $region3: #{simple_mlp_forward.1} parent=1 // pred_check_branch
      %17 = sbr.rel (0) target = $region5
    $region4: #{simple_mlp_forward.1} parent=1 // pred_region
      _
    $region5: #{simple_mlp_forward.1} parent=1 // pred_fallthru
      _
    // Predicated region
    $region6: #{simple_mlp_forward.1} parent=1 // pred_check
      _
    $region7: #{simple_mlp_forward.1} parent=1 // pred_check_branch
      %19 = sbr.rel (0) target = $region9
    $region8: #{simple_mlp_forward.1} parent=1 // pred_region
      %s21 = ssub.s32 50176, 50176
      %22 = vsyncadd [#allocation3], %s21
      %s23 = sshll.u32 [#allocation2], 4
      %s24 = int_to_ptr.vmem [resolvable:$true] %s23
      %29 = dma.hbm_to_vmem [thread:$0]  %s1, 50176, %s24, [#allocation3], 512, 512, 32
    $region9: #{simple_mlp_forward.1} parent=1 // pred_fallthru
      _
    // Predicated region
    $region10: #{simple_mlp_forward.1} parent=1 // pred_check
      _
    $region11: #{simple_mlp_forward.1} parent=1 // pred_check_branch
      %31 = sbr.rel (0) target = $region13
    $region12: #{simple_mlp_forward.1} parent=1 // pred_region
      %s33 = ssub.s32 128, 128
      %34 = vsyncadd [#allocation5], %s33
      %s36 = sshll.u32 [#allocation4], 4
      %s37 = int_to_ptr.vmem [resolvable:$true] %s36
      %39 = dma.hbm_to_vmem [thread:$0]  %s2, 128, %s37, [#allocation5]
    $region13: #{simple_mlp_forward.1} parent=1 // pred_fallthru
      _
    // Predicated region
    $region14: #{simple_mlp_forward.1} parent=1 // pred_check
      _
    $region15: #{simple_mlp_forward.1} parent=1 // pred_check_branch
      %41 = sbr.rel (0) target = $region17
    $region16: #{simple_mlp_forward.1} parent=1 // pred_region
      %s43 = ssub.s32 32768, 32768
      %44 = vsyncadd [#allocation5], %s43
      %s45 = sshll.u32 [#allocation6], 4
      %s46 = int_to_ptr.vmem [resolvable:$true] %s45
      %51 = dma.hbm_to_vmem [thread:$0]  %s3, 32768, %s46, [#allocation5], 256, 256, 16
    $region17: #{simple_mlp_forward.1} parent=1 // pred_fallthru
      _
    // Predicated region
    $region18: #{simple_mlp_forward.1} parent=1 // pred_check
      _
    $region19: #{simple_mlp_forward.1} parent=1 // pred_check_branch
      %53 = sbr.rel (0) target = $region21
    $region20: #{simple_mlp_forward.1} parent=1 // pred_region
      %s55 = ssub.s32 64, 64
      %56 = vsyncadd [#allocation8], %s55
      %s58 = sshll.u32 [#allocation7], 4
      %s59 = int_to_ptr.vmem [resolvable:$true] %s58
      %61 = dma.hbm_to_vmem [thread:$0]  %s4, 64, %s59, [#allocation8]
    $region21: #{simple_mlp_forward.1} parent=1 // pred_fallthru
      _
    // Predicated region
    $region22: #{simple_mlp_forward.1} parent=1 // pred_check
      _
    $region23: #{simple_mlp_forward.1} parent=1 // pred_check_branch
      %63 = sbr.rel (0) target = $region25
    $region24: #{simple_mlp_forward.1} parent=1 // pred_region
      %s65 = ssub.s32 4096, 4096
      %66 = vsyncadd [#allocation8], %s65
      %s67 = sshll.u32 [#allocation9], 4
      %s68 = int_to_ptr.vmem [resolvable:$true] %s67
      %73 = dma.hbm_to_vmem [thread:$0]  %s5, 4096, %s68, [#allocation8], 64, 64, 4
    $region25: #{simple_mlp_forward.1} parent=1 // pred_fallthru
      _
    // Predicated region
    $region26: #{simple_mlp_forward.1} parent=1 // pred_check
      _
    $region27: #{simple_mlp_forward.1} parent=1 // pred_check_branch
      %75 = sbr.rel (0) target = $region29
    $region28: #{simple_mlp_forward.1} parent=1 // pred_region
      %s77 = ssub.s32 16, 16
      %78 = vsyncadd [#allocation11], %s77
      %s80 = sshll.u32 [#allocation10], 4
      %s81 = int_to_ptr.vmem [resolvable:$true] %s80
      %83 = dma.hbm_to_vmem [thread:$0]  %s6, 16, %s81, [#allocation11]
    $region29: #{simple_mlp_forward.1} parent=1 // pred_fallthru
      _
    // Predicated region
    $region30: #{simple_mlp_forward.1} parent=1 // pred_check
      _
    $region31: #{simple_mlp_forward.1} parent=1 // pred_check_branch
      %85 = sbr.rel (0) target = $region33
    $region32: #{simple_mlp_forward.1} parent=1 // pred_region
      %86 = dma.done [#allocation3], 50176
    $region33: #{simple_mlp_forward.1} parent=1 // pred_fallthru
      _
    // Predicated region
    $region34: #{simple_mlp_forward.1} parent=1 // pred_check
      _
    $region35: #{simple_mlp_forward.1} parent=1 // pred_check_branch
      %88 = sbr.rel (0) target = $region37
    $region36: #{simple_mlp_forward.1} parent=1 // pred_region
      %89 = dma.done [#allocation5], 128
    $region37: #{simple_mlp_forward.1} parent=1 // pred_fallthru
      _
    // Predicated region
    $region38: #{simple_mlp_forward.1} parent=1 // pred_check
      _
    $region39: #{simple_mlp_forward.1} parent=1 // pred_check_branch
      %91 = sbr.rel (0) target = $region41
    $region40: #{simple_mlp_forward.1} parent=1 // pred_region
      %92 = dma.done [#allocation5], 32768
    $region41: #{simple_mlp_forward.1} parent=1 // pred_fallthru
      _
    // Predicated region
    $region42: #{simple_mlp_forward.1} parent=1 // pred_check
      _
    $region43: #{simple_mlp_forward.1} parent=1 // pred_check_branch
      %94 = sbr.rel (0) target = $region45
    $region44: #{simple_mlp_forward.1} parent=1 // pred_region
      %95 = dma.done [#allocation8], 64
    $region45: #{simple_mlp_forward.1} parent=1 // pred_fallthru
      _
    // Predicated region
    $region46: #{simple_mlp_forward.1} parent=1 // pred_check
      _
    $region47: #{simple_mlp_forward.1} parent=1 // pred_check_branch
      %97 = sbr.rel (0) target = $region49
    $region48: #{simple_mlp_forward.1} parent=1 // pred_region
      %98 = dma.done [#allocation8], 4096
    $region49: #{simple_mlp_forward.1} parent=1 // pred_fallthru
      _
    // Predicated region
    $region50: #{simple_mlp_forward.1} parent=1 // pred_check
      _
    $region51: #{simple_mlp_forward.1} parent=1 // pred_check_branch
      %100 = sbr.rel (0) target = $region53
    $region52: #{simple_mlp_forward.1} parent=1 // pred_region
      %101 = dma.done [#allocation11], 16
    $region53: #{simple_mlp_forward.1} parent=1 // pred_fallthru
      _
    %v103 = vld [vmem:[%s0] sm:$0xff]
    %v104 = vld [vmem:[%s0 + $0x8] sm:$0xff]
    %v105 = vld [vmem:[%s0 + $0x10] sm:$0xff]
    %v106 = vld [vmem:[%s0 + $0x18] sm:$0xff]
    %v107 = vld [vmem:[%s0 + $0x20] sm:$0xff]
    %v108 = vld [vmem:[%s0 + $0x28] sm:$0xff]
    %v109 = vld [vmem:[%s0 + $0x30] sm:$0xff]
    %v110 = vpack.c.bf16 %v103, %v103
    %v111 = vpack.c.bf16 %v104, %v104
    %v112 = vpack.c.bf16 %v105, %v105
    %v113 = vpack.c.bf16 %v106, %v106
    %v114 = vpack.c.bf16 %v107, %v107
    %v115 = vpack.c.bf16 %v108, %v108
    %v116 = vpack.c.bf16 %v109, %v109
    %v117 = vld [vmem:[#allocation2] sm:$0xff]
    %v118 = vld [vmem:[#allocation2 + $0x8] sm:$0xff]
    %v119 = vld [vmem:[#allocation2 + $0x10] sm:$0xff]
    %v120 = vld [vmem:[#allocation2 + $0x18] sm:$0xff]
    %v121 = vld [vmem:[#allocation2 + $0x20] sm:$0xff]
    %v122 = vld [vmem:[#allocation2 + $0x28] sm:$0xff]
    %v123 = vld [vmem:[#allocation2 + $0x30] sm:$0xff]
    %v124 = vld [vmem:[#allocation2 + $0x38] sm:$0xff]
    %v125 = vld [vmem:[#allocation2 + $0x40] sm:$0xff]
    %v126 = vld [vmem:[#allocation2 + $0x48] sm:$0xff]
    %v127 = vld [vmem:[#allocation2 + $0x50] sm:$0xff]
    %v128 = vld [vmem:[#allocation2 + $0x58] sm:$0xff]
    %v129 = vld [vmem:[#allocation2 + $0x60] sm:$0xff]
    %v130 = vld [vmem:[#allocation2 + $0x68] sm:$0xff]
    %v131 = vld [vmem:[#allocation2 + $0x70] sm:$0xff]
    %v132 = vld [vmem:[#allocation2 + $0x78] sm:$0xff]
    %v133 = vld [vmem:[#allocation2 + $0x80] sm:$0xff]
    %v134 = vld [vmem:[#allocation2 + $0x88] sm:$0xff]
    %v135 = vld [vmem:[#allocation2 + $0x90] sm:$0xff]
    %v136 = vld [vmem:[#allocation2 + $0x98] sm:$0xff]
    %v137 = vld [vmem:[#allocation2 + $0xa0] sm:$0xff]
    %v138 = vld [vmem:[#allocation2 + $0xa8] sm:$0xff]
    %v139 = vld [vmem:[#allocation2 + $0xb0] sm:$0xff]
    %v140 = vld [vmem:[#allocation2 + $0xb8] sm:$0xff]
    %v141 = vld [vmem:[#allocation2 + $0xc0] sm:$0xff]
    %v142 = vld [vmem:[#allocation2 + $0xc8] sm:$0xff]
    %v143 = vld [vmem:[#allocation2 + $0xd0] sm:$0xff]
    %v144 = vld [vmem:[#allocation2 + $0xd8] sm:$0xff]
    %v145 = vld [vmem:[#allocation2 + $0xe0] sm:$0xff]
    %v146 = vld [vmem:[#allocation2 + $0xe8] sm:$0xff]
    %v147 = vld [vmem:[#allocation2 + $0xf0] sm:$0xff]
    %v148 = vld [vmem:[#allocation2 + $0xf8] sm:$0xff]
    %v149 = vld [vmem:[#allocation2 + $0x100] sm:$0xff]
    %v150 = vld [vmem:[#allocation2 + $0x108] sm:$0xff]
    %v151 = vld [vmem:[#allocation2 + $0x110] sm:$0xff]
    %v152 = vld [vmem:[#allocation2 + $0x118] sm:$0xff]
    %v153 = vld [vmem:[#allocation2 + $0x120] sm:$0xff]
    %v154 = vld [vmem:[#allocation2 + $0x128] sm:$0xff]
    %v155 = vld [vmem:[#allocation2 + $0x130] sm:$0xff]
    %v156 = vld [vmem:[#allocation2 + $0x138] sm:$0xff]
    %v157 = vld [vmem:[#allocation2 + $0x140] sm:$0xff]
    %v158 = vld [vmem:[#allocation2 + $0x148] sm:$0xff]
    %v159 = vld [vmem:[#allocation2 + $0x150] sm:$0xff]
    %v160 = vld [vmem:[#allocation2 + $0x158] sm:$0xff]
    %v161 = vld [vmem:[#allocation2 + $0x160] sm:$0xff]
    %v162 = vld [vmem:[#allocation2 + $0x168] sm:$0xff]
    %v163 = vld [vmem:[#allocation2 + $0x170] sm:$0xff]
    %v164 = vld [vmem:[#allocation2 + $0x178] sm:$0xff]
    %v165 = vld [vmem:[#allocation2 + $0x180] sm:$0xff]
    %v166 = vld [vmem:[#allocation2 + $0x188] sm:$0xff]
    %v167 = vld [vmem:[#allocation2 + $0x190] sm:$0xff]
    %v168 = vld [vmem:[#allocation2 + $0x198] sm:$0xff]
    %v169 = vld [vmem:[#allocation2 + $0x1a0] sm:$0xff]
    %v170 = vld [vmem:[#allocation2 + $0x1a8] sm:$0xff]
    %v171 = vld [vmem:[#allocation2 + $0x1b0] sm:$0xff]
    %v172 = vld [vmem:[#allocation2 + $0x1b8] sm:$0xff]
    %v173 = vld [vmem:[#allocation2 + $0x1c0] sm:$0xff]
    %v174 = vld [vmem:[#allocation2 + $0x1c8] sm:$0xff]
    %v175 = vld [vmem:[#allocation2 + $0x1d0] sm:$0xff]
    %v176 = vld [vmem:[#allocation2 + $0x1d8] sm:$0xff]
    %v177 = vld [vmem:[#allocation2 + $0x1e0] sm:$0xff]
    %v178 = vld [vmem:[#allocation2 + $0x1e8] sm:$0xff]
    %v179 = vld [vmem:[#allocation2 + $0x1f0] sm:$0xff]
    %v180 = vld [vmem:[#allocation2 + $0x1f8] sm:$0xff]
    %v181 = vld [vmem:[#allocation2 + $0x200] sm:$0xff]
    %v182 = vld [vmem:[#allocation2 + $0x208] sm:$0xff]
    %v183 = vld [vmem:[#allocation2 + $0x210] sm:$0xff]
    %v184 = vld [vmem:[#allocation2 + $0x218] sm:$0xff]
    %v185 = vld [vmem:[#allocation2 + $0x220] sm:$0xff]
    %v186 = vld [vmem:[#allocation2 + $0x228] sm:$0xff]
    %v187 = vld [vmem:[#allocation2 + $0x230] sm:$0xff]
    %v188 = vld [vmem:[#allocation2 + $0x238] sm:$0xff]
    %v189 = vld [vmem:[#allocation2 + $0x240] sm:$0xff]
    %v190 = vld [vmem:[#allocation2 + $0x248] sm:$0xff]
    %v191 = vld [vmem:[#allocation2 + $0x250] sm:$0xff]
    %v192 = vld [vmem:[#allocation2 + $0x258] sm:$0xff]
    %v193 = vld [vmem:[#allocation2 + $0x260] sm:$0xff]
    %v194 = vld [vmem:[#allocation2 + $0x268] sm:$0xff]
    %v195 = vld [vmem:[#allocation2 + $0x270] sm:$0xff]
    %v196 = vld [vmem:[#allocation2 + $0x278] sm:$0xff]
    %v197 = vld [vmem:[#allocation2 + $0x280] sm:$0xff]
    %v198 = vld [vmem:[#allocation2 + $0x288] sm:$0xff]
    %v199 = vld [vmem:[#allocation2 + $0x290] sm:$0xff]
    %v200 = vld [vmem:[#allocation2 + $0x298] sm:$0xff]
    %v201 = vld [vmem:[#allocation2 + $0x2a0] sm:$0xff]
    %v202 = vld [vmem:[#allocation2 + $0x2a8] sm:$0xff]
    %v203 = vld [vmem:[#allocation2 + $0x2b0] sm:$0xff]
    %v204 = vld [vmem:[#allocation2 + $0x2b8] sm:$0xff]
    %v205 = vld [vmem:[#allocation2 + $0x2c0] sm:$0xff]
    %v206 = vld [vmem:[#allocation2 + $0x2c8] sm:$0xff]
    %v207 = vld [vmem:[#allocation2 + $0x2d0] sm:$0xff]
    %v208 = vld [vmem:[#allocation2 + $0x2d8] sm:$0xff]
    %v209 = vld [vmem:[#allocation2 + $0x2e0] sm:$0xff]
    %v210 = vld [vmem:[#allocation2 + $0x2e8] sm:$0xff]
    %v211 = vld [vmem:[#allocation2 + $0x2f0] sm:$0xff]
    %v212 = vld [vmem:[#allocation2 + $0x2f8] sm:$0xff]
    %v213 = vld [vmem:[#allocation2 + $0x300] sm:$0xff]
    %v214 = vld [vmem:[#allocation2 + $0x308] sm:$0xff]
    %v215 = vld [vmem:[#allocation2 + $0x310] sm:$0xff]
    %v216 = vld [vmem:[#allocation2 + $0x318] sm:$0xff]
    %v217 = vld [vmem:[#allocation2 + $0x320] sm:$0xff]
    %v218 = vld [vmem:[#allocation2 + $0x328] sm:$0xff]
    %v219 = vld [vmem:[#allocation2 + $0x330] sm:$0xff]
    %v220 = vld [vmem:[#allocation2 + $0x338] sm:$0xff]
    %v221 = vld [vmem:[#allocation2 + $0x340] sm:$0xff]
    %v222 = vld [vmem:[#allocation2 + $0x348] sm:$0xff]
    %v223 = vld [vmem:[#allocation2 + $0x350] sm:$0xff]
    %v224 = vld [vmem:[#allocation2 + $0x358] sm:$0xff]
    %v225 = vld [vmem:[#allocation2 + $0x360] sm:$0xff]
    %v226 = vld [vmem:[#allocation2 + $0x368] sm:$0xff]
    %v227 = vld [vmem:[#allocation2 + $0x370] sm:$0xff]
    %v228 = vld [vmem:[#allocation2 + $0x378] sm:$0xff]
    %v229 = vld [vmem:[#allocation2 + $0x380] sm:$0xff]
    %v230 = vld [vmem:[#allocation2 + $0x388] sm:$0xff]
    %v231 = vld [vmem:[#allocation2 + $0x390] sm:$0xff]
    %v232 = vld [vmem:[#allocation2 + $0x398] sm:$0xff]
    %v233 = vld [vmem:[#allocation2 + $0x3a0] sm:$0xff]
    %v234 = vld [vmem:[#allocation2 + $0x3a8] sm:$0xff]
    %v235 = vld [vmem:[#allocation2 + $0x3b0] sm:$0xff]
    %v236 = vld [vmem:[#allocation2 + $0x3b8] sm:$0xff]
    %v237 = vld [vmem:[#allocation2 + $0x3c0] sm:$0xff]
    %v238 = vld [vmem:[#allocation2 + $0x3c8] sm:$0xff]
    %v239 = vld [vmem:[#allocation2 + $0x3d0] sm:$0xff]
    %v240 = vld [vmem:[#allocation2 + $0x3d8] sm:$0xff]
    %v241 = vld [vmem:[#allocation2 + $0x3e0] sm:$0xff]
    %v242 = vld [vmem:[#allocation2 + $0x3e8] sm:$0xff]
    %v243 = vld [vmem:[#allocation2 + $0x3f0] sm:$0xff]
    %v244 = vld [vmem:[#allocation2 + $0x3f8] sm:$0xff]
    %v245 = vld [vmem:[#allocation2 + $0x400] sm:$0xff]
    %v246 = vld [vmem:[#allocation2 + $0x408] sm:$0xff]
    %v247 = vld [vmem:[#allocation2 + $0x410] sm:$0xff]
    %v248 = vld [vmem:[#allocation2 + $0x418] sm:$0xff]
    %v249 = vld [vmem:[#allocation2 + $0x420] sm:$0xff]
    %v250 = vld [vmem:[#allocation2 + $0x428] sm:$0xff]
    %v251 = vld [vmem:[#allocation2 + $0x430] sm:$0xff]
    %v252 = vld [vmem:[#allocation2 + $0x438] sm:$0xff]
    %v253 = vld [vmem:[#allocation2 + $0x440] sm:$0xff]
    %v254 = vld [vmem:[#allocation2 + $0x448] sm:$0xff]
    %v255 = vld [vmem:[#allocation2 + $0x450] sm:$0xff]
    %v256 = vld [vmem:[#allocation2 + $0x458] sm:$0xff]
    %v257 = vld [vmem:[#allocation2 + $0x460] sm:$0xff]
    %v258 = vld [vmem:[#allocation2 + $0x468] sm:$0xff]
    %v259 = vld [vmem:[#allocation2 + $0x470] sm:$0xff]
    %v260 = vld [vmem:[#allocation2 + $0x478] sm:$0xff]
    %v261 = vld [vmem:[#allocation2 + $0x480] sm:$0xff]
    %v262 = vld [vmem:[#allocation2 + $0x488] sm:$0xff]
    %v263 = vld [vmem:[#allocation2 + $0x490] sm:$0xff]
    %v264 = vld [vmem:[#allocation2 + $0x498] sm:$0xff]
    %v265 = vld [vmem:[#allocation2 + $0x4a0] sm:$0xff]
    %v266 = vld [vmem:[#allocation2 + $0x4a8] sm:$0xff]
    %v267 = vld [vmem:[#allocation2 + $0x4b0] sm:$0xff]
    %v268 = vld [vmem:[#allocation2 + $0x4b8] sm:$0xff]
    %v269 = vld [vmem:[#allocation2 + $0x4c0] sm:$0xff]
    %v270 = vld [vmem:[#allocation2 + $0x4c8] sm:$0xff]
    %v271 = vld [vmem:[#allocation2 + $0x4d0] sm:$0xff]
    %v272 = vld [vmem:[#allocation2 + $0x4d8] sm:$0xff]
    %v273 = vld [vmem:[#allocation2 + $0x4e0] sm:$0xff]
    %v274 = vld [vmem:[#allocation2 + $0x4e8] sm:$0xff]
    %v275 = vld [vmem:[#allocation2 + $0x4f0] sm:$0xff]
    %v276 = vld [vmem:[#allocation2 + $0x4f8] sm:$0xff]
    %v277 = vld [vmem:[#allocation2 + $0x500] sm:$0xff]
    %v278 = vld [vmem:[#allocation2 + $0x508] sm:$0xff]
    %v279 = vld [vmem:[#allocation2 + $0x510] sm:$0xff]
    %v280 = vld [vmem:[#allocation2 + $0x518] sm:$0xff]
    %v281 = vld [vmem:[#allocation2 + $0x520] sm:$0xff]
    %v282 = vld [vmem:[#allocation2 + $0x528] sm:$0xff]
    %v283 = vld [vmem:[#allocation2 + $0x530] sm:$0xff]
    %v284 = vld [vmem:[#allocation2 + $0x538] sm:$0xff]
    %v285 = vld [vmem:[#allocation2 + $0x540] sm:$0xff]
    %v286 = vld [vmem:[#allocation2 + $0x548] sm:$0xff]
    %v287 = vld [vmem:[#allocation2 + $0x550] sm:$0xff]
    %v288 = vld [vmem:[#allocation2 + $0x558] sm:$0xff]
    %v289 = vld [vmem:[#allocation2 + $0x560] sm:$0xff]
    %v290 = vld [vmem:[#allocation2 + $0x568] sm:$0xff]
    %v291 = vld [vmem:[#allocation2 + $0x570] sm:$0xff]
    %v292 = vld [vmem:[#allocation2 + $0x578] sm:$0xff]
    %v293 = vld [vmem:[#allocation2 + $0x580] sm:$0xff]
    %v294 = vld [vmem:[#allocation2 + $0x588] sm:$0xff]
    %v295 = vld [vmem:[#allocation2 + $0x590] sm:$0xff]
    %v296 = vld [vmem:[#allocation2 + $0x598] sm:$0xff]
    %v297 = vld [vmem:[#allocation2 + $0x5a0] sm:$0xff]
    %v298 = vld [vmem:[#allocation2 + $0x5a8] sm:$0xff]
    %v299 = vld [vmem:[#allocation2 + $0x5b0] sm:$0xff]
    %v300 = vld [vmem:[#allocation2 + $0x5b8] sm:$0xff]
    %v301 = vld [vmem:[#allocation2 + $0x5c0] sm:$0xff]
    %v302 = vld [vmem:[#allocation2 + $0x5c8] sm:$0xff]
    %v303 = vld [vmem:[#allocation2 + $0x5d0] sm:$0xff]
    %v304 = vld [vmem:[#allocation2 + $0x5d8] sm:$0xff]
    %v305 = vld [vmem:[#allocation2 + $0x5e0] sm:$0xff]
    %v306 = vld [vmem:[#allocation2 + $0x5e8] sm:$0xff]
    %v307 = vld [vmem:[#allocation2 + $0x5f0] sm:$0xff]
    %v308 = vld [vmem:[#allocation2 + $0x5f8] sm:$0xff]
    %v309 = vld [vmem:[#allocation2 + $0x600] sm:$0xff]
    %v310 = vld [vmem:[#allocation2 + $0x608] sm:$0xff]
    %v311 = vld [vmem:[#allocation2 + $0x610] sm:$0xff]
    %v312 = vld [vmem:[#allocation2 + $0x618] sm:$0xff]
    %v313 = vld [vmem:[#allocation2 + $0x620] sm:$0xff]
    %v314 = vld [vmem:[#allocation2 + $0x628] sm:$0xff]
    %v315 = vld [vmem:[#allocation2 + $0x630] sm:$0xff]
    %v316 = vld [vmem:[#allocation2 + $0x638] sm:$0xff]
    %v317 = vld [vmem:[#allocation2 + $0x640] sm:$0xff]
    %v318 = vld [vmem:[#allocation2 + $0x648] sm:$0xff]
    %v319 = vld [vmem:[#allocation2 + $0x650] sm:$0xff]
    %v320 = vld [vmem:[#allocation2 + $0x658] sm:$0xff]
    %v321 = vld [vmem:[#allocation2 + $0x660] sm:$0xff]
    %v322 = vld [vmem:[#allocation2 + $0x668] sm:$0xff]
    %v323 = vld [vmem:[#allocation2 + $0x670] sm:$0xff]
    %v324 = vld [vmem:[#allocation2 + $0x678] sm:$0xff]
    %v325 = vld [vmem:[#allocation2 + $0x680] sm:$0xff]
    %v326 = vld [vmem:[#allocation2 + $0x688] sm:$0xff]
    %v327 = vld [vmem:[#allocation2 + $0x690] sm:$0xff]
    %v328 = vld [vmem:[#allocation2 + $0x698] sm:$0xff]
    %v329 = vld [vmem:[#allocation2 + $0x6a0] sm:$0xff]
    %v330 = vld [vmem:[#allocation2 + $0x6a8] sm:$0xff]
    %v331 = vld [vmem:[#allocation2 + $0x6b0] sm:$0xff]
    %v332 = vld [vmem:[#allocation2 + $0x6b8] sm:$0xff]
    %v333 = vld [vmem:[#allocation2 + $0x6c0] sm:$0xff]
    %v334 = vld [vmem:[#allocation2 + $0x6c8] sm:$0xff]
    %v335 = vld [vmem:[#allocation2 + $0x6d0] sm:$0xff]
    %v336 = vld [vmem:[#allocation2 + $0x6d8] sm:$0xff]
    %v337 = vld [vmem:[#allocation2 + $0x6e0] sm:$0xff]
    %v338 = vld [vmem:[#allocation2 + $0x6e8] sm:$0xff]
    %v339 = vld [vmem:[#allocation2 + $0x6f0] sm:$0xff]
    %v340 = vld [vmem:[#allocation2 + $0x6f8] sm:$0xff]
    %v341 = vld [vmem:[#allocation2 + $0x700] sm:$0xff]
    %v342 = vld [vmem:[#allocation2 + $0x708] sm:$0xff]
    %v343 = vld [vmem:[#allocation2 + $0x710] sm:$0xff]
    %v344 = vld [vmem:[#allocation2 + $0x718] sm:$0xff]
    %v345 = vld [vmem:[#allocation2 + $0x720] sm:$0xff]
    %v346 = vld [vmem:[#allocation2 + $0x728] sm:$0xff]
    %v347 = vld [vmem:[#allocation2 + $0x730] sm:$0xff]
    %v348 = vld [vmem:[#allocation2 + $0x738] sm:$0xff]
    %v349 = vld [vmem:[#allocation2 + $0x740] sm:$0xff]
    %v350 = vld [vmem:[#allocation2 + $0x748] sm:$0xff]
    %v351 = vld [vmem:[#allocation2 + $0x750] sm:$0xff]
    %v352 = vld [vmem:[#allocation2 + $0x758] sm:$0xff]
    %v353 = vld [vmem:[#allocation2 + $0x760] sm:$0xff]
    %v354 = vld [vmem:[#allocation2 + $0x768] sm:$0xff]
    %v355 = vld [vmem:[#allocation2 + $0x770] sm:$0xff]
    %v356 = vld [vmem:[#allocation2 + $0x778] sm:$0xff]
    %v357 = vld [vmem:[#allocation2 + $0x780] sm:$0xff]
    %v358 = vld [vmem:[#allocation2 + $0x788] sm:$0xff]
    %v359 = vld [vmem:[#allocation2 + $0x790] sm:$0xff]
    %v360 = vld [vmem:[#allocation2 + $0x798] sm:$0xff]
    %v361 = vld [vmem:[#allocation2 + $0x7a0] sm:$0xff]
    %v362 = vld [vmem:[#allocation2 + $0x7a8] sm:$0xff]
    %v363 = vld [vmem:[#allocation2 + $0x7b0] sm:$0xff]
    %v364 = vld [vmem:[#allocation2 + $0x7b8] sm:$0xff]
    %v365 = vld [vmem:[#allocation2 + $0x7c0] sm:$0xff]
    %v366 = vld [vmem:[#allocation2 + $0x7c8] sm:$0xff]
    %v367 = vld [vmem:[#allocation2 + $0x7d0] sm:$0xff]
    %v368 = vld [vmem:[#allocation2 + $0x7d8] sm:$0xff]
    %v369 = vld [vmem:[#allocation2 + $0x7e0] sm:$0xff]
    %v370 = vld [vmem:[#allocation2 + $0x7e8] sm:$0xff]
    %v371 = vld [vmem:[#allocation2 + $0x7f0] sm:$0xff]
    %v372 = vld [vmem:[#allocation2 + $0x7f8] sm:$0xff]
    %v373 = vld [vmem:[#allocation2 + $0x800] sm:$0xff]
    %v374 = vld [vmem:[#allocation2 + $0x808] sm:$0xff]
    %v375 = vld [vmem:[#allocation2 + $0x810] sm:$0xff]
    %v376 = vld [vmem:[#allocation2 + $0x818] sm:$0xff]
    %v377 = vld [vmem:[#allocation2 + $0x820] sm:$0xff]
    %v378 = vld [vmem:[#allocation2 + $0x828] sm:$0xff]
    %v379 = vld [vmem:[#allocation2 + $0x830] sm:$0xff]
    %v380 = vld [vmem:[#allocation2 + $0x838] sm:$0xff]
    %v381 = vld [vmem:[#allocation2 + $0x840] sm:$0xff]
    %v382 = vld [vmem:[#allocation2 + $0x848] sm:$0xff]
    %v383 = vld [vmem:[#allocation2 + $0x850] sm:$0xff]
    %v384 = vld [vmem:[#allocation2 + $0x858] sm:$0xff]
    %v385 = vld [vmem:[#allocation2 + $0x860] sm:$0xff]
    %v386 = vld [vmem:[#allocation2 + $0x868] sm:$0xff]
    %v387 = vld [vmem:[#allocation2 + $0x870] sm:$0xff]
    %v388 = vld [vmem:[#allocation2 + $0x878] sm:$0xff]
    %v389 = vld [vmem:[#allocation2 + $0x880] sm:$0xff]
    %v390 = vld [vmem:[#allocation2 + $0x888] sm:$0xff]
    %v391 = vld [vmem:[#allocation2 + $0x890] sm:$0xff]
    %v392 = vld [vmem:[#allocation2 + $0x898] sm:$0xff]
    %v393 = vld [vmem:[#allocation2 + $0x8a0] sm:$0xff]
    %v394 = vld [vmem:[#allocation2 + $0x8a8] sm:$0xff]
    %v395 = vld [vmem:[#allocation2 + $0x8b0] sm:$0xff]
    %v396 = vld [vmem:[#allocation2 + $0x8b8] sm:$0xff]
    %v397 = vld [vmem:[#allocation2 + $0x8c0] sm:$0xff]
    %v398 = vld [vmem:[#allocation2 + $0x8c8] sm:$0xff]
    %v399 = vld [vmem:[#allocation2 + $0x8d0] sm:$0xff]
    %v400 = vld [vmem:[#allocation2 + $0x8d8] sm:$0xff]
    %v401 = vld [vmem:[#allocation2 + $0x8e0] sm:$0xff]
    %v402 = vld [vmem:[#allocation2 + $0x8e8] sm:$0xff]
    %v403 = vld [vmem:[#allocation2 + $0x8f0] sm:$0xff]
    %v404 = vld [vmem:[#allocation2 + $0x8f8] sm:$0xff]
    %v405 = vld [vmem:[#allocation2 + $0x900] sm:$0xff]
    %v406 = vld [vmem:[#allocation2 + $0x908] sm:$0xff]
    %v407 = vld [vmem:[#allocation2 + $0x910] sm:$0xff]
    %v408 = vld [vmem:[#allocation2 + $0x918] sm:$0xff]
    %v409 = vld [vmem:[#allocation2 + $0x920] sm:$0xff]
    %v410 = vld [vmem:[#allocation2 + $0x928] sm:$0xff]
    %v411 = vld [vmem:[#allocation2 + $0x930] sm:$0xff]
    %v412 = vld [vmem:[#allocation2 + $0x938] sm:$0xff]
    %v413 = vld [vmem:[#allocation2 + $0x940] sm:$0xff]
    %v414 = vld [vmem:[#allocation2 + $0x948] sm:$0xff]
    %v415 = vld [vmem:[#allocation2 + $0x950] sm:$0xff]
    %v416 = vld [vmem:[#allocation2 + $0x958] sm:$0xff]
    %v417 = vld [vmem:[#allocation2 + $0x960] sm:$0xff]
    %v418 = vld [vmem:[#allocation2 + $0x968] sm:$0xff]
    %v419 = vld [vmem:[#allocation2 + $0x970] sm:$0xff]
    %v420 = vld [vmem:[#allocation2 + $0x978] sm:$0xff]
    %v421 = vld [vmem:[#allocation2 + $0x980] sm:$0xff]
    %v422 = vld [vmem:[#allocation2 + $0x988] sm:$0xff]
    %v423 = vld [vmem:[#allocation2 + $0x990] sm:$0xff]
    %v424 = vld [vmem:[#allocation2 + $0x998] sm:$0xff]
    %v425 = vld [vmem:[#allocation2 + $0x9a0] sm:$0xff]
    %v426 = vld [vmem:[#allocation2 + $0x9a8] sm:$0xff]
    %v427 = vld [vmem:[#allocation2 + $0x9b0] sm:$0xff]
    %v428 = vld [vmem:[#allocation2 + $0x9b8] sm:$0xff]
    %v429 = vld [vmem:[#allocation2 + $0x9c0] sm:$0xff]
    %v430 = vld [vmem:[#allocation2 + $0x9c8] sm:$0xff]
    %v431 = vld [vmem:[#allocation2 + $0x9d0] sm:$0xff]
    %v432 = vld [vmem:[#allocation2 + $0x9d8] sm:$0xff]
    %v433 = vld [vmem:[#allocation2 + $0x9e0] sm:$0xff]
    %v434 = vld [vmem:[#allocation2 + $0x9e8] sm:$0xff]
    %v435 = vld [vmem:[#allocation2 + $0x9f0] sm:$0xff]
    %v436 = vld [vmem:[#allocation2 + $0x9f8] sm:$0xff]
    %v437 = vld [vmem:[#allocation2 + $0xa00] sm:$0xff]
    %v438 = vld [vmem:[#allocation2 + $0xa08] sm:$0xff]
    %v439 = vld [vmem:[#allocation2 + $0xa10] sm:$0xff]
    %v440 = vld [vmem:[#allocation2 + $0xa18] sm:$0xff]
    %v441 = vld [vmem:[#allocation2 + $0xa20] sm:$0xff]
    %v442 = vld [vmem:[#allocation2 + $0xa28] sm:$0xff]
    %v443 = vld [vmem:[#allocation2 + $0xa30] sm:$0xff]
    %v444 = vld [vmem:[#allocation2 + $0xa38] sm:$0xff]
    %v445 = vld [vmem:[#allocation2 + $0xa40] sm:$0xff]
    %v446 = vld [vmem:[#allocation2 + $0xa48] sm:$0xff]
    %v447 = vld [vmem:[#allocation2 + $0xa50] sm:$0xff]
    %v448 = vld [vmem:[#allocation2 + $0xa58] sm:$0xff]
    %v449 = vld [vmem:[#allocation2 + $0xa60] sm:$0xff]
    %v450 = vld [vmem:[#allocation2 + $0xa68] sm:$0xff]
    %v451 = vld [vmem:[#allocation2 + $0xa70] sm:$0xff]
    %v452 = vld [vmem:[#allocation2 + $0xa78] sm:$0xff]
    %v453 = vld [vmem:[#allocation2 + $0xa80] sm:$0xff]
    %v454 = vld [vmem:[#allocation2 + $0xa88] sm:$0xff]
    %v455 = vld [vmem:[#allocation2 + $0xa90] sm:$0xff]
    %v456 = vld [vmem:[#allocation2 + $0xa98] sm:$0xff]
    %v457 = vld [vmem:[#allocation2 + $0xaa0] sm:$0xff]
    %v458 = vld [vmem:[#allocation2 + $0xaa8] sm:$0xff]
    %v459 = vld [vmem:[#allocation2 + $0xab0] sm:$0xff]
    %v460 = vld [vmem:[#allocation2 + $0xab8] sm:$0xff]
    %v461 = vld [vmem:[#allocation2 + $0xac0] sm:$0xff]
    %v462 = vld [vmem:[#allocation2 + $0xac8] sm:$0xff]
    %v463 = vld [vmem:[#allocation2 + $0xad0] sm:$0xff]
    %v464 = vld [vmem:[#allocation2 + $0xad8] sm:$0xff]
    %v465 = vld [vmem:[#allocation2 + $0xae0] sm:$0xff]
    %v466 = vld [vmem:[#allocation2 + $0xae8] sm:$0xff]
    %v467 = vld [vmem:[#allocation2 + $0xaf0] sm:$0xff]
    %v468 = vld [vmem:[#allocation2 + $0xaf8] sm:$0xff]
    %v469 = vld [vmem:[#allocation2 + $0xb00] sm:$0xff]
    %v470 = vld [vmem:[#allocation2 + $0xb08] sm:$0xff]
    %v471 = vld [vmem:[#allocation2 + $0xb10] sm:$0xff]
    %v472 = vld [vmem:[#allocation2 + $0xb18] sm:$0xff]
    %v473 = vld [vmem:[#allocation2 + $0xb20] sm:$0xff]
    %v474 = vld [vmem:[#allocation2 + $0xb28] sm:$0xff]
    %v475 = vld [vmem:[#allocation2 + $0xb30] sm:$0xff]
    %v476 = vld [vmem:[#allocation2 + $0xb38] sm:$0xff]
    %v477 = vld [vmem:[#allocation2 + $0xb40] sm:$0xff]
    %v478 = vld [vmem:[#allocation2 + $0xb48] sm:$0xff]
    %v479 = vld [vmem:[#allocation2 + $0xb50] sm:$0xff]
    %v480 = vld [vmem:[#allocation2 + $0xb58] sm:$0xff]
    %v481 = vld [vmem:[#allocation2 + $0xb60] sm:$0xff]
    %v482 = vld [vmem:[#allocation2 + $0xb68] sm:$0xff]
    %v483 = vld [vmem:[#allocation2 + $0xb70] sm:$0xff]
    %v484 = vld [vmem:[#allocation2 + $0xb78] sm:$0xff]
    %v485 = vld [vmem:[#allocation2 + $0xb80] sm:$0xff]
    %v486 = vld [vmem:[#allocation2 + $0xb88] sm:$0xff]
    %v487 = vld [vmem:[#allocation2 + $0xb90] sm:$0xff]
    %v488 = vld [vmem:[#allocation2 + $0xb98] sm:$0xff]
    %v489 = vld [vmem:[#allocation2 + $0xba0] sm:$0xff]
    %v490 = vld [vmem:[#allocation2 + $0xba8] sm:$0xff]
    %v491 = vld [vmem:[#allocation2 + $0xbb0] sm:$0xff]
    %v492 = vld [vmem:[#allocation2 + $0xbb8] sm:$0xff]
    %v493 = vld [vmem:[#allocation2 + $0xbc0] sm:$0xff]
    %v494 = vld [vmem:[#allocation2 + $0xbc8] sm:$0xff]
    %v495 = vld [vmem:[#allocation2 + $0xbd0] sm:$0xff]
    %v496 = vld [vmem:[#allocation2 + $0xbd8] sm:$0xff]
    %v497 = vld [vmem:[#allocation2 + $0xbe0] sm:$0xff]
    %v498 = vld [vmem:[#allocation2 + $0xbe8] sm:$0xff]
    %v499 = vld [vmem:[#allocation2 + $0xbf0] sm:$0xff]
    %v500 = vld [vmem:[#allocation2 + $0xbf8] sm:$0xff]
    %v501 = vld [vmem:[#allocation2 + $0xc00] sm:$0xff]
    %v502 = vld [vmem:[#allocation2 + $0xc08] sm:$0xff]
    %v503 = vld [vmem:[#allocation2 + $0xc10] sm:$0xff]
    %v504 = vld [vmem:[#allocation2 + $0xc18] sm:$0xff]
    %v505 = vld [vmem:[#allocation2 + $0xc20] sm:$0xff]
    %v506 = vld [vmem:[#allocation2 + $0xc28] sm:$0xff]
    %v507 = vld [vmem:[#allocation2 + $0xc30] sm:$0xff]
    %v508 = vld [vmem:[#allocation2 + $0xc38] sm:$0xff]
    %v509 = vld [vmem:[#allocation4] sm:$0xff]
    %v511 = vlaneseq
    %v512 = vshrl.u32 %v511, 7
    %v513 = vsub.s32 0, %v512
    %v514 = vrot.slane %v509, %v513
    %v515 = vlaneseq
    %v516 = vshrl.u32 %v515, 7
    %v517 = vsub.s32 1, %v516
    %v518 = vrot.slane %v509, %v517
    %v519 = vlaneseq
    %v520 = vshrl.u32 %v519, 7
    %v521 = vsub.s32 2, %v520
    %v522 = vrot.slane %v509, %v521
    %v523 = vlaneseq
    %v524 = vshrl.u32 %v523, 7
    %v525 = vsub.s32 3, %v524
    %v526 = vrot.slane %v509, %v525
    %v527 = vlaneseq
    %v528 = vshrl.u32 %v527, 7
    %v529 = vsub.s32 4, %v528
    %v530 = vrot.slane %v509, %v529
    %v531 = vlaneseq
    %v532 = vshrl.u32 %v531, 7
    %v533 = vsub.s32 5, %v532
    %v534 = vrot.slane %v509, %v533
    %v535 = vlaneseq
    %v536 = vshrl.u32 %v535, 7
    %v537 = vsub.s32 6, %v536
    %v538 = vrot.slane %v509, %v537
    %v539 = vlaneseq
    %v540 = vshrl.u32 %v539, 7
    %v541 = vsub.s32 7, %v540
    %v542 = vrot.slane %v509, %v541
    %v943 = vunpack.c.l.b16 %v117
    %v944 = vunpack.c.h.b16 %v117
    %v945 = vunpack.c.l.b16 %v118
    %v946 = vunpack.c.h.b16 %v118
    %v947 = vunpack.c.l.b16 %v119
    %v948 = vunpack.c.h.b16 %v119
    %v949 = vunpack.c.l.b16 %v120
    %v950 = vunpack.c.h.b16 %v120
    %v951 = vunpack.c.l.b16 %v121
    %v952 = vunpack.c.h.b16 %v121
    %v953 = vunpack.c.l.b16 %v122
    %v954 = vunpack.c.h.b16 %v122
    %v955 = vunpack.c.l.b16 %v123
    %v956 = vunpack.c.h.b16 %v123
    %v957 = vunpack.c.l.b16 %v124
    %v958 = vunpack.c.h.b16 %v124
    %v959 = vunpack.c.l.b16 %v125
    %v960 = vunpack.c.h.b16 %v125
    %v961 = vunpack.c.l.b16 %v126
    %v962 = vunpack.c.h.b16 %v126
    %v963 = vunpack.c.l.b16 %v127
    %v964 = vunpack.c.h.b16 %v127
    %v965 = vunpack.c.l.b16 %v128
    %v966 = vunpack.c.h.b16 %v128
    %v967 = vunpack.c.l.b16 %v129
    %v968 = vunpack.c.h.b16 %v129
    %v969 = vunpack.c.l.b16 %v130
    %v970 = vunpack.c.h.b16 %v130
    %v971 = vunpack.c.l.b16 %v131
    %v972 = vunpack.c.h.b16 %v131
    %v973 = vunpack.c.l.b16 %v132
    %v974 = vunpack.c.h.b16 %v132
    %v975 = vunpack.c.l.b16 %v133
    %v976 = vunpack.c.h.b16 %v133
    %v977 = vunpack.c.l.b16 %v134
    %v978 = vunpack.c.h.b16 %v134
    %v979 = vunpack.c.l.b16 %v135
    %v980 = vunpack.c.h.b16 %v135
    %v981 = vunpack.c.l.b16 %v136
    %v982 = vunpack.c.h.b16 %v136
    %v983 = vunpack.c.l.b16 %v137
    %v984 = vunpack.c.h.b16 %v137
    %v985 = vunpack.c.l.b16 %v138
    %v986 = vunpack.c.h.b16 %v138
    %v987 = vunpack.c.l.b16 %v139
    %v988 = vunpack.c.h.b16 %v139
    %v989 = vunpack.c.l.b16 %v140
    %v990 = vunpack.c.h.b16 %v140
    %v991 = vunpack.c.l.b16 %v141
    %v992 = vunpack.c.h.b16 %v141
    %v993 = vunpack.c.l.b16 %v142
    %v994 = vunpack.c.h.b16 %v142
    %v995 = vunpack.c.l.b16 %v143
    %v996 = vunpack.c.h.b16 %v143
    %v997 = vunpack.c.l.b16 %v144
    %v998 = vunpack.c.h.b16 %v144
    %v999 = vunpack.c.l.b16 %v145
    %v1000 = vunpack.c.h.b16 %v145
    %v1001 = vunpack.c.l.b16 %v146
    %v1002 = vunpack.c.h.b16 %v146
    %v1003 = vunpack.c.l.b16 %v147
    %v1004 = vunpack.c.h.b16 %v147
    %v1005 = vunpack.c.l.b16 %v148
    %v1006 = vunpack.c.h.b16 %v148
    %v1007 = vunpack.c.l.b16 %v149
    %v1008 = vunpack.c.h.b16 %v149
    %v1009 = vunpack.c.l.b16 %v150
    %v1010 = vunpack.c.h.b16 %v150
    %v1011 = vunpack.c.l.b16 %v151
    %v1012 = vunpack.c.h.b16 %v151
    %v1013 = vunpack.c.l.b16 %v152
    %v1014 = vunpack.c.h.b16 %v152
    %v1015 = vunpack.c.l.b16 %v153
    %v1016 = vunpack.c.h.b16 %v153
    %v1017 = vunpack.c.l.b16 %v154
    %v1018 = vunpack.c.h.b16 %v154
    %v1019 = vunpack.c.l.b16 %v155
    %v1020 = vunpack.c.h.b16 %v155
    %v1021 = vunpack.c.l.b16 %v156
    %v1022 = vunpack.c.h.b16 %v156
    %v1023 = vunpack.c.l.b16 %v157
    %v1024 = vunpack.c.h.b16 %v157
    %v1025 = vunpack.c.l.b16 %v158
    %v1026 = vunpack.c.h.b16 %v158
    %v1027 = vunpack.c.l.b16 %v159
    %v1028 = vunpack.c.h.b16 %v159
    %v1029 = vunpack.c.l.b16 %v160
    %v1030 = vunpack.c.h.b16 %v160
    %v1031 = vunpack.c.l.b16 %v161
    %v1032 = vunpack.c.h.b16 %v161
    %v1033 = vunpack.c.l.b16 %v162
    %v1034 = vunpack.c.h.b16 %v162
    %v1035 = vunpack.c.l.b16 %v163
    %v1036 = vunpack.c.h.b16 %v163
    %v1037 = vunpack.c.l.b16 %v164
    %v1038 = vunpack.c.h.b16 %v164
    %v1039 = vunpack.c.l.b16 %v165
    %v1040 = vunpack.c.h.b16 %v165
    %v1041 = vunpack.c.l.b16 %v166
    %v1042 = vunpack.c.h.b16 %v166
    %v1043 = vunpack.c.l.b16 %v167
    %v1044 = vunpack.c.h.b16 %v167
    %v1045 = vunpack.c.l.b16 %v168
    %v1046 = vunpack.c.h.b16 %v168
    %v1047 = vunpack.c.l.b16 %v169
    %v1048 = vunpack.c.h.b16 %v169
    %v1049 = vunpack.c.l.b16 %v170
    %v1050 = vunpack.c.h.b16 %v170
    %v1051 = vunpack.c.l.b16 %v171
    %v1052 = vunpack.c.h.b16 %v171
    %v1053 = vunpack.c.l.b16 %v172
    %v1054 = vunpack.c.h.b16 %v172
    %v1055 = vunpack.c.l.b16 %v173
    %v1056 = vunpack.c.h.b16 %v173
    %v1057 = vunpack.c.l.b16 %v174
    %v1058 = vunpack.c.h.b16 %v174
    %v1059 = vunpack.c.l.b16 %v175
    %v1060 = vunpack.c.h.b16 %v175
    %v1061 = vunpack.c.l.b16 %v176
    %v1062 = vunpack.c.h.b16 %v176
    %v1063 = vunpack.c.l.b16 %v177
    %v1064 = vunpack.c.h.b16 %v177
    %v1065 = vunpack.c.l.b16 %v178
    %v1066 = vunpack.c.h.b16 %v178
    %v1067 = vunpack.c.l.b16 %v179
    %v1068 = vunpack.c.h.b16 %v179
    %v1069 = vunpack.c.l.b16 %v180
    %v1070 = vunpack.c.h.b16 %v180
    %v1071 = vunpack.c.l.b16 %v181
    %v1072 = vunpack.c.h.b16 %v181
    %v1073 = vunpack.c.l.b16 %v182
    %v1074 = vunpack.c.h.b16 %v182
    %v1075 = vunpack.c.l.b16 %v183
    %v1076 = vunpack.c.h.b16 %v183
    %v1077 = vunpack.c.l.b16 %v184
    %v1078 = vunpack.c.h.b16 %v184
    %v1079 = vunpack.c.l.b16 %v185
    %v1080 = vunpack.c.h.b16 %v185
    %v1081 = vunpack.c.l.b16 %v186
    %v1082 = vunpack.c.h.b16 %v186
    %v1083 = vunpack.c.l.b16 %v187
    %v1084 = vunpack.c.h.b16 %v187
    %v1085 = vunpack.c.l.b16 %v188
    %v1086 = vunpack.c.h.b16 %v188
    %v1087 = vunpack.c.l.b16 %v189
    %v1088 = vunpack.c.h.b16 %v189
    %v1089 = vunpack.c.l.b16 %v190
    %v1090 = vunpack.c.h.b16 %v190
    %v1091 = vunpack.c.l.b16 %v191
    %v1092 = vunpack.c.h.b16 %v191
    %v1093 = vunpack.c.l.b16 %v192
    %v1094 = vunpack.c.h.b16 %v192
    %v1095 = vunpack.c.l.b16 %v193
    %v1096 = vunpack.c.h.b16 %v193
    %v1097 = vunpack.c.l.b16 %v194
    %v1098 = vunpack.c.h.b16 %v194
    %v1099 = vunpack.c.l.b16 %v195
    %v1100 = vunpack.c.h.b16 %v195
    %v1101 = vunpack.c.l.b16 %v196
    %v1102 = vunpack.c.h.b16 %v196
    %v1103 = vunpack.c.l.b16 %v197
    %v1104 = vunpack.c.h.b16 %v197
    %v1105 = vunpack.c.l.b16 %v198
    %v1106 = vunpack.c.h.b16 %v198
    %v1107 = vunpack.c.l.b16 %v199
    %v1108 = vunpack.c.h.b16 %v199
    %v1109 = vunpack.c.l.b16 %v200
    %v1110 = vunpack.c.h.b16 %v200
    %v1111 = vunpack.c.l.b16 %v201
    %v1112 = vunpack.c.h.b16 %v201
    %v1113 = vunpack.c.l.b16 %v202
    %v1114 = vunpack.c.h.b16 %v202
    %v1115 = vunpack.c.l.b16 %v203
    %v1116 = vunpack.c.h.b16 %v203
    %v1117 = vunpack.c.l.b16 %v204
    %v1118 = vunpack.c.h.b16 %v204
    %v1119 = vunpack.c.l.b16 %v205
    %v1120 = vunpack.c.h.b16 %v205
    %v1121 = vunpack.c.l.b16 %v206
    %v1122 = vunpack.c.h.b16 %v206
    %v1123 = vunpack.c.l.b16 %v207
    %v1124 = vunpack.c.h.b16 %v207
    %v1125 = vunpack.c.l.b16 %v208
    %v1126 = vunpack.c.h.b16 %v208
    %v1127 = vunpack.c.l.b16 %v209
    %v1128 = vunpack.c.h.b16 %v209
    %v1129 = vunpack.c.l.b16 %v210
    %v1130 = vunpack.c.h.b16 %v210
    %v1131 = vunpack.c.l.b16 %v211
    %v1132 = vunpack.c.h.b16 %v211
    %v1133 = vunpack.c.l.b16 %v212
    %v1134 = vunpack.c.h.b16 %v212
    %v1135 = vunpack.c.l.b16 %v213
    %v1136 = vunpack.c.h.b16 %v213
    %v1137 = vunpack.c.l.b16 %v214
    %v1138 = vunpack.c.h.b16 %v214
    %v1139 = vunpack.c.l.b16 %v215
    %v1140 = vunpack.c.h.b16 %v215
    %v1141 = vunpack.c.l.b16 %v216
    %v1142 = vunpack.c.h.b16 %v216
    %v1143 = vunpack.c.l.b16 %v217
    %v1144 = vunpack.c.h.b16 %v217
    %v1145 = vunpack.c.l.b16 %v218
    %v1146 = vunpack.c.h.b16 %v218
    %v1147 = vunpack.c.l.b16 %v219
    %v1148 = vunpack.c.h.b16 %v219
    %v1149 = vunpack.c.l.b16 %v220
    %v1150 = vunpack.c.h.b16 %v220
    %v1151 = vunpack.c.l.b16 %v221
    %v1152 = vunpack.c.h.b16 %v221
    %v1153 = vunpack.c.l.b16 %v222
    %v1154 = vunpack.c.h.b16 %v222
    %v1155 = vunpack.c.l.b16 %v223
    %v1156 = vunpack.c.h.b16 %v223
    %v1157 = vunpack.c.l.b16 %v224
    %v1158 = vunpack.c.h.b16 %v224
    %v1159 = vunpack.c.l.b16 %v225
    %v1160 = vunpack.c.h.b16 %v225
    %v1161 = vunpack.c.l.b16 %v226
    %v1162 = vunpack.c.h.b16 %v226
    %v1163 = vunpack.c.l.b16 %v227
    %v1164 = vunpack.c.h.b16 %v227
    %v1165 = vunpack.c.l.b16 %v228
    %v1166 = vunpack.c.h.b16 %v228
    %v1167 = vunpack.c.l.b16 %v229
    %v1168 = vunpack.c.h.b16 %v229
    %v1169 = vunpack.c.l.b16 %v230
    %v1170 = vunpack.c.h.b16 %v230
    %v1171 = vunpack.c.l.b16 %v231
    %v1172 = vunpack.c.h.b16 %v231
    %v1173 = vunpack.c.l.b16 %v232
    %v1174 = vunpack.c.h.b16 %v232
    %v1175 = vunpack.c.l.b16 %v233
    %v1176 = vunpack.c.h.b16 %v233
    %v1177 = vunpack.c.l.b16 %v234
    %v1178 = vunpack.c.h.b16 %v234
    %v1179 = vunpack.c.l.b16 %v235
    %v1180 = vunpack.c.h.b16 %v235
    %v1181 = vunpack.c.l.b16 %v236
    %v1182 = vunpack.c.h.b16 %v236
    %v1183 = vunpack.c.l.b16 %v237
    %v1184 = vunpack.c.h.b16 %v237
    %v1185 = vunpack.c.l.b16 %v238
    %v1186 = vunpack.c.h.b16 %v238
    %v1187 = vunpack.c.l.b16 %v239
    %v1188 = vunpack.c.h.b16 %v239
    %v1189 = vunpack.c.l.b16 %v240
    %v1190 = vunpack.c.h.b16 %v240
    %v1191 = vunpack.c.l.b16 %v241
    %v1192 = vunpack.c.h.b16 %v241
    %v1193 = vunpack.c.l.b16 %v242
    %v1194 = vunpack.c.h.b16 %v242
    %v1195 = vunpack.c.l.b16 %v243
    %v1196 = vunpack.c.h.b16 %v243
    %v1197 = vunpack.c.l.b16 %v244
    %v1198 = vunpack.c.h.b16 %v244
    %v1199 = vunpack.c.l.b16 %v245
    %v1200 = vunpack.c.h.b16 %v245
    %v1201 = vunpack.c.l.b16 %v246
    %v1202 = vunpack.c.h.b16 %v246
    %v1203 = vunpack.c.l.b16 %v247
    %v1204 = vunpack.c.h.b16 %v247
    %v1205 = vunpack.c.l.b16 %v248
    %v1206 = vunpack.c.h.b16 %v248
    %v1207 = vunpack.c.l.b16 %v249
    %v1208 = vunpack.c.h.b16 %v249
    %v1209 = vunpack.c.l.b16 %v250
    %v1210 = vunpack.c.h.b16 %v250
    %v1211 = vunpack.c.l.b16 %v251
    %v1212 = vunpack.c.h.b16 %v251
    %v1213 = vunpack.c.l.b16 %v252
    %v1214 = vunpack.c.h.b16 %v252
    %v1215 = vunpack.c.l.b16 %v253
    %v1216 = vunpack.c.h.b16 %v253
    %v1217 = vunpack.c.l.b16 %v254
    %v1218 = vunpack.c.h.b16 %v254
    %v1219 = vunpack.c.l.b16 %v255
    %v1220 = vunpack.c.h.b16 %v255
    %v1221 = vunpack.c.l.b16 %v256
    %v1222 = vunpack.c.h.b16 %v256
    %v1223 = vunpack.c.l.b16 %v257
    %v1224 = vunpack.c.h.b16 %v257
    %v1225 = vunpack.c.l.b16 %v258
    %v1226 = vunpack.c.h.b16 %v258
    %v1227 = vunpack.c.l.b16 %v259
    %v1228 = vunpack.c.h.b16 %v259
    %v1229 = vunpack.c.l.b16 %v260
    %v1230 = vunpack.c.h.b16 %v260
    %v1231 = vunpack.c.l.b16 %v261
    %v1232 = vunpack.c.h.b16 %v261
    %v1233 = vunpack.c.l.b16 %v262
    %v1234 = vunpack.c.h.b16 %v262
    %v1235 = vunpack.c.l.b16 %v263
    %v1236 = vunpack.c.h.b16 %v263
    %v1237 = vunpack.c.l.b16 %v264
    %v1238 = vunpack.c.h.b16 %v264
    %v1239 = vunpack.c.l.b16 %v265
    %v1240 = vunpack.c.h.b16 %v265
    %v1241 = vunpack.c.l.b16 %v266
    %v1242 = vunpack.c.h.b16 %v266
    %v1243 = vunpack.c.l.b16 %v267
    %v1244 = vunpack.c.h.b16 %v267
    %v1245 = vunpack.c.l.b16 %v268
    %v1246 = vunpack.c.h.b16 %v268
    %v1247 = vunpack.c.l.b16 %v269
    %v1248 = vunpack.c.h.b16 %v269
    %v1249 = vunpack.c.l.b16 %v270
    %v1250 = vunpack.c.h.b16 %v270
    %v1251 = vunpack.c.l.b16 %v271
    %v1252 = vunpack.c.h.b16 %v271
    %v1253 = vunpack.c.l.b16 %v272
    %v1254 = vunpack.c.h.b16 %v272
    %v1255 = vunpack.c.l.b16 %v273
    %v1256 = vunpack.c.h.b16 %v273
    %v1257 = vunpack.c.l.b16 %v274
    %v1258 = vunpack.c.h.b16 %v274
    %v1259 = vunpack.c.l.b16 %v275
    %v1260 = vunpack.c.h.b16 %v275
    %v1261 = vunpack.c.l.b16 %v276
    %v1262 = vunpack.c.h.b16 %v276
    %v1263 = vunpack.c.l.b16 %v277
    %v1264 = vunpack.c.h.b16 %v277
    %v1265 = vunpack.c.l.b16 %v278
    %v1266 = vunpack.c.h.b16 %v278
    %v1267 = vunpack.c.l.b16 %v279
    %v1268 = vunpack.c.h.b16 %v279
    %v1269 = vunpack.c.l.b16 %v280
    %v1270 = vunpack.c.h.b16 %v280
    %v1271 = vunpack.c.l.b16 %v281
    %v1272 = vunpack.c.h.b16 %v281
    %v1273 = vunpack.c.l.b16 %v282
    %v1274 = vunpack.c.h.b16 %v282
    %v1275 = vunpack.c.l.b16 %v283
    %v1276 = vunpack.c.h.b16 %v283
    %v1277 = vunpack.c.l.b16 %v284
    %v1278 = vunpack.c.h.b16 %v284
    %v1279 = vunpack.c.l.b16 %v285
    %v1280 = vunpack.c.h.b16 %v285
    %v1281 = vunpack.c.l.b16 %v286
    %v1282 = vunpack.c.h.b16 %v286
    %v1283 = vunpack.c.l.b16 %v287
    %v1284 = vunpack.c.h.b16 %v287
    %v1285 = vunpack.c.l.b16 %v288
    %v1286 = vunpack.c.h.b16 %v288
    %v1287 = vunpack.c.l.b16 %v289
    %v1288 = vunpack.c.h.b16 %v289
    %v1289 = vunpack.c.l.b16 %v290
    %v1290 = vunpack.c.h.b16 %v290
    %v1291 = vunpack.c.l.b16 %v291
    %v1292 = vunpack.c.h.b16 %v291
    %v1293 = vunpack.c.l.b16 %v292
    %v1294 = vunpack.c.h.b16 %v292
    %v1295 = vunpack.c.l.b16 %v293
    %v1296 = vunpack.c.h.b16 %v293
    %v1297 = vunpack.c.l.b16 %v294
    %v1298 = vunpack.c.h.b16 %v294
    %v1299 = vunpack.c.l.b16 %v295
    %v1300 = vunpack.c.h.b16 %v295
    %v1301 = vunpack.c.l.b16 %v296
    %v1302 = vunpack.c.h.b16 %v296
    %v1303 = vunpack.c.l.b16 %v297
    %v1304 = vunpack.c.h.b16 %v297
    %v1305 = vunpack.c.l.b16 %v298
    %v1306 = vunpack.c.h.b16 %v298
    %v1307 = vunpack.c.l.b16 %v299
    %v1308 = vunpack.c.h.b16 %v299
    %v1309 = vunpack.c.l.b16 %v300
    %v1310 = vunpack.c.h.b16 %v300
    %v1311 = vunpack.c.l.b16 %v301
    %v1312 = vunpack.c.h.b16 %v301
    %v1313 = vunpack.c.l.b16 %v302
    %v1314 = vunpack.c.h.b16 %v302
    %v1315 = vunpack.c.l.b16 %v303
    %v1316 = vunpack.c.h.b16 %v303
    %v1317 = vunpack.c.l.b16 %v304
    %v1318 = vunpack.c.h.b16 %v304
    %v1319 = vunpack.c.l.b16 %v305
    %v1320 = vunpack.c.h.b16 %v305
    %v1321 = vunpack.c.l.b16 %v306
    %v1322 = vunpack.c.h.b16 %v306
    %v1323 = vunpack.c.l.b16 %v307
    %v1324 = vunpack.c.h.b16 %v307
    %v1325 = vunpack.c.l.b16 %v308
    %v1326 = vunpack.c.h.b16 %v308
    %v1327 = vunpack.c.l.b16 %v309
    %v1328 = vunpack.c.h.b16 %v309
    %v1329 = vunpack.c.l.b16 %v310
    %v1330 = vunpack.c.h.b16 %v310
    %v1331 = vunpack.c.l.b16 %v311
    %v1332 = vunpack.c.h.b16 %v311
    %v1333 = vunpack.c.l.b16 %v312
    %v1334 = vunpack.c.h.b16 %v312
    %v1335 = vunpack.c.l.b16 %v313
    %v1336 = vunpack.c.h.b16 %v313
    %v1337 = vunpack.c.l.b16 %v314
    %v1338 = vunpack.c.h.b16 %v314
    %v1339 = vunpack.c.l.b16 %v315
    %v1340 = vunpack.c.h.b16 %v315
    %v1341 = vunpack.c.l.b16 %v316
    %v1342 = vunpack.c.h.b16 %v316
    %v1343 = vunpack.c.l.b16 %v317
    %v1344 = vunpack.c.h.b16 %v317
    %v1345 = vunpack.c.l.b16 %v318
    %v1346 = vunpack.c.h.b16 %v318
    %v1347 = vunpack.c.l.b16 %v319
    %v1348 = vunpack.c.h.b16 %v319
    %v1349 = vunpack.c.l.b16 %v320
    %v1350 = vunpack.c.h.b16 %v320
    %v1351 = vunpack.c.l.b16 %v321
    %v1352 = vunpack.c.h.b16 %v321
    %v1353 = vunpack.c.l.b16 %v322
    %v1354 = vunpack.c.h.b16 %v322
    %v1355 = vunpack.c.l.b16 %v323
    %v1356 = vunpack.c.h.b16 %v323
    %v1357 = vunpack.c.l.b16 %v324
    %v1358 = vunpack.c.h.b16 %v324
    %v1359 = vunpack.c.l.b16 %v325
    %v1360 = vunpack.c.h.b16 %v325
    %v1361 = vunpack.c.l.b16 %v326
    %v1362 = vunpack.c.h.b16 %v326
    %v1363 = vunpack.c.l.b16 %v327
    %v1364 = vunpack.c.h.b16 %v327
    %v1365 = vunpack.c.l.b16 %v328
    %v1366 = vunpack.c.h.b16 %v328
    %v1367 = vunpack.c.l.b16 %v329
    %v1368 = vunpack.c.h.b16 %v329
    %v1369 = vunpack.c.l.b16 %v330
    %v1370 = vunpack.c.h.b16 %v330
    %v1371 = vunpack.c.l.b16 %v331
    %v1372 = vunpack.c.h.b16 %v331
    %v1373 = vunpack.c.l.b16 %v332
    %v1374 = vunpack.c.h.b16 %v332
    %v1375 = vunpack.c.l.b16 %v333
    %v1376 = vunpack.c.h.b16 %v333
    %v1377 = vunpack.c.l.b16 %v334
    %v1378 = vunpack.c.h.b16 %v334
    %v1379 = vunpack.c.l.b16 %v335
    %v1380 = vunpack.c.h.b16 %v335
    %v1381 = vunpack.c.l.b16 %v336
    %v1382 = vunpack.c.h.b16 %v336
    %v1383 = vunpack.c.l.b16 %v337
    %v1384 = vunpack.c.h.b16 %v337
    %v1385 = vunpack.c.l.b16 %v338
    %v1386 = vunpack.c.h.b16 %v338
    %v1387 = vunpack.c.l.b16 %v339
    %v1388 = vunpack.c.h.b16 %v339
    %v1389 = vunpack.c.l.b16 %v340
    %v1390 = vunpack.c.h.b16 %v340
    %v1391 = vunpack.c.l.b16 %v341
    %v1392 = vunpack.c.h.b16 %v341
    %v1393 = vunpack.c.l.b16 %v342
    %v1394 = vunpack.c.h.b16 %v342
    %v1395 = vunpack.c.l.b16 %v343
    %v1396 = vunpack.c.h.b16 %v343
    %v1397 = vunpack.c.l.b16 %v344
    %v1398 = vunpack.c.h.b16 %v344
    %v1399 = vunpack.c.l.b16 %v345
    %v1400 = vunpack.c.h.b16 %v345
    %v1401 = vunpack.c.l.b16 %v346
    %v1402 = vunpack.c.h.b16 %v346
    %v1403 = vunpack.c.l.b16 %v347
    %v1404 = vunpack.c.h.b16 %v347
    %v1405 = vunpack.c.l.b16 %v348
    %v1406 = vunpack.c.h.b16 %v348
    %v1407 = vunpack.c.l.b16 %v349
    %v1408 = vunpack.c.h.b16 %v349
    %v1409 = vunpack.c.l.b16 %v350
    %v1410 = vunpack.c.h.b16 %v350
    %v1411 = vunpack.c.l.b16 %v351
    %v1412 = vunpack.c.h.b16 %v351
    %v1413 = vunpack.c.l.b16 %v352
    %v1414 = vunpack.c.h.b16 %v352
    %v1415 = vunpack.c.l.b16 %v353
    %v1416 = vunpack.c.h.b16 %v353
    %v1417 = vunpack.c.l.b16 %v354
    %v1418 = vunpack.c.h.b16 %v354
    %v1419 = vunpack.c.l.b16 %v355
    %v1420 = vunpack.c.h.b16 %v355
    %v1421 = vunpack.c.l.b16 %v356
    %v1422 = vunpack.c.h.b16 %v356
    %v1423 = vunpack.c.l.b16 %v357
    %v1424 = vunpack.c.h.b16 %v357
    %v1425 = vunpack.c.l.b16 %v358
    %v1426 = vunpack.c.h.b16 %v358
    %v1427 = vunpack.c.l.b16 %v359
    %v1428 = vunpack.c.h.b16 %v359
    %v1429 = vunpack.c.l.b16 %v360
    %v1430 = vunpack.c.h.b16 %v360
    %v1431 = vunpack.c.l.b16 %v361
    %v1432 = vunpack.c.h.b16 %v361
    %v1433 = vunpack.c.l.b16 %v362
    %v1434 = vunpack.c.h.b16 %v362
    %v1435 = vunpack.c.l.b16 %v363
    %v1436 = vunpack.c.h.b16 %v363
    %v1437 = vunpack.c.l.b16 %v364
    %v1438 = vunpack.c.h.b16 %v364
    %v1439 = vunpack.c.l.b16 %v365
    %v1440 = vunpack.c.h.b16 %v365
    %v1441 = vunpack.c.l.b16 %v366
    %v1442 = vunpack.c.h.b16 %v366
    %v1443 = vunpack.c.l.b16 %v367
    %v1444 = vunpack.c.h.b16 %v367
    %v1445 = vunpack.c.l.b16 %v368
    %v1446 = vunpack.c.h.b16 %v368
    %v1447 = vunpack.c.l.b16 %v369
    %v1448 = vunpack.c.h.b16 %v369
    %v1449 = vunpack.c.l.b16 %v370
    %v1450 = vunpack.c.h.b16 %v370
    %v1451 = vunpack.c.l.b16 %v371
    %v1452 = vunpack.c.h.b16 %v371
    %v1453 = vunpack.c.l.b16 %v372
    %v1454 = vunpack.c.h.b16 %v372
    %v1455 = vunpack.c.l.b16 %v373
    %v1456 = vunpack.c.h.b16 %v373
    %v1457 = vunpack.c.l.b16 %v374
    %v1458 = vunpack.c.h.b16 %v374
    %v1459 = vunpack.c.l.b16 %v375
    %v1460 = vunpack.c.h.b16 %v375
    %v1461 = vunpack.c.l.b16 %v376
    %v1462 = vunpack.c.h.b16 %v376
    %v1463 = vunpack.c.l.b16 %v377
    %v1464 = vunpack.c.h.b16 %v377
    %v1465 = vunpack.c.l.b16 %v378
    %v1466 = vunpack.c.h.b16 %v378
    %v1467 = vunpack.c.l.b16 %v379
    %v1468 = vunpack.c.h.b16 %v379
    %v1469 = vunpack.c.l.b16 %v380
    %v1470 = vunpack.c.h.b16 %v380
    %v1471 = vunpack.c.l.b16 %v381
    %v1472 = vunpack.c.h.b16 %v381
    %v1473 = vunpack.c.l.b16 %v382
    %v1474 = vunpack.c.h.b16 %v382
    %v1475 = vunpack.c.l.b16 %v383
    %v1476 = vunpack.c.h.b16 %v383
    %v1477 = vunpack.c.l.b16 %v384
    %v1478 = vunpack.c.h.b16 %v384
    %v1479 = vunpack.c.l.b16 %v385
    %v1480 = vunpack.c.h.b16 %v385
    %v1481 = vunpack.c.l.b16 %v386
    %v1482 = vunpack.c.h.b16 %v386
    %v1483 = vunpack.c.l.b16 %v387
    %v1484 = vunpack.c.h.b16 %v387
    %v1485 = vunpack.c.l.b16 %v388
    %v1486 = vunpack.c.h.b16 %v388
    %v1487 = vunpack.c.l.b16 %v389
    %v1488 = vunpack.c.h.b16 %v389
    %v1489 = vunpack.c.l.b16 %v390
    %v1490 = vunpack.c.h.b16 %v390
    %v1491 = vunpack.c.l.b16 %v391
    %v1492 = vunpack.c.h.b16 %v391
    %v1493 = vunpack.c.l.b16 %v392
    %v1494 = vunpack.c.h.b16 %v392
    %v1495 = vunpack.c.l.b16 %v393
    %v1496 = vunpack.c.h.b16 %v393
    %v1497 = vunpack.c.l.b16 %v394
    %v1498 = vunpack.c.h.b16 %v394
    %v1499 = vunpack.c.l.b16 %v395
    %v1500 = vunpack.c.h.b16 %v395
    %v1501 = vunpack.c.l.b16 %v396
    %v1502 = vunpack.c.h.b16 %v396
    %v1503 = vunpack.c.l.b16 %v397
    %v1504 = vunpack.c.h.b16 %v397
    %v1505 = vunpack.c.l.b16 %v398
    %v1506 = vunpack.c.h.b16 %v398
    %v1507 = vunpack.c.l.b16 %v399
    %v1508 = vunpack.c.h.b16 %v399
    %v1509 = vunpack.c.l.b16 %v400
    %v1510 = vunpack.c.h.b16 %v400
    %v1511 = vunpack.c.l.b16 %v401
    %v1512 = vunpack.c.h.b16 %v401
    %v1513 = vunpack.c.l.b16 %v402
    %v1514 = vunpack.c.h.b16 %v402
    %v1515 = vunpack.c.l.b16 %v403
    %v1516 = vunpack.c.h.b16 %v403
    %v1517 = vunpack.c.l.b16 %v404
    %v1518 = vunpack.c.h.b16 %v404
    %v1519 = vunpack.c.l.b16 %v405
    %v1520 = vunpack.c.h.b16 %v405
    %v1521 = vunpack.c.l.b16 %v406
    %v1522 = vunpack.c.h.b16 %v406
    %v1523 = vunpack.c.l.b16 %v407
    %v1524 = vunpack.c.h.b16 %v407
    %v1525 = vunpack.c.l.b16 %v408
    %v1526 = vunpack.c.h.b16 %v408
    %v1527 = vunpack.c.l.b16 %v409
    %v1528 = vunpack.c.h.b16 %v409
    %v1529 = vunpack.c.l.b16 %v410
    %v1530 = vunpack.c.h.b16 %v410
    %v1531 = vunpack.c.l.b16 %v411
    %v1532 = vunpack.c.h.b16 %v411
    %v1533 = vunpack.c.l.b16 %v412
    %v1534 = vunpack.c.h.b16 %v412
    %v1535 = vunpack.c.l.b16 %v413
    %v1536 = vunpack.c.h.b16 %v413
    %v1537 = vunpack.c.l.b16 %v414
    %v1538 = vunpack.c.h.b16 %v414
    %v1539 = vunpack.c.l.b16 %v415
    %v1540 = vunpack.c.h.b16 %v415
    %v1541 = vunpack.c.l.b16 %v416
    %v1542 = vunpack.c.h.b16 %v416
    %v1543 = vunpack.c.l.b16 %v417
    %v1544 = vunpack.c.h.b16 %v417
    %v1545 = vunpack.c.l.b16 %v418
    %v1546 = vunpack.c.h.b16 %v418
    %v1547 = vunpack.c.l.b16 %v419
    %v1548 = vunpack.c.h.b16 %v419
    %v1549 = vunpack.c.l.b16 %v420
    %v1550 = vunpack.c.h.b16 %v420
    %v1551 = vunpack.c.l.b16 %v421
    %v1552 = vunpack.c.h.b16 %v421
    %v1553 = vunpack.c.l.b16 %v422
    %v1554 = vunpack.c.h.b16 %v422
    %v1555 = vunpack.c.l.b16 %v423
    %v1556 = vunpack.c.h.b16 %v423
    %v1557 = vunpack.c.l.b16 %v424
    %v1558 = vunpack.c.h.b16 %v424
    %v1559 = vunpack.c.l.b16 %v425
    %v1560 = vunpack.c.h.b16 %v425
    %v1561 = vunpack.c.l.b16 %v426
    %v1562 = vunpack.c.h.b16 %v426
    %v1563 = vunpack.c.l.b16 %v427
    %v1564 = vunpack.c.h.b16 %v427
    %v1565 = vunpack.c.l.b16 %v428
    %v1566 = vunpack.c.h.b16 %v428
    %v1567 = vunpack.c.l.b16 %v429
    %v1568 = vunpack.c.h.b16 %v429
    %v1569 = vunpack.c.l.b16 %v430
    %v1570 = vunpack.c.h.b16 %v430
    %v1571 = vunpack.c.l.b16 %v431
    %v1572 = vunpack.c.h.b16 %v431
    %v1573 = vunpack.c.l.b16 %v432
    %v1574 = vunpack.c.h.b16 %v432
    %v1575 = vunpack.c.l.b16 %v433
    %v1576 = vunpack.c.h.b16 %v433
    %v1577 = vunpack.c.l.b16 %v434
    %v1578 = vunpack.c.h.b16 %v434
    %v1579 = vunpack.c.l.b16 %v435
    %v1580 = vunpack.c.h.b16 %v435
    %v1581 = vunpack.c.l.b16 %v436
    %v1582 = vunpack.c.h.b16 %v436
    %v1583 = vunpack.c.l.b16 %v437
    %v1584 = vunpack.c.h.b16 %v437
    %v1585 = vunpack.c.l.b16 %v438
    %v1586 = vunpack.c.h.b16 %v438
    %v1587 = vunpack.c.l.b16 %v439
    %v1588 = vunpack.c.h.b16 %v439
    %v1589 = vunpack.c.l.b16 %v440
    %v1590 = vunpack.c.h.b16 %v440
    %v1591 = vunpack.c.l.b16 %v441
    %v1592 = vunpack.c.h.b16 %v441
    %v1593 = vunpack.c.l.b16 %v442
    %v1594 = vunpack.c.h.b16 %v442
    %v1595 = vunpack.c.l.b16 %v443
    %v1596 = vunpack.c.h.b16 %v443
    %v1597 = vunpack.c.l.b16 %v444
    %v1598 = vunpack.c.h.b16 %v444
    %v1599 = vunpack.c.l.b16 %v445
    %v1600 = vunpack.c.h.b16 %v445
    %v1601 = vunpack.c.l.b16 %v446
    %v1602 = vunpack.c.h.b16 %v446
    %v1603 = vunpack.c.l.b16 %v447
    %v1604 = vunpack.c.h.b16 %v447
    %v1605 = vunpack.c.l.b16 %v448
    %v1606 = vunpack.c.h.b16 %v448
    %v1607 = vunpack.c.l.b16 %v449
    %v1608 = vunpack.c.h.b16 %v449
    %v1609 = vunpack.c.l.b16 %v450
    %v1610 = vunpack.c.h.b16 %v450
    %v1611 = vunpack.c.l.b16 %v451
    %v1612 = vunpack.c.h.b16 %v451
    %v1613 = vunpack.c.l.b16 %v452
    %v1614 = vunpack.c.h.b16 %v452
    %v1615 = vunpack.c.l.b16 %v453
    %v1616 = vunpack.c.h.b16 %v453
    %v1617 = vunpack.c.l.b16 %v454
    %v1618 = vunpack.c.h.b16 %v454
    %v1619 = vunpack.c.l.b16 %v455
    %v1620 = vunpack.c.h.b16 %v455
    %v1621 = vunpack.c.l.b16 %v456
    %v1622 = vunpack.c.h.b16 %v456
    %v1623 = vunpack.c.l.b16 %v457
    %v1624 = vunpack.c.h.b16 %v457
    %v1625 = vunpack.c.l.b16 %v458
    %v1626 = vunpack.c.h.b16 %v458
    %v1627 = vunpack.c.l.b16 %v459
    %v1628 = vunpack.c.h.b16 %v459
    %v1629 = vunpack.c.l.b16 %v460
    %v1630 = vunpack.c.h.b16 %v460
    %v1631 = vunpack.c.l.b16 %v461
    %v1632 = vunpack.c.h.b16 %v461
    %v1633 = vunpack.c.l.b16 %v462
    %v1634 = vunpack.c.h.b16 %v462
    %v1635 = vunpack.c.l.b16 %v463
    %v1636 = vunpack.c.h.b16 %v463
    %v1637 = vunpack.c.l.b16 %v464
    %v1638 = vunpack.c.h.b16 %v464
    %v1639 = vunpack.c.l.b16 %v465
    %v1640 = vunpack.c.h.b16 %v465
    %v1641 = vunpack.c.l.b16 %v466
    %v1642 = vunpack.c.h.b16 %v466
    %v1643 = vunpack.c.l.b16 %v467
    %v1644 = vunpack.c.h.b16 %v467
    %v1645 = vunpack.c.l.b16 %v468
    %v1646 = vunpack.c.h.b16 %v468
    %v1647 = vunpack.c.l.b16 %v469
    %v1648 = vunpack.c.h.b16 %v469
    %v1649 = vunpack.c.l.b16 %v470
    %v1650 = vunpack.c.h.b16 %v470
    %v1651 = vunpack.c.l.b16 %v471
    %v1652 = vunpack.c.h.b16 %v471
    %v1653 = vunpack.c.l.b16 %v472
    %v1654 = vunpack.c.h.b16 %v472
    %v1655 = vunpack.c.l.b16 %v473
    %v1656 = vunpack.c.h.b16 %v473
    %v1657 = vunpack.c.l.b16 %v474
    %v1658 = vunpack.c.h.b16 %v474
    %v1659 = vunpack.c.l.b16 %v475
    %v1660 = vunpack.c.h.b16 %v475
    %v1661 = vunpack.c.l.b16 %v476
    %v1662 = vunpack.c.h.b16 %v476
    %v1663 = vunpack.c.l.b16 %v477
    %v1664 = vunpack.c.h.b16 %v477
    %v1665 = vunpack.c.l.b16 %v478
    %v1666 = vunpack.c.h.b16 %v478
    %v1667 = vunpack.c.l.b16 %v479
    %v1668 = vunpack.c.h.b16 %v479
    %v1669 = vunpack.c.l.b16 %v480
    %v1670 = vunpack.c.h.b16 %v480
    %v1671 = vunpack.c.l.b16 %v481
    %v1672 = vunpack.c.h.b16 %v481
    %v1673 = vunpack.c.l.b16 %v482
    %v1674 = vunpack.c.h.b16 %v482
    %v1675 = vunpack.c.l.b16 %v483
    %v1676 = vunpack.c.h.b16 %v483
    %v1677 = vunpack.c.l.b16 %v484
    %v1678 = vunpack.c.h.b16 %v484
    %v1679 = vunpack.c.l.b16 %v485
    %v1680 = vunpack.c.h.b16 %v485
    %v1681 = vunpack.c.l.b16 %v486
    %v1682 = vunpack.c.h.b16 %v486
    %v1683 = vunpack.c.l.b16 %v487
    %v1684 = vunpack.c.h.b16 %v487
    %v1685 = vunpack.c.l.b16 %v488
    %v1686 = vunpack.c.h.b16 %v488
    %v1687 = vunpack.c.l.b16 %v489
    %v1688 = vunpack.c.h.b16 %v489
    %v1689 = vunpack.c.l.b16 %v490
    %v1690 = vunpack.c.h.b16 %v490
    %v1691 = vunpack.c.l.b16 %v491
    %v1692 = vunpack.c.h.b16 %v491
    %v1693 = vunpack.c.l.b16 %v492
    %v1694 = vunpack.c.h.b16 %v492
    %v1695 = vunpack.c.l.b16 %v493
    %v1696 = vunpack.c.h.b16 %v493
    %v1697 = vunpack.c.l.b16 %v494
    %v1698 = vunpack.c.h.b16 %v494
    %v1699 = vunpack.c.l.b16 %v495
    %v1700 = vunpack.c.h.b16 %v495
    %v1701 = vunpack.c.l.b16 %v496
    %v1702 = vunpack.c.h.b16 %v496
    %v1703 = vunpack.c.l.b16 %v497
    %v1704 = vunpack.c.h.b16 %v497
    %v1705 = vunpack.c.l.b16 %v498
    %v1706 = vunpack.c.h.b16 %v498
    %v1707 = vunpack.c.l.b16 %v499
    %v1708 = vunpack.c.h.b16 %v499
    %v1709 = vunpack.c.l.b16 %v500
    %v1710 = vunpack.c.h.b16 %v500
    %v1711 = vunpack.c.l.b16 %v501
    %v1712 = vunpack.c.h.b16 %v501
    %v1713 = vunpack.c.l.b16 %v502
    %v1714 = vunpack.c.h.b16 %v502
    %v1715 = vunpack.c.l.b16 %v503
    %v1716 = vunpack.c.h.b16 %v503
    %v1717 = vunpack.c.l.b16 %v504
    %v1718 = vunpack.c.h.b16 %v504
    %v1719 = vunpack.c.l.b16 %v505
    %v1720 = vunpack.c.h.b16 %v505
    %v1721 = vunpack.c.l.b16 %v506
    %v1722 = vunpack.c.h.b16 %v506
    %v1723 = vunpack.c.l.b16 %v507
    %v1724 = vunpack.c.h.b16 %v507
    %v1725 = vunpack.c.l.b16 %v508
    %v1726 = vunpack.c.h.b16 %v508
    %v1727 = vpack.c.b16 %v951, %v943
    %v1728 = vpack.c.b16 %v952, %v944
    %v1729 = vpack.c.b16 %v953, %v945
    %v1730 = vpack.c.b16 %v954, %v946
    %v1731 = vpack.c.b16 %v955, %v947
    %v1732 = vpack.c.b16 %v956, %v948
    %v1733 = vpack.c.b16 %v957, %v949
    %v1734 = vpack.c.b16 %v958, %v950
    %v1735 = vpack.c.b16 %v967, %v959
    %v1736 = vpack.c.b16 %v968, %v960
    %v1737 = vpack.c.b16 %v969, %v961
    %v1738 = vpack.c.b16 %v970, %v962
    %v1739 = vpack.c.b16 %v971, %v963
    %v1740 = vpack.c.b16 %v972, %v964
    %v1741 = vpack.c.b16 %v973, %v965
    %v1742 = vpack.c.b16 %v974, %v966
    %v1743 = vpack.c.b16 %v983, %v975
    %v1744 = vpack.c.b16 %v984, %v976
    %v1745 = vpack.c.b16 %v985, %v977
    %v1746 = vpack.c.b16 %v986, %v978
    %v1747 = vpack.c.b16 %v987, %v979
    %v1748 = vpack.c.b16 %v988, %v980
    %v1749 = vpack.c.b16 %v989, %v981
    %v1750 = vpack.c.b16 %v990, %v982
    %v1751 = vpack.c.b16 %v999, %v991
    %v1752 = vpack.c.b16 %v1000, %v992
    %v1753 = vpack.c.b16 %v1001, %v993
    %v1754 = vpack.c.b16 %v1002, %v994
    %v1755 = vpack.c.b16 %v1003, %v995
    %v1756 = vpack.c.b16 %v1004, %v996
    %v1757 = vpack.c.b16 %v1005, %v997
    %v1758 = vpack.c.b16 %v1006, %v998
    %v1759 = vpack.c.b16 %v1015, %v1007
    %v1760 = vpack.c.b16 %v1016, %v1008
    %v1761 = vpack.c.b16 %v1017, %v1009
    %v1762 = vpack.c.b16 %v1018, %v1010
    %v1763 = vpack.c.b16 %v1019, %v1011
    %v1764 = vpack.c.b16 %v1020, %v1012
    %v1765 = vpack.c.b16 %v1021, %v1013
    %v1766 = vpack.c.b16 %v1022, %v1014
    %v1767 = vpack.c.b16 %v1031, %v1023
    %v1768 = vpack.c.b16 %v1032, %v1024
    %v1769 = vpack.c.b16 %v1033, %v1025
    %v1770 = vpack.c.b16 %v1034, %v1026
    %v1771 = vpack.c.b16 %v1035, %v1027
    %v1772 = vpack.c.b16 %v1036, %v1028
    %v1773 = vpack.c.b16 %v1037, %v1029
    %v1774 = vpack.c.b16 %v1038, %v1030
    %v1775 = vpack.c.b16 %v1047, %v1039
    %v1776 = vpack.c.b16 %v1048, %v1040
    %v1777 = vpack.c.b16 %v1049, %v1041
    %v1778 = vpack.c.b16 %v1050, %v1042
    %v1779 = vpack.c.b16 %v1051, %v1043
    %v1780 = vpack.c.b16 %v1052, %v1044
    %v1781 = vpack.c.b16 %v1053, %v1045
    %v1782 = vpack.c.b16 %v1054, %v1046
    %v1783 = vpack.c.b16 %v1063, %v1055
    %v1784 = vpack.c.b16 %v1064, %v1056
    %v1785 = vpack.c.b16 %v1065, %v1057
    %v1786 = vpack.c.b16 %v1066, %v1058
    %v1787 = vpack.c.b16 %v1067, %v1059
    %v1788 = vpack.c.b16 %v1068, %v1060
    %v1789 = vpack.c.b16 %v1069, %v1061
    %v1790 = vpack.c.b16 %v1070, %v1062
    %v1791 = vpack.c.b16 %v1079, %v1071
    %v1792 = vpack.c.b16 %v1080, %v1072
    %v1793 = vpack.c.b16 %v1081, %v1073
    %v1794 = vpack.c.b16 %v1082, %v1074
    %v1795 = vpack.c.b16 %v1083, %v1075
    %v1796 = vpack.c.b16 %v1084, %v1076
    %v1797 = vpack.c.b16 %v1085, %v1077
    %v1798 = vpack.c.b16 %v1086, %v1078
    %v1799 = vpack.c.b16 %v1095, %v1087
    %v1800 = vpack.c.b16 %v1096, %v1088
    %v1801 = vpack.c.b16 %v1097, %v1089
    %v1802 = vpack.c.b16 %v1098, %v1090
    %v1803 = vpack.c.b16 %v1099, %v1091
    %v1804 = vpack.c.b16 %v1100, %v1092
    %v1805 = vpack.c.b16 %v1101, %v1093
    %v1806 = vpack.c.b16 %v1102, %v1094
    %v1807 = vpack.c.b16 %v1111, %v1103
    %v1808 = vpack.c.b16 %v1112, %v1104
    %v1809 = vpack.c.b16 %v1113, %v1105
    %v1810 = vpack.c.b16 %v1114, %v1106
    %v1811 = vpack.c.b16 %v1115, %v1107
    %v1812 = vpack.c.b16 %v1116, %v1108
    %v1813 = vpack.c.b16 %v1117, %v1109
    %v1814 = vpack.c.b16 %v1118, %v1110
    %v1815 = vpack.c.b16 %v1127, %v1119
    %v1816 = vpack.c.b16 %v1128, %v1120
    %v1817 = vpack.c.b16 %v1129, %v1121
    %v1818 = vpack.c.b16 %v1130, %v1122
    %v1819 = vpack.c.b16 %v1131, %v1123
    %v1820 = vpack.c.b16 %v1132, %v1124
    %v1821 = vpack.c.b16 %v1133, %v1125
    %v1822 = vpack.c.b16 %v1134, %v1126
    %v1823 = vpack.c.b16 %v1143, %v1135
    %v1824 = vpack.c.b16 %v1144, %v1136
    %v1825 = vpack.c.b16 %v1145, %v1137
    %v1826 = vpack.c.b16 %v1146, %v1138
    %v1827 = vpack.c.b16 %v1147, %v1139
    %v1828 = vpack.c.b16 %v1148, %v1140
    %v1829 = vpack.c.b16 %v1149, %v1141
    %v1830 = vpack.c.b16 %v1150, %v1142
    %v1831 = vpack.c.b16 %v1159, %v1151
    %v1832 = vpack.c.b16 %v1160, %v1152
    %v1833 = vpack.c.b16 %v1161, %v1153
    %v1834 = vpack.c.b16 %v1162, %v1154
    %v1835 = vpack.c.b16 %v1163, %v1155
    %v1836 = vpack.c.b16 %v1164, %v1156
    %v1837 = vpack.c.b16 %v1165, %v1157
    %v1838 = vpack.c.b16 %v1166, %v1158
    %v1839 = vpack.c.b16 %v1175, %v1167
    %v1840 = vpack.c.b16 %v1176, %v1168
    %v1841 = vpack.c.b16 %v1177, %v1169
    %v1842 = vpack.c.b16 %v1178, %v1170
    %v1843 = vpack.c.b16 %v1179, %v1171
    %v1844 = vpack.c.b16 %v1180, %v1172
    %v1845 = vpack.c.b16 %v1181, %v1173
    %v1846 = vpack.c.b16 %v1182, %v1174
    %v1847 = vpack.c.b16 %v1191, %v1183
    %v1848 = vpack.c.b16 %v1192, %v1184
    %v1849 = vpack.c.b16 %v1193, %v1185
    %v1850 = vpack.c.b16 %v1194, %v1186
    %v1851 = vpack.c.b16 %v1195, %v1187
    %v1852 = vpack.c.b16 %v1196, %v1188
    %v1853 = vpack.c.b16 %v1197, %v1189
    %v1854 = vpack.c.b16 %v1198, %v1190
    %v1855 = vpack.c.b16 %v1207, %v1199
    %v1856 = vpack.c.b16 %v1208, %v1200
    %v1857 = vpack.c.b16 %v1209, %v1201
    %v1858 = vpack.c.b16 %v1210, %v1202
    %v1859 = vpack.c.b16 %v1211, %v1203
    %v1860 = vpack.c.b16 %v1212, %v1204
    %v1861 = vpack.c.b16 %v1213, %v1205
    %v1862 = vpack.c.b16 %v1214, %v1206
    %v1863 = vpack.c.b16 %v1223, %v1215
    %v1864 = vpack.c.b16 %v1224, %v1216
    %v1865 = vpack.c.b16 %v1225, %v1217
    %v1866 = vpack.c.b16 %v1226, %v1218
    %v1867 = vpack.c.b16 %v1227, %v1219
    %v1868 = vpack.c.b16 %v1228, %v1220
    %v1869 = vpack.c.b16 %v1229, %v1221
    %v1870 = vpack.c.b16 %v1230, %v1222
    %v1871 = vpack.c.b16 %v1239, %v1231
    %v1872 = vpack.c.b16 %v1240, %v1232
    %v1873 = vpack.c.b16 %v1241, %v1233
    %v1874 = vpack.c.b16 %v1242, %v1234
    %v1875 = vpack.c.b16 %v1243, %v1235
    %v1876 = vpack.c.b16 %v1244, %v1236
    %v1877 = vpack.c.b16 %v1245, %v1237
    %v1878 = vpack.c.b16 %v1246, %v1238
    %v1879 = vpack.c.b16 %v1255, %v1247
    %v1880 = vpack.c.b16 %v1256, %v1248
    %v1881 = vpack.c.b16 %v1257, %v1249
    %v1882 = vpack.c.b16 %v1258, %v1250
    %v1883 = vpack.c.b16 %v1259, %v1251
    %v1884 = vpack.c.b16 %v1260, %v1252
    %v1885 = vpack.c.b16 %v1261, %v1253
    %v1886 = vpack.c.b16 %v1262, %v1254
    %v1887 = vpack.c.b16 %v1271, %v1263
    %v1888 = vpack.c.b16 %v1272, %v1264
    %v1889 = vpack.c.b16 %v1273, %v1265
    %v1890 = vpack.c.b16 %v1274, %v1266
    %v1891 = vpack.c.b16 %v1275, %v1267
    %v1892 = vpack.c.b16 %v1276, %v1268
    %v1893 = vpack.c.b16 %v1277, %v1269
    %v1894 = vpack.c.b16 %v1278, %v1270
    %v1895 = vpack.c.b16 %v1287, %v1279
    %v1896 = vpack.c.b16 %v1288, %v1280
    %v1897 = vpack.c.b16 %v1289, %v1281
    %v1898 = vpack.c.b16 %v1290, %v1282
    %v1899 = vpack.c.b16 %v1291, %v1283
    %v1900 = vpack.c.b16 %v1292, %v1284
    %v1901 = vpack.c.b16 %v1293, %v1285
    %v1902 = vpack.c.b16 %v1294, %v1286
    %v1903 = vpack.c.b16 %v1303, %v1295
    %v1904 = vpack.c.b16 %v1304, %v1296
    %v1905 = vpack.c.b16 %v1305, %v1297
    %v1906 = vpack.c.b16 %v1306, %v1298
    %v1907 = vpack.c.b16 %v1307, %v1299
    %v1908 = vpack.c.b16 %v1308, %v1300
    %v1909 = vpack.c.b16 %v1309, %v1301
    %v1910 = vpack.c.b16 %v1310, %v1302
    %v1911 = vpack.c.b16 %v1319, %v1311
    %v1912 = vpack.c.b16 %v1320, %v1312
    %v1913 = vpack.c.b16 %v1321, %v1313
    %v1914 = vpack.c.b16 %v1322, %v1314
    %v1915 = vpack.c.b16 %v1323, %v1315
    %v1916 = vpack.c.b16 %v1324, %v1316
    %v1917 = vpack.c.b16 %v1325, %v1317
    %v1918 = vpack.c.b16 %v1326, %v1318
    %v1919 = vpack.c.b16 %v1335, %v1327
    %v1920 = vpack.c.b16 %v1336, %v1328
    %v1921 = vpack.c.b16 %v1337, %v1329
    %v1922 = vpack.c.b16 %v1338, %v1330
    %v1923 = vpack.c.b16 %v1339, %v1331
    %v1924 = vpack.c.b16 %v1340, %v1332
    %v1925 = vpack.c.b16 %v1341, %v1333
    %v1926 = vpack.c.b16 %v1342, %v1334
    %v1927 = vpack.c.b16 %v1351, %v1343
    %v1928 = vpack.c.b16 %v1352, %v1344
    %v1929 = vpack.c.b16 %v1353, %v1345
    %v1930 = vpack.c.b16 %v1354, %v1346
    %v1931 = vpack.c.b16 %v1355, %v1347
    %v1932 = vpack.c.b16 %v1356, %v1348
    %v1933 = vpack.c.b16 %v1357, %v1349
    %v1934 = vpack.c.b16 %v1358, %v1350
    %v1935 = vpack.c.b16 %v1367, %v1359
    %v1936 = vpack.c.b16 %v1368, %v1360
    %v1937 = vpack.c.b16 %v1369, %v1361
    %v1938 = vpack.c.b16 %v1370, %v1362
    %v1939 = vpack.c.b16 %v1371, %v1363
    %v1940 = vpack.c.b16 %v1372, %v1364
    %v1941 = vpack.c.b16 %v1373, %v1365
    %v1942 = vpack.c.b16 %v1374, %v1366
    %v1943 = vpack.c.b16 %v1383, %v1375
    %v1944 = vpack.c.b16 %v1384, %v1376
    %v1945 = vpack.c.b16 %v1385, %v1377
    %v1946 = vpack.c.b16 %v1386, %v1378
    %v1947 = vpack.c.b16 %v1387, %v1379
    %v1948 = vpack.c.b16 %v1388, %v1380
    %v1949 = vpack.c.b16 %v1389, %v1381
    %v1950 = vpack.c.b16 %v1390, %v1382
    %v1951 = vpack.c.b16 %v1399, %v1391
    %v1952 = vpack.c.b16 %v1400, %v1392
    %v1953 = vpack.c.b16 %v1401, %v1393
    %v1954 = vpack.c.b16 %v1402, %v1394
    %v1955 = vpack.c.b16 %v1403, %v1395
    %v1956 = vpack.c.b16 %v1404, %v1396
    %v1957 = vpack.c.b16 %v1405, %v1397
    %v1958 = vpack.c.b16 %v1406, %v1398
    %v1959 = vpack.c.b16 %v1415, %v1407
    %v1960 = vpack.c.b16 %v1416, %v1408
    %v1961 = vpack.c.b16 %v1417, %v1409
    %v1962 = vpack.c.b16 %v1418, %v1410
    %v1963 = vpack.c.b16 %v1419, %v1411
    %v1964 = vpack.c.b16 %v1420, %v1412
    %v1965 = vpack.c.b16 %v1421, %v1413
    %v1966 = vpack.c.b16 %v1422, %v1414
    %v1967 = vpack.c.b16 %v1431, %v1423
    %v1968 = vpack.c.b16 %v1432, %v1424
    %v1969 = vpack.c.b16 %v1433, %v1425
    %v1970 = vpack.c.b16 %v1434, %v1426
    %v1971 = vpack.c.b16 %v1435, %v1427
    %v1972 = vpack.c.b16 %v1436, %v1428
    %v1973 = vpack.c.b16 %v1437, %v1429
    %v1974 = vpack.c.b16 %v1438, %v1430
    %v1975 = vpack.c.b16 %v1447, %v1439
    %v1976 = vpack.c.b16 %v1448, %v1440
    %v1977 = vpack.c.b16 %v1449, %v1441
    %v1978 = vpack.c.b16 %v1450, %v1442
    %v1979 = vpack.c.b16 %v1451, %v1443
    %v1980 = vpack.c.b16 %v1452, %v1444
    %v1981 = vpack.c.b16 %v1453, %v1445
    %v1982 = vpack.c.b16 %v1454, %v1446
    %v1983 = vpack.c.b16 %v1463, %v1455
    %v1984 = vpack.c.b16 %v1464, %v1456
    %v1985 = vpack.c.b16 %v1465, %v1457
    %v1986 = vpack.c.b16 %v1466, %v1458
    %v1987 = vpack.c.b16 %v1467, %v1459
    %v1988 = vpack.c.b16 %v1468, %v1460
    %v1989 = vpack.c.b16 %v1469, %v1461
    %v1990 = vpack.c.b16 %v1470, %v1462
    %v1991 = vpack.c.b16 %v1479, %v1471
    %v1992 = vpack.c.b16 %v1480, %v1472
    %v1993 = vpack.c.b16 %v1481, %v1473
    %v1994 = vpack.c.b16 %v1482, %v1474
    %v1995 = vpack.c.b16 %v1483, %v1475
    %v1996 = vpack.c.b16 %v1484, %v1476
    %v1997 = vpack.c.b16 %v1485, %v1477
    %v1998 = vpack.c.b16 %v1486, %v1478
    %v1999 = vpack.c.b16 %v1495, %v1487
    %v2000 = vpack.c.b16 %v1496, %v1488
    %v2001 = vpack.c.b16 %v1497, %v1489
    %v2002 = vpack.c.b16 %v1498, %v1490
    %v2003 = vpack.c.b16 %v1499, %v1491
    %v2004 = vpack.c.b16 %v1500, %v1492
    %v2005 = vpack.c.b16 %v1501, %v1493
    %v2006 = vpack.c.b16 %v1502, %v1494
    %v2007 = vpack.c.b16 %v1511, %v1503
    %v2008 = vpack.c.b16 %v1512, %v1504
    %v2009 = vpack.c.b16 %v1513, %v1505
    %v2010 = vpack.c.b16 %v1514, %v1506
    %v2011 = vpack.c.b16 %v1515, %v1507
    %v2012 = vpack.c.b16 %v1516, %v1508
    %v2013 = vpack.c.b16 %v1517, %v1509
    %v2014 = vpack.c.b16 %v1518, %v1510
    %v2015 = vpack.c.b16 %v1527, %v1519
    %v2016 = vpack.c.b16 %v1528, %v1520
    %v2017 = vpack.c.b16 %v1529, %v1521
    %v2018 = vpack.c.b16 %v1530, %v1522
    %v2019 = vpack.c.b16 %v1531, %v1523
    %v2020 = vpack.c.b16 %v1532, %v1524
    %v2021 = vpack.c.b16 %v1533, %v1525
    %v2022 = vpack.c.b16 %v1534, %v1526
    %v2023 = vpack.c.b16 %v1543, %v1535
    %v2024 = vpack.c.b16 %v1544, %v1536
    %v2025 = vpack.c.b16 %v1545, %v1537
    %v2026 = vpack.c.b16 %v1546, %v1538
    %v2027 = vpack.c.b16 %v1547, %v1539
    %v2028 = vpack.c.b16 %v1548, %v1540
    %v2029 = vpack.c.b16 %v1549, %v1541
    %v2030 = vpack.c.b16 %v1550, %v1542
    %v2031 = vpack.c.b16 %v1559, %v1551
    %v2032 = vpack.c.b16 %v1560, %v1552
    %v2033 = vpack.c.b16 %v1561, %v1553
    %v2034 = vpack.c.b16 %v1562, %v1554
    %v2035 = vpack.c.b16 %v1563, %v1555
    %v2036 = vpack.c.b16 %v1564, %v1556
    %v2037 = vpack.c.b16 %v1565, %v1557
    %v2038 = vpack.c.b16 %v1566, %v1558
    %v2039 = vpack.c.b16 %v1575, %v1567
    %v2040 = vpack.c.b16 %v1576, %v1568
    %v2041 = vpack.c.b16 %v1577, %v1569
    %v2042 = vpack.c.b16 %v1578, %v1570
    %v2043 = vpack.c.b16 %v1579, %v1571
    %v2044 = vpack.c.b16 %v1580, %v1572
    %v2045 = vpack.c.b16 %v1581, %v1573
    %v2046 = vpack.c.b16 %v1582, %v1574
    %v2047 = vpack.c.b16 %v1591, %v1583
    %v2048 = vpack.c.b16 %v1592, %v1584
    %v2049 = vpack.c.b16 %v1593, %v1585
    %v2050 = vpack.c.b16 %v1594, %v1586
    %v2051 = vpack.c.b16 %v1595, %v1587
    %v2052 = vpack.c.b16 %v1596, %v1588
    %v2053 = vpack.c.b16 %v1597, %v1589
    %v2054 = vpack.c.b16 %v1598, %v1590
    %v2055 = vpack.c.b16 %v1607, %v1599
    %v2056 = vpack.c.b16 %v1608, %v1600
    %v2057 = vpack.c.b16 %v1609, %v1601
    %v2058 = vpack.c.b16 %v1610, %v1602
    %v2059 = vpack.c.b16 %v1611, %v1603
    %v2060 = vpack.c.b16 %v1612, %v1604
    %v2061 = vpack.c.b16 %v1613, %v1605
    %v2062 = vpack.c.b16 %v1614, %v1606
    %v2063 = vpack.c.b16 %v1623, %v1615
    %v2064 = vpack.c.b16 %v1624, %v1616
    %v2065 = vpack.c.b16 %v1625, %v1617
    %v2066 = vpack.c.b16 %v1626, %v1618
    %v2067 = vpack.c.b16 %v1627, %v1619
    %v2068 = vpack.c.b16 %v1628, %v1620
    %v2069 = vpack.c.b16 %v1629, %v1621
    %v2070 = vpack.c.b16 %v1630, %v1622
    %v2071 = vpack.c.b16 %v1639, %v1631
    %v2072 = vpack.c.b16 %v1640, %v1632
    %v2073 = vpack.c.b16 %v1641, %v1633
    %v2074 = vpack.c.b16 %v1642, %v1634
    %v2075 = vpack.c.b16 %v1643, %v1635
    %v2076 = vpack.c.b16 %v1644, %v1636
    %v2077 = vpack.c.b16 %v1645, %v1637
    %v2078 = vpack.c.b16 %v1646, %v1638
    %v2079 = vpack.c.b16 %v1655, %v1647
    %v2080 = vpack.c.b16 %v1656, %v1648
    %v2081 = vpack.c.b16 %v1657, %v1649
    %v2082 = vpack.c.b16 %v1658, %v1650
    %v2083 = vpack.c.b16 %v1659, %v1651
    %v2084 = vpack.c.b16 %v1660, %v1652
    %v2085 = vpack.c.b16 %v1661, %v1653
    %v2086 = vpack.c.b16 %v1662, %v1654
    %v2087 = vpack.c.b16 %v1671, %v1663
    %v2088 = vpack.c.b16 %v1672, %v1664
    %v2089 = vpack.c.b16 %v1673, %v1665
    %v2090 = vpack.c.b16 %v1674, %v1666
    %v2091 = vpack.c.b16 %v1675, %v1667
    %v2092 = vpack.c.b16 %v1676, %v1668
    %v2093 = vpack.c.b16 %v1677, %v1669
    %v2094 = vpack.c.b16 %v1678, %v1670
    %v2095 = vpack.c.b16 %v1687, %v1679
    %v2096 = vpack.c.b16 %v1688, %v1680
    %v2097 = vpack.c.b16 %v1689, %v1681
    %v2098 = vpack.c.b16 %v1690, %v1682
    %v2099 = vpack.c.b16 %v1691, %v1683
    %v2100 = vpack.c.b16 %v1692, %v1684
    %v2101 = vpack.c.b16 %v1693, %v1685
    %v2102 = vpack.c.b16 %v1694, %v1686
    %v2103 = vpack.c.b16 %v1703, %v1695
    %v2104 = vpack.c.b16 %v1704, %v1696
    %v2105 = vpack.c.b16 %v1705, %v1697
    %v2106 = vpack.c.b16 %v1706, %v1698
    %v2107 = vpack.c.b16 %v1707, %v1699
    %v2108 = vpack.c.b16 %v1708, %v1700
    %v2109 = vpack.c.b16 %v1709, %v1701
    %v2110 = vpack.c.b16 %v1710, %v1702
    %v2111 = vpack.c.b16 %v1719, %v1711
    %v2112 = vpack.c.b16 %v1720, %v1712
    %v2113 = vpack.c.b16 %v1721, %v1713
    %v2114 = vpack.c.b16 %v1722, %v1714
    %v2115 = vpack.c.b16 %v1723, %v1715
    %v2116 = vpack.c.b16 %v1724, %v1716
    %v2117 = vpack.c.b16 %v1725, %v1717
    %v2118 = vpack.c.b16 %v1726, %v1718
    %vm2511 = vcmask 130048
    %v2513 = vsel %vm2511, %v116, 0
    %2515 = vmatprep.subr.bf16.mxu0 %v1784
    %2516 = vmatpush1.bf16.msra.mxu0 %v1783
    %2517 = vmatprep.subr.bf16.mxu0 %v1776
    %2518 = vmatpush1.bf16.msra.mxu0 %v1775
    %2519 = vmatprep.subr.bf16.mxu0 %v1768
    %2520 = vmatpush1.bf16.msra.mxu0 %v1767
    %2521 = vmatprep.subr.bf16.mxu0 %v1760
    %2522 = vmatpush1.bf16.msra.mxu0 %v1759
    %2523 = vmatprep.subr.bf16.mxu0 %v1752
    %2524 = vmatpush1.bf16.msra.mxu0 %v1751
    %2525 = vmatprep.subr.bf16.mxu0 %v1744
    %2526 = vmatpush1.bf16.msra.mxu0 %v1743
    %2527 = vmatprep.subr.bf16.mxu0 %v1736
    %2528 = vmatpush1.bf16.msra.mxu0 %v1735
    %2529 = vmatprep.subr.bf16.mxu0 %v1728
    %2530 = vmatpush1.bf16.msra.mxu0 %v1727
    %2531 = vmatprep.subr.bf16.mxu0 %v1848
    %2532 = vmatpush2.bf16.msra.mxu0 %v1847
    %2533 = vmatprep.subr.bf16.mxu0 %v1840
    %2534 = vmatpush2.bf16.msra.mxu0 %v1839
    %2535 = vmatprep.subr.bf16.mxu0 %v1832
    %2536 = vmatpush2.bf16.msra.mxu0 %v1831
    %2537 = vmatprep.subr.bf16.mxu0 %v1824
    %2538 = vmatpush2.bf16.msra.mxu0 %v1823
    %2539 = vmatprep.subr.bf16.mxu0 %v1816
    %2540 = vmatpush2.bf16.msra.mxu0 %v1815
    %2541 = vmatprep.subr.bf16.mxu0 %v1808
    %2542 = vmatpush2.bf16.msra.mxu0 %v1807
    %2543 = vmatprep.subr.bf16.mxu0 %v1800
    %2544 = vmatpush2.bf16.msra.mxu0 %v1799
    %2545 = vmatprep.subr.bf16.mxu0 %v1792
    %2546 = vmatpush2.bf16.msra.mxu0 %v1791
    %2547 = vmatprep.mubr.bf16.mxu0 %v111
    %2548 = vmatmul.mubr.bf16.gmra.mxu0 %v110
    %v2549 = vpop.f32.mrf.mxu0
    %v2550 = vadd.f32 %v514, %v2549
    %v2551 = vpop.f32.mrf.mxu0
    %v2552 = vadd.f32 %v518, %v2551
    %v2553 = vpop.f32.mrf.mxu0
    %v2554 = vpop.f32.mrf.mxu0
    %2555 = vdwg.mxu0
    %2556 = vmatprep.subr.bf16.mxu0 %v1912
    %2557 = vmatpush1.bf16.msra.mxu0 %v1911
    %2558 = vmatprep.subr.bf16.mxu0 %v1904
    %2559 = vmatpush1.bf16.msra.mxu0 %v1903
    %2560 = vmatprep.subr.bf16.mxu0 %v1896
    %2561 = vmatpush1.bf16.msra.mxu0 %v1895
    %2562 = vmatprep.subr.bf16.mxu0 %v1888
    %2563 = vmatpush1.bf16.msra.mxu0 %v1887
    %2564 = vmatprep.subr.bf16.mxu0 %v1880
    %2565 = vmatpush1.bf16.msra.mxu0 %v1879
    %2566 = vmatprep.subr.bf16.mxu0 %v1872
    %2567 = vmatpush1.bf16.msra.mxu0 %v1871
    %2568 = vmatprep.subr.bf16.mxu0 %v1864
    %2569 = vmatpush1.bf16.msra.mxu0 %v1863
    %2570 = vmatprep.subr.bf16.mxu0 %v1856
    %2571 = vmatpush1.bf16.msra.mxu0 %v1855
    %2572 = vmatprep.subr.bf16.mxu0 %v1976
    %2573 = vmatpush2.bf16.msra.mxu0 %v1975
    %2574 = vmatprep.subr.bf16.mxu0 %v1968
    %2575 = vmatpush2.bf16.msra.mxu0 %v1967
    %2576 = vmatprep.subr.bf16.mxu0 %v1960
    %2577 = vmatpush2.bf16.msra.mxu0 %v1959
    %2578 = vmatprep.subr.bf16.mxu0 %v1952
    %2579 = vmatpush2.bf16.msra.mxu0 %v1951
    %2580 = vmatprep.subr.bf16.mxu0 %v1944
    %2581 = vmatpush2.bf16.msra.mxu0 %v1943
    %2582 = vmatprep.subr.bf16.mxu0 %v1936
    %2583 = vmatpush2.bf16.msra.mxu0 %v1935
    %2584 = vmatprep.subr.bf16.mxu0 %v1928
    %2585 = vmatpush2.bf16.msra.mxu0 %v1927
    %2586 = vmatprep.subr.bf16.mxu0 %v1920
    %2587 = vmatpush2.bf16.msra.mxu0 %v1919
    %2588 = vmatprep.mubr.bf16.mxu0 %v113
    %2589 = vmatmul.mubr.bf16.gmra.mxu0 %v112
    %v2590 = vpop.f32.mrf.mxu0
    %v2591 = vadd.f32 %v2550, %v2590
    %v2592 = vpop.f32.mrf.mxu0
    %v2593 = vadd.f32 %v2552, %v2592
    %v2594 = vpop.f32.mrf.mxu0
    %v2595 = vpop.f32.mrf.mxu0
    %2596 = vdwg.mxu0
    %2597 = vmatprep.subr.bf16.mxu0 %v2040
    %2598 = vmatpush1.bf16.msra.mxu0 %v2039
    %2599 = vmatprep.subr.bf16.mxu0 %v2032
    %2600 = vmatpush1.bf16.msra.mxu0 %v2031
    %2601 = vmatprep.subr.bf16.mxu0 %v2024
    %2602 = vmatpush1.bf16.msra.mxu0 %v2023
    %2603 = vmatprep.subr.bf16.mxu0 %v2016
    %2604 = vmatpush1.bf16.msra.mxu0 %v2015
    %2605 = vmatprep.subr.bf16.mxu0 %v2008
    %2606 = vmatpush1.bf16.msra.mxu0 %v2007
    %2607 = vmatprep.subr.bf16.mxu0 %v2000
    %2608 = vmatpush1.bf16.msra.mxu0 %v1999
    %2609 = vmatprep.subr.bf16.mxu0 %v1992
    %2610 = vmatpush1.bf16.msra.mxu0 %v1991
    %2611 = vmatprep.subr.bf16.mxu0 %v1984
    %2612 = vmatpush1.bf16.msra.mxu0 %v1983
    %2613 = vmatprep.subr.bf16.mxu0 %v2104
    %2614 = vmatpush2.bf16.msra.mxu0 %v2103
    %2615 = vmatprep.subr.bf16.mxu0 %v2096
    %2616 = vmatpush2.bf16.msra.mxu0 %v2095
    %2617 = vmatprep.subr.bf16.mxu0 %v2088
    %2618 = vmatpush2.bf16.msra.mxu0 %v2087
    %2619 = vmatprep.subr.bf16.mxu0 %v2080
    %2620 = vmatpush2.bf16.msra.mxu0 %v2079
    %2621 = vmatprep.subr.bf16.mxu0 %v2072
    %2622 = vmatpush2.bf16.msra.mxu0 %v2071
    %2623 = vmatprep.subr.bf16.mxu0 %v2064
    %2624 = vmatpush2.bf16.msra.mxu0 %v2063
    %2625 = vmatprep.subr.bf16.mxu0 %v2056
    %2626 = vmatpush2.bf16.msra.mxu0 %v2055
    %2627 = vmatprep.subr.bf16.mxu0 %v2048
    %2628 = vmatpush2.bf16.msra.mxu0 %v2047
    %2629 = vmatprep.mubr.bf16.mxu0 %v115
    %2630 = vmatmul.mubr.bf16.gmra.mxu0 %v114
    %v2631 = vpop.f32.mrf.mxu0
    %v2632 = vadd.f32 %v2591, %v2631
    %v2633 = vpop.f32.mrf.mxu0
    %v2634 = vadd.f32 %v2593, %v2633
    %v2635 = vpop.f32.mrf.mxu0
    %v2636 = vpop.f32.mrf.mxu0
    %2637 = vdwg.mxu0
    %2638 = vmatprep.subr.bf16.mxu0 0
    %2639 = vmatpush1.bf16.msra.mxu0 0
    %2640 = vmatprep.subr.bf16.mxu0 0
    %2641 = vmatpush1.bf16.msra.mxu0 0
    %2642 = vmatprep.subr.bf16.mxu0 0
    %2643 = vmatpush1.bf16.msra.mxu0 0
    %2644 = vmatprep.subr.bf16.mxu0 0
    %2645 = vmatpush1.bf16.msra.mxu0 0
    %2646 = vmatprep.subr.bf16.mxu0 0
    %2647 = vmatpush1.bf16.msra.mxu0 0
    %2648 = vmatprep.subr.bf16.mxu0 0
    %2649 = vmatpush1.bf16.msra.mxu0 0
    %2650 = vmatprep.subr.bf16.mxu0 0
    %2651 = vmatpush1.bf16.msra.mxu0 0
    %2652 = vmatprep.subr.bf16.mxu0 %v2112
    %2653 = vmatpush1.bf16.msra.mxu0 %v2111
    %2654 = vmatprep.subr.bf16.mxu0 0
    %2655 = vmatpush2.bf16.msra.mxu0 0
    %2656 = vmatprep.subr.bf16.mxu0 0
    %2657 = vmatpush2.bf16.msra.mxu0 0
    %2658 = vmatprep.subr.bf16.mxu0 0
    %2659 = vmatpush2.bf16.msra.mxu0 0
    %2660 = vmatprep.subr.bf16.mxu0 0
    %2661 = vmatpush2.bf16.msra.mxu0 0
    %2662 = vmatprep.subr.bf16.mxu0 0
    %2663 = vmatpush2.bf16.msra.mxu0 0
    %2664 = vmatprep.subr.bf16.mxu0 0
    %2665 = vmatpush2.bf16.msra.mxu0 0
    %2666 = vmatprep.subr.bf16.mxu0 0
    %2667 = vmatpush2.bf16.msra.mxu0 0
    %2668 = vmatprep.subr.bf16.mxu0 0
    %2669 = vmatpush2.bf16.msra.mxu0 0
    %2670 = vmatprep.mubr.bf16.mxu0 0
    %2671 = vmatmul.mubr.bf16.gmra.mxu0 %v2513
    %v2672 = vpop.f32.mrf.mxu0
    %v2673 = vadd.f32 %v2632, %v2672
    %v2674 = vpop.f32.mrf.mxu0
    %v2675 = vadd.f32 %v2634, %v2674
    %v2676 = vpop.f32.mrf.mxu0
    %v2677 = vpop.f32.mrf.mxu0
    %2678 = vdwg.mxu0
    %2679 = vmatprep.subr.bf16.mxu0 %v1786
    %2680 = vmatpush1.bf16.msra.mxu0 %v1785
    %2681 = vmatprep.subr.bf16.mxu0 %v1778
    %2682 = vmatpush1.bf16.msra.mxu0 %v1777
    %2683 = vmatprep.subr.bf16.mxu0 %v1770
    %2684 = vmatpush1.bf16.msra.mxu0 %v1769
    %2685 = vmatprep.subr.bf16.mxu0 %v1762
    %2686 = vmatpush1.bf16.msra.mxu0 %v1761
    %2687 = vmatprep.subr.bf16.mxu0 %v1754
    %2688 = vmatpush1.bf16.msra.mxu0 %v1753
    %2689 = vmatprep.subr.bf16.mxu0 %v1746
    %2690 = vmatpush1.bf16.msra.mxu0 %v1745
    %2691 = vmatprep.subr.bf16.mxu0 %v1738
    %2692 = vmatpush1.bf16.msra.mxu0 %v1737
    %2693 = vmatprep.subr.bf16.mxu0 %v1730
    %2694 = vmatpush1.bf16.msra.mxu0 %v1729
    %2695 = vmatprep.subr.bf16.mxu0 %v1850
    %2696 = vmatpush2.bf16.msra.mxu0 %v1849
    %2697 = vmatprep.subr.bf16.mxu0 %v1842
    %2698 = vmatpush2.bf16.msra.mxu0 %v1841
    %2699 = vmatprep.subr.bf16.mxu0 %v1834
    %2700 = vmatpush2.bf16.msra.mxu0 %v1833
    %2701 = vmatprep.subr.bf16.mxu0 %v1826
    %2702 = vmatpush2.bf16.msra.mxu0 %v1825
    %2703 = vmatprep.subr.bf16.mxu0 %v1818
    %2704 = vmatpush2.bf16.msra.mxu0 %v1817
    %2705 = vmatprep.subr.bf16.mxu0 %v1810
    %2706 = vmatpush2.bf16.msra.mxu0 %v1809
    %2707 = vmatprep.subr.bf16.mxu0 %v1802
    %2708 = vmatpush2.bf16.msra.mxu0 %v1801
    %2709 = vmatprep.subr.bf16.mxu0 %v1794
    %2710 = vmatpush2.bf16.msra.mxu0 %v1793
    %2711 = vmatprep.mubr.bf16.mxu0 %v111
    %2712 = vmatmul.mubr.bf16.gmra.mxu0 %v110
    %v2713 = vpop.f32.mrf.mxu0
    %v2714 = vadd.f32 %v522, %v2713
    %v2715 = vpop.f32.mrf.mxu0
    %v2716 = vadd.f32 %v526, %v2715
    %v2717 = vpop.f32.mrf.mxu0
    %v2718 = vpop.f32.mrf.mxu0
    %2719 = vdwg.mxu0
    %2720 = vmatprep.subr.bf16.mxu0 %v1914
    %2721 = vmatpush1.bf16.msra.mxu0 %v1913
    %2722 = vmatprep.subr.bf16.mxu0 %v1906
    %2723 = vmatpush1.bf16.msra.mxu0 %v1905
    %2724 = vmatprep.subr.bf16.mxu0 %v1898
    %2725 = vmatpush1.bf16.msra.mxu0 %v1897
    %2726 = vmatprep.subr.bf16.mxu0 %v1890
    %2727 = vmatpush1.bf16.msra.mxu0 %v1889
    %2728 = vmatprep.subr.bf16.mxu0 %v1882
    %2729 = vmatpush1.bf16.msra.mxu0 %v1881
    %2730 = vmatprep.subr.bf16.mxu0 %v1874
    %2731 = vmatpush1.bf16.msra.mxu0 %v1873
    %2732 = vmatprep.subr.bf16.mxu0 %v1866
    %2733 = vmatpush1.bf16.msra.mxu0 %v1865
    %2734 = vmatprep.subr.bf16.mxu0 %v1858
    %2735 = vmatpush1.bf16.msra.mxu0 %v1857
    %2736 = vmatprep.subr.bf16.mxu0 %v1978
    %2737 = vmatpush2.bf16.msra.mxu0 %v1977
    %2738 = vmatprep.subr.bf16.mxu0 %v1970
    %2739 = vmatpush2.bf16.msra.mxu0 %v1969
    %2740 = vmatprep.subr.bf16.mxu0 %v1962
    %2741 = vmatpush2.bf16.msra.mxu0 %v1961
    %2742 = vmatprep.subr.bf16.mxu0 %v1954
    %2743 = vmatpush2.bf16.msra.mxu0 %v1953
    %2744 = vmatprep.subr.bf16.mxu0 %v1946
    %2745 = vmatpush2.bf16.msra.mxu0 %v1945
    %2746 = vmatprep.subr.bf16.mxu0 %v1938
    %2747 = vmatpush2.bf16.msra.mxu0 %v1937
    %2748 = vmatprep.subr.bf16.mxu0 %v1930
    %2749 = vmatpush2.bf16.msra.mxu0 %v1929
    %2750 = vmatprep.subr.bf16.mxu0 %v1922
    %2751 = vmatpush2.bf16.msra.mxu0 %v1921
    %2752 = vmatprep.mubr.bf16.mxu0 %v113
    %2753 = vmatmul.mubr.bf16.gmra.mxu0 %v112
    %v2754 = vpop.f32.mrf.mxu0
    %v2755 = vadd.f32 %v2714, %v2754
    %v2756 = vpop.f32.mrf.mxu0
    %v2757 = vadd.f32 %v2716, %v2756
    %v2758 = vpop.f32.mrf.mxu0
    %v2759 = vpop.f32.mrf.mxu0
    %2760 = vdwg.mxu0
    %2761 = vmatprep.subr.bf16.mxu0 %v2042
    %2762 = vmatpush1.bf16.msra.mxu0 %v2041
    %2763 = vmatprep.subr.bf16.mxu0 %v2034
    %2764 = vmatpush1.bf16.msra.mxu0 %v2033
    %2765 = vmatprep.subr.bf16.mxu0 %v2026
    %2766 = vmatpush1.bf16.msra.mxu0 %v2025
    %2767 = vmatprep.subr.bf16.mxu0 %v2018
    %2768 = vmatpush1.bf16.msra.mxu0 %v2017
    %2769 = vmatprep.subr.bf16.mxu0 %v2010
    %2770 = vmatpush1.bf16.msra.mxu0 %v2009
    %2771 = vmatprep.subr.bf16.mxu0 %v2002
    %2772 = vmatpush1.bf16.msra.mxu0 %v2001
    %2773 = vmatprep.subr.bf16.mxu0 %v1994
    %2774 = vmatpush1.bf16.msra.mxu0 %v1993
    %2775 = vmatprep.subr.bf16.mxu0 %v1986
    %2776 = vmatpush1.bf16.msra.mxu0 %v1985
    %2777 = vmatprep.subr.bf16.mxu0 %v2106
    %2778 = vmatpush2.bf16.msra.mxu0 %v2105
    %2779 = vmatprep.subr.bf16.mxu0 %v2098
    %2780 = vmatpush2.bf16.msra.mxu0 %v2097
    %2781 = vmatprep.subr.bf16.mxu0 %v2090
    %2782 = vmatpush2.bf16.msra.mxu0 %v2089
    %2783 = vmatprep.subr.bf16.mxu0 %v2082
    %2784 = vmatpush2.bf16.msra.mxu0 %v2081
    %2785 = vmatprep.subr.bf16.mxu0 %v2074
    %2786 = vmatpush2.bf16.msra.mxu0 %v2073
    %2787 = vmatprep.subr.bf16.mxu0 %v2066
    %2788 = vmatpush2.bf16.msra.mxu0 %v2065
    %2789 = vmatprep.subr.bf16.mxu0 %v2058
    %2790 = vmatpush2.bf16.msra.mxu0 %v2057
    %2791 = vmatprep.subr.bf16.mxu0 %v2050
    %2792 = vmatpush2.bf16.msra.mxu0 %v2049
    %2793 = vmatprep.mubr.bf16.mxu0 %v115
    %2794 = vmatmul.mubr.bf16.gmra.mxu0 %v114
    %v2795 = vpop.f32.mrf.mxu0
    %v2796 = vadd.f32 %v2755, %v2795
    %v2797 = vpop.f32.mrf.mxu0
    %v2798 = vadd.f32 %v2757, %v2797
    %v2799 = vpop.f32.mrf.mxu0
    %v2800 = vpop.f32.mrf.mxu0
    %2801 = vdwg.mxu0
    %2802 = vmatprep.subr.bf16.mxu0 0
    %2803 = vmatpush1.bf16.msra.mxu0 0
    %2804 = vmatprep.subr.bf16.mxu0 0
    %2805 = vmatpush1.bf16.msra.mxu0 0
    %2806 = vmatprep.subr.bf16.mxu0 0
    %2807 = vmatpush1.bf16.msra.mxu0 0
    %2808 = vmatprep.subr.bf16.mxu0 0
    %2809 = vmatpush1.bf16.msra.mxu0 0
    %2810 = vmatprep.subr.bf16.mxu0 0
    %2811 = vmatpush1.bf16.msra.mxu0 0
    %2812 = vmatprep.subr.bf16.mxu0 0
    %2813 = vmatpush1.bf16.msra.mxu0 0
    %2814 = vmatprep.subr.bf16.mxu0 0
    %2815 = vmatpush1.bf16.msra.mxu0 0
    %2816 = vmatprep.subr.bf16.mxu0 %v2114
    %2817 = vmatpush1.bf16.msra.mxu0 %v2113
    %2818 = vmatprep.subr.bf16.mxu0 0
    %2819 = vmatpush2.bf16.msra.mxu0 0
    %2820 = vmatprep.subr.bf16.mxu0 0
    %2821 = vmatpush2.bf16.msra.mxu0 0
    %2822 = vmatprep.subr.bf16.mxu0 0
    %2823 = vmatpush2.bf16.msra.mxu0 0
    %2824 = vmatprep.subr.bf16.mxu0 0
    %2825 = vmatpush2.bf16.msra.mxu0 0
    %2826 = vmatprep.subr.bf16.mxu0 0
    %2827 = vmatpush2.bf16.msra.mxu0 0
    %2828 = vmatprep.subr.bf16.mxu0 0
    %2829 = vmatpush2.bf16.msra.mxu0 0
    %2830 = vmatprep.subr.bf16.mxu0 0
    %2831 = vmatpush2.bf16.msra.mxu0 0
    %2832 = vmatprep.subr.bf16.mxu0 0
    %2833 = vmatpush2.bf16.msra.mxu0 0
    %2834 = vmatprep.mubr.bf16.mxu0 0
    %2835 = vmatmul.mubr.bf16.gmra.mxu0 %v2513
    %v2836 = vpop.f32.mrf.mxu0
    %v2837 = vadd.f32 %v2796, %v2836
    %v2838 = vpop.f32.mrf.mxu0
    %v2839 = vadd.f32 %v2798, %v2838
    %v2840 = vpop.f32.mrf.mxu0
    %v2841 = vpop.f32.mrf.mxu0
    %2842 = vdwg.mxu0
    %2843 = vmatprep.subr.bf16.mxu0 %v1788
    %2844 = vmatpush1.bf16.msra.mxu0 %v1787
    %2845 = vmatprep.subr.bf16.mxu0 %v1780
    %2846 = vmatpush1.bf16.msra.mxu0 %v1779
    %2847 = vmatprep.subr.bf16.mxu0 %v1772
    %2848 = vmatpush1.bf16.msra.mxu0 %v1771
    %2849 = vmatprep.subr.bf16.mxu0 %v1764
    %2850 = vmatpush1.bf16.msra.mxu0 %v1763
    %2851 = vmatprep.subr.bf16.mxu0 %v1756
    %2852 = vmatpush1.bf16.msra.mxu0 %v1755
    %2853 = vmatprep.subr.bf16.mxu0 %v1748
    %2854 = vmatpush1.bf16.msra.mxu0 %v1747
    %2855 = vmatprep.subr.bf16.mxu0 %v1740
    %2856 = vmatpush1.bf16.msra.mxu0 %v1739
    %2857 = vmatprep.subr.bf16.mxu0 %v1732
    %2858 = vmatpush1.bf16.msra.mxu0 %v1731
    %2859 = vmatprep.subr.bf16.mxu0 %v1852
    %2860 = vmatpush2.bf16.msra.mxu0 %v1851
    %2861 = vmatprep.subr.bf16.mxu0 %v1844
    %2862 = vmatpush2.bf16.msra.mxu0 %v1843
    %2863 = vmatprep.subr.bf16.mxu0 %v1836
    %2864 = vmatpush2.bf16.msra.mxu0 %v1835
    %2865 = vmatprep.subr.bf16.mxu0 %v1828
    %2866 = vmatpush2.bf16.msra.mxu0 %v1827
    %2867 = vmatprep.subr.bf16.mxu0 %v1820
    %2868 = vmatpush2.bf16.msra.mxu0 %v1819
    %2869 = vmatprep.subr.bf16.mxu0 %v1812
    %2870 = vmatpush2.bf16.msra.mxu0 %v1811
    %2871 = vmatprep.subr.bf16.mxu0 %v1804
    %2872 = vmatpush2.bf16.msra.mxu0 %v1803
    %2873 = vmatprep.subr.bf16.mxu0 %v1796
    %2874 = vmatpush2.bf16.msra.mxu0 %v1795
    %2875 = vmatprep.mubr.bf16.mxu0 %v111
    %2876 = vmatmul.mubr.bf16.gmra.mxu0 %v110
    %v2877 = vpop.f32.mrf.mxu0
    %v2878 = vadd.f32 %v530, %v2877
    %v2879 = vpop.f32.mrf.mxu0
    %v2880 = vadd.f32 %v534, %v2879
    %v2881 = vpop.f32.mrf.mxu0
    %v2882 = vpop.f32.mrf.mxu0
    %2883 = vdwg.mxu0
    %2884 = vmatprep.subr.bf16.mxu0 %v1916
    %2885 = vmatpush1.bf16.msra.mxu0 %v1915
    %2886 = vmatprep.subr.bf16.mxu0 %v1908
    %2887 = vmatpush1.bf16.msra.mxu0 %v1907
    %2888 = vmatprep.subr.bf16.mxu0 %v1900
    %2889 = vmatpush1.bf16.msra.mxu0 %v1899
    %2890 = vmatprep.subr.bf16.mxu0 %v1892
    %2891 = vmatpush1.bf16.msra.mxu0 %v1891
    %2892 = vmatprep.subr.bf16.mxu0 %v1884
    %2893 = vmatpush1.bf16.msra.mxu0 %v1883
    %2894 = vmatprep.subr.bf16.mxu0 %v1876
    %2895 = vmatpush1.bf16.msra.mxu0 %v1875
    %2896 = vmatprep.subr.bf16.mxu0 %v1868
    %2897 = vmatpush1.bf16.msra.mxu0 %v1867
    %2898 = vmatprep.subr.bf16.mxu0 %v1860
    %2899 = vmatpush1.bf16.msra.mxu0 %v1859
    %2900 = vmatprep.subr.bf16.mxu0 %v1980
    %2901 = vmatpush2.bf16.msra.mxu0 %v1979
    %2902 = vmatprep.subr.bf16.mxu0 %v1972
    %2903 = vmatpush2.bf16.msra.mxu0 %v1971
    %2904 = vmatprep.subr.bf16.mxu0 %v1964
    %2905 = vmatpush2.bf16.msra.mxu0 %v1963
    %2906 = vmatprep.subr.bf16.mxu0 %v1956
    %2907 = vmatpush2.bf16.msra.mxu0 %v1955
    %2908 = vmatprep.subr.bf16.mxu0 %v1948
    %2909 = vmatpush2.bf16.msra.mxu0 %v1947
    %2910 = vmatprep.subr.bf16.mxu0 %v1940
    %2911 = vmatpush2.bf16.msra.mxu0 %v1939
    %2912 = vmatprep.subr.bf16.mxu0 %v1932
    %2913 = vmatpush2.bf16.msra.mxu0 %v1931
    %2914 = vmatprep.subr.bf16.mxu0 %v1924
    %2915 = vmatpush2.bf16.msra.mxu0 %v1923
    %2916 = vmatprep.mubr.bf16.mxu0 %v113
    %2917 = vmatmul.mubr.bf16.gmra.mxu0 %v112
    %v2918 = vpop.f32.mrf.mxu0
    %v2919 = vadd.f32 %v2878, %v2918
    %v2920 = vpop.f32.mrf.mxu0
    %v2921 = vadd.f32 %v2880, %v2920
    %v2922 = vpop.f32.mrf.mxu0
    %v2923 = vpop.f32.mrf.mxu0
    %2924 = vdwg.mxu0
    %2925 = vmatprep.subr.bf16.mxu0 %v2044
    %2926 = vmatpush1.bf16.msra.mxu0 %v2043
    %2927 = vmatprep.subr.bf16.mxu0 %v2036
    %2928 = vmatpush1.bf16.msra.mxu0 %v2035
    %2929 = vmatprep.subr.bf16.mxu0 %v2028
    %2930 = vmatpush1.bf16.msra.mxu0 %v2027
    %2931 = vmatprep.subr.bf16.mxu0 %v2020
    %2932 = vmatpush1.bf16.msra.mxu0 %v2019
    %2933 = vmatprep.subr.bf16.mxu0 %v2012
    %2934 = vmatpush1.bf16.msra.mxu0 %v2011
    %2935 = vmatprep.subr.bf16.mxu0 %v2004
    %2936 = vmatpush1.bf16.msra.mxu0 %v2003
    %2937 = vmatprep.subr.bf16.mxu0 %v1996
    %2938 = vmatpush1.bf16.msra.mxu0 %v1995
    %2939 = vmatprep.subr.bf16.mxu0 %v1988
    %2940 = vmatpush1.bf16.msra.mxu0 %v1987
    %2941 = vmatprep.subr.bf16.mxu0 %v2108
    %2942 = vmatpush2.bf16.msra.mxu0 %v2107
    %2943 = vmatprep.subr.bf16.mxu0 %v2100
    %2944 = vmatpush2.bf16.msra.mxu0 %v2099
    %2945 = vmatprep.subr.bf16.mxu0 %v2092
    %2946 = vmatpush2.bf16.msra.mxu0 %v2091
    %2947 = vmatprep.subr.bf16.mxu0 %v2084
    %2948 = vmatpush2.bf16.msra.mxu0 %v2083
    %2949 = vmatprep.subr.bf16.mxu0 %v2076
    %2950 = vmatpush2.bf16.msra.mxu0 %v2075
    %2951 = vmatprep.subr.bf16.mxu0 %v2068
    %2952 = vmatpush2.bf16.msra.mxu0 %v2067
    %2953 = vmatprep.subr.bf16.mxu0 %v2060
    %2954 = vmatpush2.bf16.msra.mxu0 %v2059
    %2955 = vmatprep.subr.bf16.mxu0 %v2052
    %2956 = vmatpush2.bf16.msra.mxu0 %v2051
    %2957 = vmatprep.mubr.bf16.mxu0 %v115
    %2958 = vmatmul.mubr.bf16.gmra.mxu0 %v114
    %v2959 = vpop.f32.mrf.mxu0
    %v2960 = vadd.f32 %v2919, %v2959
    %v2961 = vpop.f32.mrf.mxu0
    %v2962 = vadd.f32 %v2921, %v2961
    %v2963 = vpop.f32.mrf.mxu0
    %v2964 = vpop.f32.mrf.mxu0
    %2965 = vdwg.mxu0
    %2966 = vmatprep.subr.bf16.mxu0 0
    %2967 = vmatpush1.bf16.msra.mxu0 0
    %2968 = vmatprep.subr.bf16.mxu0 0
    %2969 = vmatpush1.bf16.msra.mxu0 0
    %2970 = vmatprep.subr.bf16.mxu0 0
    %2971 = vmatpush1.bf16.msra.mxu0 0
    %2972 = vmatprep.subr.bf16.mxu0 0
    %2973 = vmatpush1.bf16.msra.mxu0 0
    %2974 = vmatprep.subr.bf16.mxu0 0
    %2975 = vmatpush1.bf16.msra.mxu0 0
    %2976 = vmatprep.subr.bf16.mxu0 0
    %2977 = vmatpush1.bf16.msra.mxu0 0
    %2978 = vmatprep.subr.bf16.mxu0 0
    %2979 = vmatpush1.bf16.msra.mxu0 0
    %2980 = vmatprep.subr.bf16.mxu0 %v2116
    %2981 = vmatpush1.bf16.msra.mxu0 %v2115
    %2982 = vmatprep.subr.bf16.mxu0 0
    %2983 = vmatpush2.bf16.msra.mxu0 0
    %2984 = vmatprep.subr.bf16.mxu0 0
    %2985 = vmatpush2.bf16.msra.mxu0 0
    %2986 = vmatprep.subr.bf16.mxu0 0
    %2987 = vmatpush2.bf16.msra.mxu0 0
    %2988 = vmatprep.subr.bf16.mxu0 0
    %2989 = vmatpush2.bf16.msra.mxu0 0
    %2990 = vmatprep.subr.bf16.mxu0 0
    %2991 = vmatpush2.bf16.msra.mxu0 0
    %2992 = vmatprep.subr.bf16.mxu0 0
    %2993 = vmatpush2.bf16.msra.mxu0 0
    %2994 = vmatprep.subr.bf16.mxu0 0
    %2995 = vmatpush2.bf16.msra.mxu0 0
    %2996 = vmatprep.subr.bf16.mxu0 0
    %2997 = vmatpush2.bf16.msra.mxu0 0
    %2998 = vmatprep.mubr.bf16.mxu0 0
    %2999 = vmatmul.mubr.bf16.gmra.mxu0 %v2513
    %v3000 = vpop.f32.mrf.mxu0
    %v3001 = vadd.f32 %v2960, %v3000
    %v3002 = vpop.f32.mrf.mxu0
    %v3003 = vadd.f32 %v2962, %v3002
    %v3004 = vpop.f32.mrf.mxu0
    %v3005 = vpop.f32.mrf.mxu0
    %3006 = vdwg.mxu0
    %3007 = vmatprep.subr.bf16.mxu0 %v1790
    %3008 = vmatpush1.bf16.msra.mxu0 %v1789
    %3009 = vmatprep.subr.bf16.mxu0 %v1782
    %3010 = vmatpush1.bf16.msra.mxu0 %v1781
    %3011 = vmatprep.subr.bf16.mxu0 %v1774
    %3012 = vmatpush1.bf16.msra.mxu0 %v1773
    %3013 = vmatprep.subr.bf16.mxu0 %v1766
    %3014 = vmatpush1.bf16.msra.mxu0 %v1765
    %3015 = vmatprep.subr.bf16.mxu0 %v1758
    %3016 = vmatpush1.bf16.msra.mxu0 %v1757
    %3017 = vmatprep.subr.bf16.mxu0 %v1750
    %3018 = vmatpush1.bf16.msra.mxu0 %v1749
    %3019 = vmatprep.subr.bf16.mxu0 %v1742
    %3020 = vmatpush1.bf16.msra.mxu0 %v1741
    %3021 = vmatprep.subr.bf16.mxu0 %v1734
    %3022 = vmatpush1.bf16.msra.mxu0 %v1733
    %3023 = vmatprep.subr.bf16.mxu0 %v1854
    %3024 = vmatpush2.bf16.msra.mxu0 %v1853
    %3025 = vmatprep.subr.bf16.mxu0 %v1846
    %3026 = vmatpush2.bf16.msra.mxu0 %v1845
    %3027 = vmatprep.subr.bf16.mxu0 %v1838
    %3028 = vmatpush2.bf16.msra.mxu0 %v1837
    %3029 = vmatprep.subr.bf16.mxu0 %v1830
    %3030 = vmatpush2.bf16.msra.mxu0 %v1829
    %3031 = vmatprep.subr.bf16.mxu0 %v1822
    %3032 = vmatpush2.bf16.msra.mxu0 %v1821
    %3033 = vmatprep.subr.bf16.mxu0 %v1814
    %3034 = vmatpush2.bf16.msra.mxu0 %v1813
    %3035 = vmatprep.subr.bf16.mxu0 %v1806
    %3036 = vmatpush2.bf16.msra.mxu0 %v1805
    %3037 = vmatprep.subr.bf16.mxu0 %v1798
    %3038 = vmatpush2.bf16.msra.mxu0 %v1797
    %3039 = vmatprep.mubr.bf16.mxu0 %v111
    %3040 = vmatmul.mubr.bf16.gmra.mxu0 %v110
    %v3041 = vpop.f32.mrf.mxu0
    %v3042 = vadd.f32 %v538, %v3041
    %v3043 = vpop.f32.mrf.mxu0
    %v3044 = vadd.f32 %v542, %v3043
    %v3045 = vpop.f32.mrf.mxu0
    %v3046 = vpop.f32.mrf.mxu0
    %3047 = vdwg.mxu0
    %3048 = vmatprep.subr.bf16.mxu0 %v1918
    %3049 = vmatpush1.bf16.msra.mxu0 %v1917
    %3050 = vmatprep.subr.bf16.mxu0 %v1910
    %3051 = vmatpush1.bf16.msra.mxu0 %v1909
    %3052 = vmatprep.subr.bf16.mxu0 %v1902
    %3053 = vmatpush1.bf16.msra.mxu0 %v1901
    %3054 = vmatprep.subr.bf16.mxu0 %v1894
    %3055 = vmatpush1.bf16.msra.mxu0 %v1893
    %3056 = vmatprep.subr.bf16.mxu0 %v1886
    %3057 = vmatpush1.bf16.msra.mxu0 %v1885
    %3058 = vmatprep.subr.bf16.mxu0 %v1878
    %3059 = vmatpush1.bf16.msra.mxu0 %v1877
    %3060 = vmatprep.subr.bf16.mxu0 %v1870
    %3061 = vmatpush1.bf16.msra.mxu0 %v1869
    %3062 = vmatprep.subr.bf16.mxu0 %v1862
    %3063 = vmatpush1.bf16.msra.mxu0 %v1861
    %3064 = vmatprep.subr.bf16.mxu0 %v1982
    %3065 = vmatpush2.bf16.msra.mxu0 %v1981
    %3066 = vmatprep.subr.bf16.mxu0 %v1974
    %3067 = vmatpush2.bf16.msra.mxu0 %v1973
    %3068 = vmatprep.subr.bf16.mxu0 %v1966
    %3069 = vmatpush2.bf16.msra.mxu0 %v1965
    %3070 = vmatprep.subr.bf16.mxu0 %v1958
    %3071 = vmatpush2.bf16.msra.mxu0 %v1957
    %3072 = vmatprep.subr.bf16.mxu0 %v1950
    %3073 = vmatpush2.bf16.msra.mxu0 %v1949
    %3074 = vmatprep.subr.bf16.mxu0 %v1942
    %3075 = vmatpush2.bf16.msra.mxu0 %v1941
    %3076 = vmatprep.subr.bf16.mxu0 %v1934
    %3077 = vmatpush2.bf16.msra.mxu0 %v1933
    %3078 = vmatprep.subr.bf16.mxu0 %v1926
    %3079 = vmatpush2.bf16.msra.mxu0 %v1925
    %3080 = vmatprep.mubr.bf16.mxu0 %v113
    %3081 = vmatmul.mubr.bf16.gmra.mxu0 %v112
    %v3082 = vpop.f32.mrf.mxu0
    %v3083 = vadd.f32 %v3042, %v3082
    %v3084 = vpop.f32.mrf.mxu0
    %v3085 = vadd.f32 %v3044, %v3084
    %v3086 = vpop.f32.mrf.mxu0
    %v3087 = vpop.f32.mrf.mxu0
    %3088 = vdwg.mxu0
    %3089 = vmatprep.subr.bf16.mxu0 %v2046
    %3090 = vmatpush1.bf16.msra.mxu0 %v2045
    %3091 = vmatprep.subr.bf16.mxu0 %v2038
    %3092 = vmatpush1.bf16.msra.mxu0 %v2037
    %3093 = vmatprep.subr.bf16.mxu0 %v2030
    %3094 = vmatpush1.bf16.msra.mxu0 %v2029
    %3095 = vmatprep.subr.bf16.mxu0 %v2022
    %3096 = vmatpush1.bf16.msra.mxu0 %v2021
    %3097 = vmatprep.subr.bf16.mxu0 %v2014
    %3098 = vmatpush1.bf16.msra.mxu0 %v2013
    %3099 = vmatprep.subr.bf16.mxu0 %v2006
    %3100 = vmatpush1.bf16.msra.mxu0 %v2005
    %3101 = vmatprep.subr.bf16.mxu0 %v1998
    %3102 = vmatpush1.bf16.msra.mxu0 %v1997
    %3103 = vmatprep.subr.bf16.mxu0 %v1990
    %3104 = vmatpush1.bf16.msra.mxu0 %v1989
    %3105 = vmatprep.subr.bf16.mxu0 %v2110
    %3106 = vmatpush2.bf16.msra.mxu0 %v2109
    %3107 = vmatprep.subr.bf16.mxu0 %v2102
    %3108 = vmatpush2.bf16.msra.mxu0 %v2101
    %3109 = vmatprep.subr.bf16.mxu0 %v2094
    %3110 = vmatpush2.bf16.msra.mxu0 %v2093
    %3111 = vmatprep.subr.bf16.mxu0 %v2086
    %3112 = vmatpush2.bf16.msra.mxu0 %v2085
    %3113 = vmatprep.subr.bf16.mxu0 %v2078
    %3114 = vmatpush2.bf16.msra.mxu0 %v2077
    %3115 = vmatprep.subr.bf16.mxu0 %v2070
    %3116 = vmatpush2.bf16.msra.mxu0 %v2069
    %3117 = vmatprep.subr.bf16.mxu0 %v2062
    %3118 = vmatpush2.bf16.msra.mxu0 %v2061
    %3119 = vmatprep.subr.bf16.mxu0 %v2054
    %3120 = vmatpush2.bf16.msra.mxu0 %v2053
    %3121 = vmatprep.mubr.bf16.mxu0 %v115
    %3122 = vmatmul.mubr.bf16.gmra.mxu0 %v114
    %v3123 = vpop.f32.mrf.mxu0
    %v3124 = vadd.f32 %v3083, %v3123
    %v3125 = vpop.f32.mrf.mxu0
    %v3126 = vadd.f32 %v3085, %v3125
    %v3127 = vpop.f32.mrf.mxu0
    %v3128 = vpop.f32.mrf.mxu0
    %3129 = vdwg.mxu0
    %3130 = vmatprep.subr.bf16.mxu0 0
    %3131 = vmatpush1.bf16.msra.mxu0 0
    %3132 = vmatprep.subr.bf16.mxu0 0
    %3133 = vmatpush1.bf16.msra.mxu0 0
    %3134 = vmatprep.subr.bf16.mxu0 0
    %3135 = vmatpush1.bf16.msra.mxu0 0
    %3136 = vmatprep.subr.bf16.mxu0 0
    %3137 = vmatpush1.bf16.msra.mxu0 0
    %3138 = vmatprep.subr.bf16.mxu0 0
    %3139 = vmatpush1.bf16.msra.mxu0 0
    %3140 = vmatprep.subr.bf16.mxu0 0
    %3141 = vmatpush1.bf16.msra.mxu0 0
    %3142 = vmatprep.subr.bf16.mxu0 0
    %3143 = vmatpush1.bf16.msra.mxu0 0
    %3144 = vmatprep.subr.bf16.mxu0 %v2118
    %3145 = vmatpush1.bf16.msra.mxu0 %v2117
    %3146 = vmatprep.subr.bf16.mxu0 0
    %3147 = vmatpush2.bf16.msra.mxu0 0
    %3148 = vmatprep.subr.bf16.mxu0 0
    %3149 = vmatpush2.bf16.msra.mxu0 0
    %3150 = vmatprep.subr.bf16.mxu0 0
    %3151 = vmatpush2.bf16.msra.mxu0 0
    %3152 = vmatprep.subr.bf16.mxu0 0
    %3153 = vmatpush2.bf16.msra.mxu0 0
    %3154 = vmatprep.subr.bf16.mxu0 0
    %3155 = vmatpush2.bf16.msra.mxu0 0
    %3156 = vmatprep.subr.bf16.mxu0 0
    %3157 = vmatpush2.bf16.msra.mxu0 0
    %3158 = vmatprep.subr.bf16.mxu0 0
    %3159 = vmatpush2.bf16.msra.mxu0 0
    %3160 = vmatprep.subr.bf16.mxu0 0
    %3161 = vmatpush2.bf16.msra.mxu0 0
    %3162 = vmatprep.mubr.bf16.mxu0 0
    %3163 = vmatmul.mubr.bf16.gmra.mxu0 %v2513
    %v3164 = vpop.f32.mrf.mxu0
    %v3165 = vadd.f32 %v3124, %v3164
    %v3166 = vpop.f32.mrf.mxu0
    %v3167 = vadd.f32 %v3126, %v3166
    %v3168 = vpop.f32.mrf.mxu0
    %v3169 = vpop.f32.mrf.mxu0
    %3170 = vdwg.mxu0
    %v3171 = vmax.f32 %v2673, 0.0
    %v3172 = vmax.f32 %v2675, 0.0
    %v3173 = vmax.f32 %v2837, 0.0
    %v3174 = vmax.f32 %v2839, 0.0
    %v3175 = vmax.f32 %v3001, 0.0
    %v3176 = vmax.f32 %v3003, 0.0
    %v3177 = vmax.f32 %v3165, 0.0
    %v3178 = vmax.f32 %v3167, 0.0
    %v3179 = vpack.c.bf16 %v3171, %v3171
    %v3180 = vpack.c.bf16 %v3172, %v3172
    %v3181 = vpack.c.bf16 %v3173, %v3173
    %v3182 = vpack.c.bf16 %v3174, %v3174
    %v3183 = vpack.c.bf16 %v3175, %v3175
    %v3184 = vpack.c.bf16 %v3176, %v3176
    %v3185 = vpack.c.bf16 %v3177, %v3177
    %v3186 = vpack.c.bf16 %v3178, %v3178
    %v3187 = vld [vmem:[#allocation6] sm:$0xff]
    %v3188 = vld [vmem:[#allocation6 + $0x8] sm:$0xff]
    %v3189 = vld [vmem:[#allocation6 + $0x10] sm:$0xff]
    %v3190 = vld [vmem:[#allocation6 + $0x18] sm:$0xff]
    %v3191 = vld [vmem:[#allocation6 + $0x20] sm:$0xff]
    %v3192 = vld [vmem:[#allocation6 + $0x28] sm:$0xff]
    %v3193 = vld [vmem:[#allocation6 + $0x30] sm:$0xff]
    %v3194 = vld [vmem:[#allocation6 + $0x38] sm:$0xff]
    %v3195 = vld [vmem:[#allocation6 + $0x40] sm:$0xff]
    %v3196 = vld [vmem:[#allocation6 + $0x48] sm:$0xff]
    %v3197 = vld [vmem:[#allocation6 + $0x50] sm:$0xff]
    %v3198 = vld [vmem:[#allocation6 + $0x58] sm:$0xff]
    %v3199 = vld [vmem:[#allocation6 + $0x60] sm:$0xff]
    %v3200 = vld [vmem:[#allocation6 + $0x68] sm:$0xff]
    %v3201 = vld [vmem:[#allocation6 + $0x70] sm:$0xff]
    %v3202 = vld [vmem:[#allocation6 + $0x78] sm:$0xff]
    %v3203 = vld [vmem:[#allocation6 + $0x80] sm:$0xff]
    %v3204 = vld [vmem:[#allocation6 + $0x88] sm:$0xff]
    %v3205 = vld [vmem:[#allocation6 + $0x90] sm:$0xff]
    %v3206 = vld [vmem:[#allocation6 + $0x98] sm:$0xff]
    %v3207 = vld [vmem:[#allocation6 + $0xa0] sm:$0xff]
    %v3208 = vld [vmem:[#allocation6 + $0xa8] sm:$0xff]
    %v3209 = vld [vmem:[#allocation6 + $0xb0] sm:$0xff]
    %v3210 = vld [vmem:[#allocation6 + $0xb8] sm:$0xff]
    %v3211 = vld [vmem:[#allocation6 + $0xc0] sm:$0xff]
    %v3212 = vld [vmem:[#allocation6 + $0xc8] sm:$0xff]
    %v3213 = vld [vmem:[#allocation6 + $0xd0] sm:$0xff]
    %v3214 = vld [vmem:[#allocation6 + $0xd8] sm:$0xff]
    %v3215 = vld [vmem:[#allocation6 + $0xe0] sm:$0xff]
    %v3216 = vld [vmem:[#allocation6 + $0xe8] sm:$0xff]
    %v3217 = vld [vmem:[#allocation6 + $0xf0] sm:$0xff]
    %v3218 = vld [vmem:[#allocation6 + $0xf8] sm:$0xff]
    %v3219 = vld [vmem:[#allocation6 + $0x100] sm:$0xff]
    %v3220 = vld [vmem:[#allocation6 + $0x108] sm:$0xff]
    %v3221 = vld [vmem:[#allocation6 + $0x110] sm:$0xff]
    %v3222 = vld [vmem:[#allocation6 + $0x118] sm:$0xff]
    %v3223 = vld [vmem:[#allocation6 + $0x120] sm:$0xff]
    %v3224 = vld [vmem:[#allocation6 + $0x128] sm:$0xff]
    %v3225 = vld [vmem:[#allocation6 + $0x130] sm:$0xff]
    %v3226 = vld [vmem:[#allocation6 + $0x138] sm:$0xff]
    %v3227 = vld [vmem:[#allocation6 + $0x140] sm:$0xff]
    %v3228 = vld [vmem:[#allocation6 + $0x148] sm:$0xff]
    %v3229 = vld [vmem:[#allocation6 + $0x150] sm:$0xff]
    %v3230 = vld [vmem:[#allocation6 + $0x158] sm:$0xff]
    %v3231 = vld [vmem:[#allocation6 + $0x160] sm:$0xff]
    %v3232 = vld [vmem:[#allocation6 + $0x168] sm:$0xff]
    %v3233 = vld [vmem:[#allocation6 + $0x170] sm:$0xff]
    %v3234 = vld [vmem:[#allocation6 + $0x178] sm:$0xff]
    %v3235 = vld [vmem:[#allocation6 + $0x180] sm:$0xff]
    %v3236 = vld [vmem:[#allocation6 + $0x188] sm:$0xff]
    %v3237 = vld [vmem:[#allocation6 + $0x190] sm:$0xff]
    %v3238 = vld [vmem:[#allocation6 + $0x198] sm:$0xff]
    %v3239 = vld [vmem:[#allocation6 + $0x1a0] sm:$0xff]
    %v3240 = vld [vmem:[#allocation6 + $0x1a8] sm:$0xff]
    %v3241 = vld [vmem:[#allocation6 + $0x1b0] sm:$0xff]
    %v3242 = vld [vmem:[#allocation6 + $0x1b8] sm:$0xff]
    %v3243 = vld [vmem:[#allocation6 + $0x1c0] sm:$0xff]
    %v3244 = vld [vmem:[#allocation6 + $0x1c8] sm:$0xff]
    %v3245 = vld [vmem:[#allocation6 + $0x1d0] sm:$0xff]
    %v3246 = vld [vmem:[#allocation6 + $0x1d8] sm:$0xff]
    %v3247 = vld [vmem:[#allocation6 + $0x1e0] sm:$0xff]
    %v3248 = vld [vmem:[#allocation6 + $0x1e8] sm:$0xff]
    %v3249 = vld [vmem:[#allocation6 + $0x1f0] sm:$0xff]
    %v3250 = vld [vmem:[#allocation6 + $0x1f8] sm:$0xff]
    %v3251 = vld [vmem:[#allocation6 + $0x200] sm:$0xff]
    %v3252 = vld [vmem:[#allocation6 + $0x208] sm:$0xff]
    %v3253 = vld [vmem:[#allocation6 + $0x210] sm:$0xff]
    %v3254 = vld [vmem:[#allocation6 + $0x218] sm:$0xff]
    %v3255 = vld [vmem:[#allocation6 + $0x220] sm:$0xff]
    %v3256 = vld [vmem:[#allocation6 + $0x228] sm:$0xff]
    %v3257 = vld [vmem:[#allocation6 + $0x230] sm:$0xff]
    %v3258 = vld [vmem:[#allocation6 + $0x238] sm:$0xff]
    %v3259 = vld [vmem:[#allocation6 + $0x240] sm:$0xff]
    %v3260 = vld [vmem:[#allocation6 + $0x248] sm:$0xff]
    %v3261 = vld [vmem:[#allocation6 + $0x250] sm:$0xff]
    %v3262 = vld [vmem:[#allocation6 + $0x258] sm:$0xff]
    %v3263 = vld [vmem:[#allocation6 + $0x260] sm:$0xff]
    %v3264 = vld [vmem:[#allocation6 + $0x268] sm:$0xff]
    %v3265 = vld [vmem:[#allocation6 + $0x270] sm:$0xff]
    %v3266 = vld [vmem:[#allocation6 + $0x278] sm:$0xff]
    %v3267 = vld [vmem:[#allocation6 + $0x280] sm:$0xff]
    %v3268 = vld [vmem:[#allocation6 + $0x288] sm:$0xff]
    %v3269 = vld [vmem:[#allocation6 + $0x290] sm:$0xff]
    %v3270 = vld [vmem:[#allocation6 + $0x298] sm:$0xff]
    %v3271 = vld [vmem:[#allocation6 + $0x2a0] sm:$0xff]
    %v3272 = vld [vmem:[#allocation6 + $0x2a8] sm:$0xff]
    %v3273 = vld [vmem:[#allocation6 + $0x2b0] sm:$0xff]
    %v3274 = vld [vmem:[#allocation6 + $0x2b8] sm:$0xff]
    %v3275 = vld [vmem:[#allocation6 + $0x2c0] sm:$0xff]
    %v3276 = vld [vmem:[#allocation6 + $0x2c8] sm:$0xff]
    %v3277 = vld [vmem:[#allocation6 + $0x2d0] sm:$0xff]
    %v3278 = vld [vmem:[#allocation6 + $0x2d8] sm:$0xff]
    %v3279 = vld [vmem:[#allocation6 + $0x2e0] sm:$0xff]
    %v3280 = vld [vmem:[#allocation6 + $0x2e8] sm:$0xff]
    %v3281 = vld [vmem:[#allocation6 + $0x2f0] sm:$0xff]
    %v3282 = vld [vmem:[#allocation6 + $0x2f8] sm:$0xff]
    %v3283 = vld [vmem:[#allocation6 + $0x300] sm:$0xff]
    %v3284 = vld [vmem:[#allocation6 + $0x308] sm:$0xff]
    %v3285 = vld [vmem:[#allocation6 + $0x310] sm:$0xff]
    %v3286 = vld [vmem:[#allocation6 + $0x318] sm:$0xff]
    %v3287 = vld [vmem:[#allocation6 + $0x320] sm:$0xff]
    %v3288 = vld [vmem:[#allocation6 + $0x328] sm:$0xff]
    %v3289 = vld [vmem:[#allocation6 + $0x330] sm:$0xff]
    %v3290 = vld [vmem:[#allocation6 + $0x338] sm:$0xff]
    %v3291 = vld [vmem:[#allocation6 + $0x340] sm:$0xff]
    %v3292 = vld [vmem:[#allocation6 + $0x348] sm:$0xff]
    %v3293 = vld [vmem:[#allocation6 + $0x350] sm:$0xff]
    %v3294 = vld [vmem:[#allocation6 + $0x358] sm:$0xff]
    %v3295 = vld [vmem:[#allocation6 + $0x360] sm:$0xff]
    %v3296 = vld [vmem:[#allocation6 + $0x368] sm:$0xff]
    %v3297 = vld [vmem:[#allocation6 + $0x370] sm:$0xff]
    %v3298 = vld [vmem:[#allocation6 + $0x378] sm:$0xff]
    %v3299 = vld [vmem:[#allocation6 + $0x380] sm:$0xff]
    %v3300 = vld [vmem:[#allocation6 + $0x388] sm:$0xff]
    %v3301 = vld [vmem:[#allocation6 + $0x390] sm:$0xff]
    %v3302 = vld [vmem:[#allocation6 + $0x398] sm:$0xff]
    %v3303 = vld [vmem:[#allocation6 + $0x3a0] sm:$0xff]
    %v3304 = vld [vmem:[#allocation6 + $0x3a8] sm:$0xff]
    %v3305 = vld [vmem:[#allocation6 + $0x3b0] sm:$0xff]
    %v3306 = vld [vmem:[#allocation6 + $0x3b8] sm:$0xff]
    %v3307 = vld [vmem:[#allocation6 + $0x3c0] sm:$0xff]
    %v3308 = vld [vmem:[#allocation6 + $0x3c8] sm:$0xff]
    %v3309 = vld [vmem:[#allocation6 + $0x3d0] sm:$0xff]
    %v3310 = vld [vmem:[#allocation6 + $0x3d8] sm:$0xff]
    %v3311 = vld [vmem:[#allocation6 + $0x3e0] sm:$0xff]
    %v3312 = vld [vmem:[#allocation6 + $0x3e8] sm:$0xff]
    %v3313 = vld [vmem:[#allocation6 + $0x3f0] sm:$0xff]
    %v3314 = vld [vmem:[#allocation6 + $0x3f8] sm:$0xff]
    %v3315 = vld [vmem:[#allocation6 + $0x400] sm:$0xff]
    %v3316 = vld [vmem:[#allocation6 + $0x408] sm:$0xff]
    %v3317 = vld [vmem:[#allocation6 + $0x410] sm:$0xff]
    %v3318 = vld [vmem:[#allocation6 + $0x418] sm:$0xff]
    %v3319 = vld [vmem:[#allocation6 + $0x420] sm:$0xff]
    %v3320 = vld [vmem:[#allocation6 + $0x428] sm:$0xff]
    %v3321 = vld [vmem:[#allocation6 + $0x430] sm:$0xff]
    %v3322 = vld [vmem:[#allocation6 + $0x438] sm:$0xff]
    %v3323 = vld [vmem:[#allocation6 + $0x440] sm:$0xff]
    %v3324 = vld [vmem:[#allocation6 + $0x448] sm:$0xff]
    %v3325 = vld [vmem:[#allocation6 + $0x450] sm:$0xff]
    %v3326 = vld [vmem:[#allocation6 + $0x458] sm:$0xff]
    %v3327 = vld [vmem:[#allocation6 + $0x460] sm:$0xff]
    %v3328 = vld [vmem:[#allocation6 + $0x468] sm:$0xff]
    %v3329 = vld [vmem:[#allocation6 + $0x470] sm:$0xff]
    %v3330 = vld [vmem:[#allocation6 + $0x478] sm:$0xff]
    %v3331 = vld [vmem:[#allocation6 + $0x480] sm:$0xff]
    %v3332 = vld [vmem:[#allocation6 + $0x488] sm:$0xff]
    %v3333 = vld [vmem:[#allocation6 + $0x490] sm:$0xff]
    %v3334 = vld [vmem:[#allocation6 + $0x498] sm:$0xff]
    %v3335 = vld [vmem:[#allocation6 + $0x4a0] sm:$0xff]
    %v3336 = vld [vmem:[#allocation6 + $0x4a8] sm:$0xff]
    %v3337 = vld [vmem:[#allocation6 + $0x4b0] sm:$0xff]
    %v3338 = vld [vmem:[#allocation6 + $0x4b8] sm:$0xff]
    %v3339 = vld [vmem:[#allocation6 + $0x4c0] sm:$0xff]
    %v3340 = vld [vmem:[#allocation6 + $0x4c8] sm:$0xff]
    %v3341 = vld [vmem:[#allocation6 + $0x4d0] sm:$0xff]
    %v3342 = vld [vmem:[#allocation6 + $0x4d8] sm:$0xff]
    %v3343 = vld [vmem:[#allocation6 + $0x4e0] sm:$0xff]
    %v3344 = vld [vmem:[#allocation6 + $0x4e8] sm:$0xff]
    %v3345 = vld [vmem:[#allocation6 + $0x4f0] sm:$0xff]
    %v3346 = vld [vmem:[#allocation6 + $0x4f8] sm:$0xff]
    %v3347 = vld [vmem:[#allocation6 + $0x500] sm:$0xff]
    %v3348 = vld [vmem:[#allocation6 + $0x508] sm:$0xff]
    %v3349 = vld [vmem:[#allocation6 + $0x510] sm:$0xff]
    %v3350 = vld [vmem:[#allocation6 + $0x518] sm:$0xff]
    %v3351 = vld [vmem:[#allocation6 + $0x520] sm:$0xff]
    %v3352 = vld [vmem:[#allocation6 + $0x528] sm:$0xff]
    %v3353 = vld [vmem:[#allocation6 + $0x530] sm:$0xff]
    %v3354 = vld [vmem:[#allocation6 + $0x538] sm:$0xff]
    %v3355 = vld [vmem:[#allocation6 + $0x540] sm:$0xff]
    %v3356 = vld [vmem:[#allocation6 + $0x548] sm:$0xff]
    %v3357 = vld [vmem:[#allocation6 + $0x550] sm:$0xff]
    %v3358 = vld [vmem:[#allocation6 + $0x558] sm:$0xff]
    %v3359 = vld [vmem:[#allocation6 + $0x560] sm:$0xff]
    %v3360 = vld [vmem:[#allocation6 + $0x568] sm:$0xff]
    %v3361 = vld [vmem:[#allocation6 + $0x570] sm:$0xff]
    %v3362 = vld [vmem:[#allocation6 + $0x578] sm:$0xff]
    %v3363 = vld [vmem:[#allocation6 + $0x580] sm:$0xff]
    %v3364 = vld [vmem:[#allocation6 + $0x588] sm:$0xff]
    %v3365 = vld [vmem:[#allocation6 + $0x590] sm:$0xff]
    %v3366 = vld [vmem:[#allocation6 + $0x598] sm:$0xff]
    %v3367 = vld [vmem:[#allocation6 + $0x5a0] sm:$0xff]
    %v3368 = vld [vmem:[#allocation6 + $0x5a8] sm:$0xff]
    %v3369 = vld [vmem:[#allocation6 + $0x5b0] sm:$0xff]
    %v3370 = vld [vmem:[#allocation6 + $0x5b8] sm:$0xff]
    %v3371 = vld [vmem:[#allocation6 + $0x5c0] sm:$0xff]
    %v3372 = vld [vmem:[#allocation6 + $0x5c8] sm:$0xff]
    %v3373 = vld [vmem:[#allocation6 + $0x5d0] sm:$0xff]
    %v3374 = vld [vmem:[#allocation6 + $0x5d8] sm:$0xff]
    %v3375 = vld [vmem:[#allocation6 + $0x5e0] sm:$0xff]
    %v3376 = vld [vmem:[#allocation6 + $0x5e8] sm:$0xff]
    %v3377 = vld [vmem:[#allocation6 + $0x5f0] sm:$0xff]
    %v3378 = vld [vmem:[#allocation6 + $0x5f8] sm:$0xff]
    %v3379 = vld [vmem:[#allocation6 + $0x600] sm:$0xff]
    %v3380 = vld [vmem:[#allocation6 + $0x608] sm:$0xff]
    %v3381 = vld [vmem:[#allocation6 + $0x610] sm:$0xff]
    %v3382 = vld [vmem:[#allocation6 + $0x618] sm:$0xff]
    %v3383 = vld [vmem:[#allocation6 + $0x620] sm:$0xff]
    %v3384 = vld [vmem:[#allocation6 + $0x628] sm:$0xff]
    %v3385 = vld [vmem:[#allocation6 + $0x630] sm:$0xff]
    %v3386 = vld [vmem:[#allocation6 + $0x638] sm:$0xff]
    %v3387 = vld [vmem:[#allocation6 + $0x640] sm:$0xff]
    %v3388 = vld [vmem:[#allocation6 + $0x648] sm:$0xff]
    %v3389 = vld [vmem:[#allocation6 + $0x650] sm:$0xff]
    %v3390 = vld [vmem:[#allocation6 + $0x658] sm:$0xff]
    %v3391 = vld [vmem:[#allocation6 + $0x660] sm:$0xff]
    %v3392 = vld [vmem:[#allocation6 + $0x668] sm:$0xff]
    %v3393 = vld [vmem:[#allocation6 + $0x670] sm:$0xff]
    %v3394 = vld [vmem:[#allocation6 + $0x678] sm:$0xff]
    %v3395 = vld [vmem:[#allocation6 + $0x680] sm:$0xff]
    %v3396 = vld [vmem:[#allocation6 + $0x688] sm:$0xff]
    %v3397 = vld [vmem:[#allocation6 + $0x690] sm:$0xff]
    %v3398 = vld [vmem:[#allocation6 + $0x698] sm:$0xff]
    %v3399 = vld [vmem:[#allocation6 + $0x6a0] sm:$0xff]
    %v3400 = vld [vmem:[#allocation6 + $0x6a8] sm:$0xff]
    %v3401 = vld [vmem:[#allocation6 + $0x6b0] sm:$0xff]
    %v3402 = vld [vmem:[#allocation6 + $0x6b8] sm:$0xff]
    %v3403 = vld [vmem:[#allocation6 + $0x6c0] sm:$0xff]
    %v3404 = vld [vmem:[#allocation6 + $0x6c8] sm:$0xff]
    %v3405 = vld [vmem:[#allocation6 + $0x6d0] sm:$0xff]
    %v3406 = vld [vmem:[#allocation6 + $0x6d8] sm:$0xff]
    %v3407 = vld [vmem:[#allocation6 + $0x6e0] sm:$0xff]
    %v3408 = vld [vmem:[#allocation6 + $0x6e8] sm:$0xff]
    %v3409 = vld [vmem:[#allocation6 + $0x6f0] sm:$0xff]
    %v3410 = vld [vmem:[#allocation6 + $0x6f8] sm:$0xff]
    %v3411 = vld [vmem:[#allocation6 + $0x700] sm:$0xff]
    %v3412 = vld [vmem:[#allocation6 + $0x708] sm:$0xff]
    %v3413 = vld [vmem:[#allocation6 + $0x710] sm:$0xff]
    %v3414 = vld [vmem:[#allocation6 + $0x718] sm:$0xff]
    %v3415 = vld [vmem:[#allocation6 + $0x720] sm:$0xff]
    %v3416 = vld [vmem:[#allocation6 + $0x728] sm:$0xff]
    %v3417 = vld [vmem:[#allocation6 + $0x730] sm:$0xff]
    %v3418 = vld [vmem:[#allocation6 + $0x738] sm:$0xff]
    %v3419 = vld [vmem:[#allocation6 + $0x740] sm:$0xff]
    %v3420 = vld [vmem:[#allocation6 + $0x748] sm:$0xff]
    %v3421 = vld [vmem:[#allocation6 + $0x750] sm:$0xff]
    %v3422 = vld [vmem:[#allocation6 + $0x758] sm:$0xff]
    %v3423 = vld [vmem:[#allocation6 + $0x760] sm:$0xff]
    %v3424 = vld [vmem:[#allocation6 + $0x768] sm:$0xff]
    %v3425 = vld [vmem:[#allocation6 + $0x770] sm:$0xff]
    %v3426 = vld [vmem:[#allocation6 + $0x778] sm:$0xff]
    %v3427 = vld [vmem:[#allocation6 + $0x780] sm:$0xff]
    %v3428 = vld [vmem:[#allocation6 + $0x788] sm:$0xff]
    %v3429 = vld [vmem:[#allocation6 + $0x790] sm:$0xff]
    %v3430 = vld [vmem:[#allocation6 + $0x798] sm:$0xff]
    %v3431 = vld [vmem:[#allocation6 + $0x7a0] sm:$0xff]
    %v3432 = vld [vmem:[#allocation6 + $0x7a8] sm:$0xff]
    %v3433 = vld [vmem:[#allocation6 + $0x7b0] sm:$0xff]
    %v3434 = vld [vmem:[#allocation6 + $0x7b8] sm:$0xff]
    %v3435 = vld [vmem:[#allocation6 + $0x7c0] sm:$0xff]
    %v3436 = vld [vmem:[#allocation6 + $0x7c8] sm:$0xff]
    %v3437 = vld [vmem:[#allocation6 + $0x7d0] sm:$0xff]
    %v3438 = vld [vmem:[#allocation6 + $0x7d8] sm:$0xff]
    %v3439 = vld [vmem:[#allocation6 + $0x7e0] sm:$0xff]
    %v3440 = vld [vmem:[#allocation6 + $0x7e8] sm:$0xff]
    %v3441 = vld [vmem:[#allocation6 + $0x7f0] sm:$0xff]
    %v3442 = vld [vmem:[#allocation6 + $0x7f8] sm:$0xff]
    %v3443 = vld [vmem:[#allocation7] sm:$0xf]
    %v3445 = vlaneseq
    %v3446 = vshrl.u32 %v3445, 7
    %v3447 = vsub.s32 0, %v3446
    %v3448 = vrot.slane %v3443, %v3447
    %v3449 = vlaneseq
    %v3450 = vshrl.u32 %v3449, 7
    %v3451 = vsub.s32 1, %v3450
    %v3452 = vrot.slane %v3443, %v3451
    %v3453 = vlaneseq
    %v3454 = vshrl.u32 %v3453, 7
    %v3455 = vsub.s32 2, %v3454
    %v3456 = vrot.slane %v3443, %v3455
    %v3457 = vlaneseq
    %v3458 = vshrl.u32 %v3457, 7
    %v3459 = vsub.s32 3, %v3458
    %v3460 = vrot.slane %v3443, %v3459
    %v3721 = vunpack.c.l.b16 %v3187
    %v3722 = vunpack.c.h.b16 %v3187
    %v3723 = vunpack.c.l.b16 %v3188
    %v3724 = vunpack.c.h.b16 %v3188
    %v3725 = vunpack.c.l.b16 %v3189
    %v3726 = vunpack.c.h.b16 %v3189
    %v3727 = vunpack.c.l.b16 %v3190
    %v3728 = vunpack.c.h.b16 %v3190
    %v3729 = vunpack.c.l.b16 %v3191
    %v3730 = vunpack.c.h.b16 %v3191
    %v3731 = vunpack.c.l.b16 %v3192
    %v3732 = vunpack.c.h.b16 %v3192
    %v3733 = vunpack.c.l.b16 %v3193
    %v3734 = vunpack.c.h.b16 %v3193
    %v3735 = vunpack.c.l.b16 %v3194
    %v3736 = vunpack.c.h.b16 %v3194
    %v3737 = vunpack.c.l.b16 %v3195
    %v3738 = vunpack.c.h.b16 %v3195
    %v3739 = vunpack.c.l.b16 %v3196
    %v3740 = vunpack.c.h.b16 %v3196
    %v3741 = vunpack.c.l.b16 %v3197
    %v3742 = vunpack.c.h.b16 %v3197
    %v3743 = vunpack.c.l.b16 %v3198
    %v3744 = vunpack.c.h.b16 %v3198
    %v3745 = vunpack.c.l.b16 %v3199
    %v3746 = vunpack.c.h.b16 %v3199
    %v3747 = vunpack.c.l.b16 %v3200
    %v3748 = vunpack.c.h.b16 %v3200
    %v3749 = vunpack.c.l.b16 %v3201
    %v3750 = vunpack.c.h.b16 %v3201
    %v3751 = vunpack.c.l.b16 %v3202
    %v3752 = vunpack.c.h.b16 %v3202
    %v3753 = vunpack.c.l.b16 %v3203
    %v3754 = vunpack.c.h.b16 %v3203
    %v3755 = vunpack.c.l.b16 %v3204
    %v3756 = vunpack.c.h.b16 %v3204
    %v3757 = vunpack.c.l.b16 %v3205
    %v3758 = vunpack.c.h.b16 %v3205
    %v3759 = vunpack.c.l.b16 %v3206
    %v3760 = vunpack.c.h.b16 %v3206
    %v3761 = vunpack.c.l.b16 %v3207
    %v3762 = vunpack.c.h.b16 %v3207
    %v3763 = vunpack.c.l.b16 %v3208
    %v3764 = vunpack.c.h.b16 %v3208
    %v3765 = vunpack.c.l.b16 %v3209
    %v3766 = vunpack.c.h.b16 %v3209
    %v3767 = vunpack.c.l.b16 %v3210
    %v3768 = vunpack.c.h.b16 %v3210
    %v3769 = vunpack.c.l.b16 %v3211
    %v3770 = vunpack.c.h.b16 %v3211
    %v3771 = vunpack.c.l.b16 %v3212
    %v3772 = vunpack.c.h.b16 %v3212
    %v3773 = vunpack.c.l.b16 %v3213
    %v3774 = vunpack.c.h.b16 %v3213
    %v3775 = vunpack.c.l.b16 %v3214
    %v3776 = vunpack.c.h.b16 %v3214
    %v3777 = vunpack.c.l.b16 %v3215
    %v3778 = vunpack.c.h.b16 %v3215
    %v3779 = vunpack.c.l.b16 %v3216
    %v3780 = vunpack.c.h.b16 %v3216
    %v3781 = vunpack.c.l.b16 %v3217
    %v3782 = vunpack.c.h.b16 %v3217
    %v3783 = vunpack.c.l.b16 %v3218
    %v3784 = vunpack.c.h.b16 %v3218
    %v3785 = vunpack.c.l.b16 %v3219
    %v3786 = vunpack.c.h.b16 %v3219
    %v3787 = vunpack.c.l.b16 %v3220
    %v3788 = vunpack.c.h.b16 %v3220
    %v3789 = vunpack.c.l.b16 %v3221
    %v3790 = vunpack.c.h.b16 %v3221
    %v3791 = vunpack.c.l.b16 %v3222
    %v3792 = vunpack.c.h.b16 %v3222
    %v3793 = vunpack.c.l.b16 %v3223
    %v3794 = vunpack.c.h.b16 %v3223
    %v3795 = vunpack.c.l.b16 %v3224
    %v3796 = vunpack.c.h.b16 %v3224
    %v3797 = vunpack.c.l.b16 %v3225
    %v3798 = vunpack.c.h.b16 %v3225
    %v3799 = vunpack.c.l.b16 %v3226
    %v3800 = vunpack.c.h.b16 %v3226
    %v3801 = vunpack.c.l.b16 %v3227
    %v3802 = vunpack.c.h.b16 %v3227
    %v3803 = vunpack.c.l.b16 %v3228
    %v3804 = vunpack.c.h.b16 %v3228
    %v3805 = vunpack.c.l.b16 %v3229
    %v3806 = vunpack.c.h.b16 %v3229
    %v3807 = vunpack.c.l.b16 %v3230
    %v3808 = vunpack.c.h.b16 %v3230
    %v3809 = vunpack.c.l.b16 %v3231
    %v3810 = vunpack.c.h.b16 %v3231
    %v3811 = vunpack.c.l.b16 %v3232
    %v3812 = vunpack.c.h.b16 %v3232
    %v3813 = vunpack.c.l.b16 %v3233
    %v3814 = vunpack.c.h.b16 %v3233
    %v3815 = vunpack.c.l.b16 %v3234
    %v3816 = vunpack.c.h.b16 %v3234
    %v3817 = vunpack.c.l.b16 %v3235
    %v3818 = vunpack.c.h.b16 %v3235
    %v3819 = vunpack.c.l.b16 %v3236
    %v3820 = vunpack.c.h.b16 %v3236
    %v3821 = vunpack.c.l.b16 %v3237
    %v3822 = vunpack.c.h.b16 %v3237
    %v3823 = vunpack.c.l.b16 %v3238
    %v3824 = vunpack.c.h.b16 %v3238
    %v3825 = vunpack.c.l.b16 %v3239
    %v3826 = vunpack.c.h.b16 %v3239
    %v3827 = vunpack.c.l.b16 %v3240
    %v3828 = vunpack.c.h.b16 %v3240
    %v3829 = vunpack.c.l.b16 %v3241
    %v3830 = vunpack.c.h.b16 %v3241
    %v3831 = vunpack.c.l.b16 %v3242
    %v3832 = vunpack.c.h.b16 %v3242
    %v3833 = vunpack.c.l.b16 %v3243
    %v3834 = vunpack.c.h.b16 %v3243
    %v3835 = vunpack.c.l.b16 %v3244
    %v3836 = vunpack.c.h.b16 %v3244
    %v3837 = vunpack.c.l.b16 %v3245
    %v3838 = vunpack.c.h.b16 %v3245
    %v3839 = vunpack.c.l.b16 %v3246
    %v3840 = vunpack.c.h.b16 %v3246
    %v3841 = vunpack.c.l.b16 %v3247
    %v3842 = vunpack.c.h.b16 %v3247
    %v3843 = vunpack.c.l.b16 %v3248
    %v3844 = vunpack.c.h.b16 %v3248
    %v3845 = vunpack.c.l.b16 %v3249
    %v3846 = vunpack.c.h.b16 %v3249
    %v3847 = vunpack.c.l.b16 %v3250
    %v3848 = vunpack.c.h.b16 %v3250
    %v3849 = vunpack.c.l.b16 %v3251
    %v3850 = vunpack.c.h.b16 %v3251
    %v3851 = vunpack.c.l.b16 %v3252
    %v3852 = vunpack.c.h.b16 %v3252
    %v3853 = vunpack.c.l.b16 %v3253
    %v3854 = vunpack.c.h.b16 %v3253
    %v3855 = vunpack.c.l.b16 %v3254
    %v3856 = vunpack.c.h.b16 %v3254
    %v3857 = vunpack.c.l.b16 %v3255
    %v3858 = vunpack.c.h.b16 %v3255
    %v3859 = vunpack.c.l.b16 %v3256
    %v3860 = vunpack.c.h.b16 %v3256
    %v3861 = vunpack.c.l.b16 %v3257
    %v3862 = vunpack.c.h.b16 %v3257
    %v3863 = vunpack.c.l.b16 %v3258
    %v3864 = vunpack.c.h.b16 %v3258
    %v3865 = vunpack.c.l.b16 %v3259
    %v3866 = vunpack.c.h.b16 %v3259
    %v3867 = vunpack.c.l.b16 %v3260
    %v3868 = vunpack.c.h.b16 %v3260
    %v3869 = vunpack.c.l.b16 %v3261
    %v3870 = vunpack.c.h.b16 %v3261
    %v3871 = vunpack.c.l.b16 %v3262
    %v3872 = vunpack.c.h.b16 %v3262
    %v3873 = vunpack.c.l.b16 %v3263
    %v3874 = vunpack.c.h.b16 %v3263
    %v3875 = vunpack.c.l.b16 %v3264
    %v3876 = vunpack.c.h.b16 %v3264
    %v3877 = vunpack.c.l.b16 %v3265
    %v3878 = vunpack.c.h.b16 %v3265
    %v3879 = vunpack.c.l.b16 %v3266
    %v3880 = vunpack.c.h.b16 %v3266
    %v3881 = vunpack.c.l.b16 %v3267
    %v3882 = vunpack.c.h.b16 %v3267
    %v3883 = vunpack.c.l.b16 %v3268
    %v3884 = vunpack.c.h.b16 %v3268
    %v3885 = vunpack.c.l.b16 %v3269
    %v3886 = vunpack.c.h.b16 %v3269
    %v3887 = vunpack.c.l.b16 %v3270
    %v3888 = vunpack.c.h.b16 %v3270
    %v3889 = vunpack.c.l.b16 %v3271
    %v3890 = vunpack.c.h.b16 %v3271
    %v3891 = vunpack.c.l.b16 %v3272
    %v3892 = vunpack.c.h.b16 %v3272
    %v3893 = vunpack.c.l.b16 %v3273
    %v3894 = vunpack.c.h.b16 %v3273
    %v3895 = vunpack.c.l.b16 %v3274
    %v3896 = vunpack.c.h.b16 %v3274
    %v3897 = vunpack.c.l.b16 %v3275
    %v3898 = vunpack.c.h.b16 %v3275
    %v3899 = vunpack.c.l.b16 %v3276
    %v3900 = vunpack.c.h.b16 %v3276
    %v3901 = vunpack.c.l.b16 %v3277
    %v3902 = vunpack.c.h.b16 %v3277
    %v3903 = vunpack.c.l.b16 %v3278
    %v3904 = vunpack.c.h.b16 %v3278
    %v3905 = vunpack.c.l.b16 %v3279
    %v3906 = vunpack.c.h.b16 %v3279
    %v3907 = vunpack.c.l.b16 %v3280
    %v3908 = vunpack.c.h.b16 %v3280
    %v3909 = vunpack.c.l.b16 %v3281
    %v3910 = vunpack.c.h.b16 %v3281
    %v3911 = vunpack.c.l.b16 %v3282
    %v3912 = vunpack.c.h.b16 %v3282
    %v3913 = vunpack.c.l.b16 %v3283
    %v3914 = vunpack.c.h.b16 %v3283
    %v3915 = vunpack.c.l.b16 %v3284
    %v3916 = vunpack.c.h.b16 %v3284
    %v3917 = vunpack.c.l.b16 %v3285
    %v3918 = vunpack.c.h.b16 %v3285
    %v3919 = vunpack.c.l.b16 %v3286
    %v3920 = vunpack.c.h.b16 %v3286
    %v3921 = vunpack.c.l.b16 %v3287
    %v3922 = vunpack.c.h.b16 %v3287
    %v3923 = vunpack.c.l.b16 %v3288
    %v3924 = vunpack.c.h.b16 %v3288
    %v3925 = vunpack.c.l.b16 %v3289
    %v3926 = vunpack.c.h.b16 %v3289
    %v3927 = vunpack.c.l.b16 %v3290
    %v3928 = vunpack.c.h.b16 %v3290
    %v3929 = vunpack.c.l.b16 %v3291
    %v3930 = vunpack.c.h.b16 %v3291
    %v3931 = vunpack.c.l.b16 %v3292
    %v3932 = vunpack.c.h.b16 %v3292
    %v3933 = vunpack.c.l.b16 %v3293
    %v3934 = vunpack.c.h.b16 %v3293
    %v3935 = vunpack.c.l.b16 %v3294
    %v3936 = vunpack.c.h.b16 %v3294
    %v3937 = vunpack.c.l.b16 %v3295
    %v3938 = vunpack.c.h.b16 %v3295
    %v3939 = vunpack.c.l.b16 %v3296
    %v3940 = vunpack.c.h.b16 %v3296
    %v3941 = vunpack.c.l.b16 %v3297
    %v3942 = vunpack.c.h.b16 %v3297
    %v3943 = vunpack.c.l.b16 %v3298
    %v3944 = vunpack.c.h.b16 %v3298
    %v3945 = vunpack.c.l.b16 %v3299
    %v3946 = vunpack.c.h.b16 %v3299
    %v3947 = vunpack.c.l.b16 %v3300
    %v3948 = vunpack.c.h.b16 %v3300
    %v3949 = vunpack.c.l.b16 %v3301
    %v3950 = vunpack.c.h.b16 %v3301
    %v3951 = vunpack.c.l.b16 %v3302
    %v3952 = vunpack.c.h.b16 %v3302
    %v3953 = vunpack.c.l.b16 %v3303
    %v3954 = vunpack.c.h.b16 %v3303
    %v3955 = vunpack.c.l.b16 %v3304
    %v3956 = vunpack.c.h.b16 %v3304
    %v3957 = vunpack.c.l.b16 %v3305
    %v3958 = vunpack.c.h.b16 %v3305
    %v3959 = vunpack.c.l.b16 %v3306
    %v3960 = vunpack.c.h.b16 %v3306
    %v3961 = vunpack.c.l.b16 %v3307
    %v3962 = vunpack.c.h.b16 %v3307
    %v3963 = vunpack.c.l.b16 %v3308
    %v3964 = vunpack.c.h.b16 %v3308
    %v3965 = vunpack.c.l.b16 %v3309
    %v3966 = vunpack.c.h.b16 %v3309
    %v3967 = vunpack.c.l.b16 %v3310
    %v3968 = vunpack.c.h.b16 %v3310
    %v3969 = vunpack.c.l.b16 %v3311
    %v3970 = vunpack.c.h.b16 %v3311
    %v3971 = vunpack.c.l.b16 %v3312
    %v3972 = vunpack.c.h.b16 %v3312
    %v3973 = vunpack.c.l.b16 %v3313
    %v3974 = vunpack.c.h.b16 %v3313
    %v3975 = vunpack.c.l.b16 %v3314
    %v3976 = vunpack.c.h.b16 %v3314
    %v3977 = vunpack.c.l.b16 %v3315
    %v3978 = vunpack.c.h.b16 %v3315
    %v3979 = vunpack.c.l.b16 %v3316
    %v3980 = vunpack.c.h.b16 %v3316
    %v3981 = vunpack.c.l.b16 %v3317
    %v3982 = vunpack.c.h.b16 %v3317
    %v3983 = vunpack.c.l.b16 %v3318
    %v3984 = vunpack.c.h.b16 %v3318
    %v3985 = vunpack.c.l.b16 %v3319
    %v3986 = vunpack.c.h.b16 %v3319
    %v3987 = vunpack.c.l.b16 %v3320
    %v3988 = vunpack.c.h.b16 %v3320
    %v3989 = vunpack.c.l.b16 %v3321
    %v3990 = vunpack.c.h.b16 %v3321
    %v3991 = vunpack.c.l.b16 %v3322
    %v3992 = vunpack.c.h.b16 %v3322
    %v3993 = vunpack.c.l.b16 %v3323
    %v3994 = vunpack.c.h.b16 %v3323
    %v3995 = vunpack.c.l.b16 %v3324
    %v3996 = vunpack.c.h.b16 %v3324
    %v3997 = vunpack.c.l.b16 %v3325
    %v3998 = vunpack.c.h.b16 %v3325
    %v3999 = vunpack.c.l.b16 %v3326
    %v4000 = vunpack.c.h.b16 %v3326
    %v4001 = vunpack.c.l.b16 %v3327
    %v4002 = vunpack.c.h.b16 %v3327
    %v4003 = vunpack.c.l.b16 %v3328
    %v4004 = vunpack.c.h.b16 %v3328
    %v4005 = vunpack.c.l.b16 %v3329
    %v4006 = vunpack.c.h.b16 %v3329
    %v4007 = vunpack.c.l.b16 %v3330
    %v4008 = vunpack.c.h.b16 %v3330
    %v4009 = vunpack.c.l.b16 %v3331
    %v4010 = vunpack.c.h.b16 %v3331
    %v4011 = vunpack.c.l.b16 %v3332
    %v4012 = vunpack.c.h.b16 %v3332
    %v4013 = vunpack.c.l.b16 %v3333
    %v4014 = vunpack.c.h.b16 %v3333
    %v4015 = vunpack.c.l.b16 %v3334
    %v4016 = vunpack.c.h.b16 %v3334
    %v4017 = vunpack.c.l.b16 %v3335
    %v4018 = vunpack.c.h.b16 %v3335
    %v4019 = vunpack.c.l.b16 %v3336
    %v4020 = vunpack.c.h.b16 %v3336
    %v4021 = vunpack.c.l.b16 %v3337
    %v4022 = vunpack.c.h.b16 %v3337
    %v4023 = vunpack.c.l.b16 %v3338
    %v4024 = vunpack.c.h.b16 %v3338
    %v4025 = vunpack.c.l.b16 %v3339
    %v4026 = vunpack.c.h.b16 %v3339
    %v4027 = vunpack.c.l.b16 %v3340
    %v4028 = vunpack.c.h.b16 %v3340
    %v4029 = vunpack.c.l.b16 %v3341
    %v4030 = vunpack.c.h.b16 %v3341
    %v4031 = vunpack.c.l.b16 %v3342
    %v4032 = vunpack.c.h.b16 %v3342
    %v4033 = vunpack.c.l.b16 %v3343
    %v4034 = vunpack.c.h.b16 %v3343
    %v4035 = vunpack.c.l.b16 %v3344
    %v4036 = vunpack.c.h.b16 %v3344
    %v4037 = vunpack.c.l.b16 %v3345
    %v4038 = vunpack.c.h.b16 %v3345
    %v4039 = vunpack.c.l.b16 %v3346
    %v4040 = vunpack.c.h.b16 %v3346
    %v4041 = vunpack.c.l.b16 %v3347
    %v4042 = vunpack.c.h.b16 %v3347
    %v4043 = vunpack.c.l.b16 %v3348
    %v4044 = vunpack.c.h.b16 %v3348
    %v4045 = vunpack.c.l.b16 %v3349
    %v4046 = vunpack.c.h.b16 %v3349
    %v4047 = vunpack.c.l.b16 %v3350
    %v4048 = vunpack.c.h.b16 %v3350
    %v4049 = vunpack.c.l.b16 %v3351
    %v4050 = vunpack.c.h.b16 %v3351
    %v4051 = vunpack.c.l.b16 %v3352
    %v4052 = vunpack.c.h.b16 %v3352
    %v4053 = vunpack.c.l.b16 %v3353
    %v4054 = vunpack.c.h.b16 %v3353
    %v4055 = vunpack.c.l.b16 %v3354
    %v4056 = vunpack.c.h.b16 %v3354
    %v4057 = vunpack.c.l.b16 %v3355
    %v4058 = vunpack.c.h.b16 %v3355
    %v4059 = vunpack.c.l.b16 %v3356
    %v4060 = vunpack.c.h.b16 %v3356
    %v4061 = vunpack.c.l.b16 %v3357
    %v4062 = vunpack.c.h.b16 %v3357
    %v4063 = vunpack.c.l.b16 %v3358
    %v4064 = vunpack.c.h.b16 %v3358
    %v4065 = vunpack.c.l.b16 %v3359
    %v4066 = vunpack.c.h.b16 %v3359
    %v4067 = vunpack.c.l.b16 %v3360
    %v4068 = vunpack.c.h.b16 %v3360
    %v4069 = vunpack.c.l.b16 %v3361
    %v4070 = vunpack.c.h.b16 %v3361
    %v4071 = vunpack.c.l.b16 %v3362
    %v4072 = vunpack.c.h.b16 %v3362
    %v4073 = vunpack.c.l.b16 %v3363
    %v4074 = vunpack.c.h.b16 %v3363
    %v4075 = vunpack.c.l.b16 %v3364
    %v4076 = vunpack.c.h.b16 %v3364
    %v4077 = vunpack.c.l.b16 %v3365
    %v4078 = vunpack.c.h.b16 %v3365
    %v4079 = vunpack.c.l.b16 %v3366
    %v4080 = vunpack.c.h.b16 %v3366
    %v4081 = vunpack.c.l.b16 %v3367
    %v4082 = vunpack.c.h.b16 %v3367
    %v4083 = vunpack.c.l.b16 %v3368
    %v4084 = vunpack.c.h.b16 %v3368
    %v4085 = vunpack.c.l.b16 %v3369
    %v4086 = vunpack.c.h.b16 %v3369
    %v4087 = vunpack.c.l.b16 %v3370
    %v4088 = vunpack.c.h.b16 %v3370
    %v4089 = vunpack.c.l.b16 %v3371
    %v4090 = vunpack.c.h.b16 %v3371
    %v4091 = vunpack.c.l.b16 %v3372
    %v4092 = vunpack.c.h.b16 %v3372
    %v4093 = vunpack.c.l.b16 %v3373
    %v4094 = vunpack.c.h.b16 %v3373
    %v4095 = vunpack.c.l.b16 %v3374
    %v4096 = vunpack.c.h.b16 %v3374
    %v4097 = vunpack.c.l.b16 %v3375
    %v4098 = vunpack.c.h.b16 %v3375
    %v4099 = vunpack.c.l.b16 %v3376
    %v4100 = vunpack.c.h.b16 %v3376
    %v4101 = vunpack.c.l.b16 %v3377
    %v4102 = vunpack.c.h.b16 %v3377
    %v4103 = vunpack.c.l.b16 %v3378
    %v4104 = vunpack.c.h.b16 %v3378
    %v4105 = vunpack.c.l.b16 %v3379
    %v4106 = vunpack.c.h.b16 %v3379
    %v4107 = vunpack.c.l.b16 %v3380
    %v4108 = vunpack.c.h.b16 %v3380
    %v4109 = vunpack.c.l.b16 %v3381
    %v4110 = vunpack.c.h.b16 %v3381
    %v4111 = vunpack.c.l.b16 %v3382
    %v4112 = vunpack.c.h.b16 %v3382
    %v4113 = vunpack.c.l.b16 %v3383
    %v4114 = vunpack.c.h.b16 %v3383
    %v4115 = vunpack.c.l.b16 %v3384
    %v4116 = vunpack.c.h.b16 %v3384
    %v4117 = vunpack.c.l.b16 %v3385
    %v4118 = vunpack.c.h.b16 %v3385
    %v4119 = vunpack.c.l.b16 %v3386
    %v4120 = vunpack.c.h.b16 %v3386
    %v4121 = vunpack.c.l.b16 %v3387
    %v4122 = vunpack.c.h.b16 %v3387
    %v4123 = vunpack.c.l.b16 %v3388
    %v4124 = vunpack.c.h.b16 %v3388
    %v4125 = vunpack.c.l.b16 %v3389
    %v4126 = vunpack.c.h.b16 %v3389
    %v4127 = vunpack.c.l.b16 %v3390
    %v4128 = vunpack.c.h.b16 %v3390
    %v4129 = vunpack.c.l.b16 %v3391
    %v4130 = vunpack.c.h.b16 %v3391
    %v4131 = vunpack.c.l.b16 %v3392
    %v4132 = vunpack.c.h.b16 %v3392
    %v4133 = vunpack.c.l.b16 %v3393
    %v4134 = vunpack.c.h.b16 %v3393
    %v4135 = vunpack.c.l.b16 %v3394
    %v4136 = vunpack.c.h.b16 %v3394
    %v4137 = vunpack.c.l.b16 %v3395
    %v4138 = vunpack.c.h.b16 %v3395
    %v4139 = vunpack.c.l.b16 %v3396
    %v4140 = vunpack.c.h.b16 %v3396
    %v4141 = vunpack.c.l.b16 %v3397
    %v4142 = vunpack.c.h.b16 %v3397
    %v4143 = vunpack.c.l.b16 %v3398
    %v4144 = vunpack.c.h.b16 %v3398
    %v4145 = vunpack.c.l.b16 %v3399
    %v4146 = vunpack.c.h.b16 %v3399
    %v4147 = vunpack.c.l.b16 %v3400
    %v4148 = vunpack.c.h.b16 %v3400
    %v4149 = vunpack.c.l.b16 %v3401
    %v4150 = vunpack.c.h.b16 %v3401
    %v4151 = vunpack.c.l.b16 %v3402
    %v4152 = vunpack.c.h.b16 %v3402
    %v4153 = vunpack.c.l.b16 %v3403
    %v4154 = vunpack.c.h.b16 %v3403
    %v4155 = vunpack.c.l.b16 %v3404
    %v4156 = vunpack.c.h.b16 %v3404
    %v4157 = vunpack.c.l.b16 %v3405
    %v4158 = vunpack.c.h.b16 %v3405
    %v4159 = vunpack.c.l.b16 %v3406
    %v4160 = vunpack.c.h.b16 %v3406
    %v4161 = vunpack.c.l.b16 %v3407
    %v4162 = vunpack.c.h.b16 %v3407
    %v4163 = vunpack.c.l.b16 %v3408
    %v4164 = vunpack.c.h.b16 %v3408
    %v4165 = vunpack.c.l.b16 %v3409
    %v4166 = vunpack.c.h.b16 %v3409
    %v4167 = vunpack.c.l.b16 %v3410
    %v4168 = vunpack.c.h.b16 %v3410
    %v4169 = vunpack.c.l.b16 %v3411
    %v4170 = vunpack.c.h.b16 %v3411
    %v4171 = vunpack.c.l.b16 %v3412
    %v4172 = vunpack.c.h.b16 %v3412
    %v4173 = vunpack.c.l.b16 %v3413
    %v4174 = vunpack.c.h.b16 %v3413
    %v4175 = vunpack.c.l.b16 %v3414
    %v4176 = vunpack.c.h.b16 %v3414
    %v4177 = vunpack.c.l.b16 %v3415
    %v4178 = vunpack.c.h.b16 %v3415
    %v4179 = vunpack.c.l.b16 %v3416
    %v4180 = vunpack.c.h.b16 %v3416
    %v4181 = vunpack.c.l.b16 %v3417
    %v4182 = vunpack.c.h.b16 %v3417
    %v4183 = vunpack.c.l.b16 %v3418
    %v4184 = vunpack.c.h.b16 %v3418
    %v4185 = vunpack.c.l.b16 %v3419
    %v4186 = vunpack.c.h.b16 %v3419
    %v4187 = vunpack.c.l.b16 %v3420
    %v4188 = vunpack.c.h.b16 %v3420
    %v4189 = vunpack.c.l.b16 %v3421
    %v4190 = vunpack.c.h.b16 %v3421
    %v4191 = vunpack.c.l.b16 %v3422
    %v4192 = vunpack.c.h.b16 %v3422
    %v4193 = vunpack.c.l.b16 %v3423
    %v4194 = vunpack.c.h.b16 %v3423
    %v4195 = vunpack.c.l.b16 %v3424
    %v4196 = vunpack.c.h.b16 %v3424
    %v4197 = vunpack.c.l.b16 %v3425
    %v4198 = vunpack.c.h.b16 %v3425
    %v4199 = vunpack.c.l.b16 %v3426
    %v4200 = vunpack.c.h.b16 %v3426
    %v4201 = vunpack.c.l.b16 %v3427
    %v4202 = vunpack.c.h.b16 %v3427
    %v4203 = vunpack.c.l.b16 %v3428
    %v4204 = vunpack.c.h.b16 %v3428
    %v4205 = vunpack.c.l.b16 %v3429
    %v4206 = vunpack.c.h.b16 %v3429
    %v4207 = vunpack.c.l.b16 %v3430
    %v4208 = vunpack.c.h.b16 %v3430
    %v4209 = vunpack.c.l.b16 %v3431
    %v4210 = vunpack.c.h.b16 %v3431
    %v4211 = vunpack.c.l.b16 %v3432
    %v4212 = vunpack.c.h.b16 %v3432
    %v4213 = vunpack.c.l.b16 %v3433
    %v4214 = vunpack.c.h.b16 %v3433
    %v4215 = vunpack.c.l.b16 %v3434
    %v4216 = vunpack.c.h.b16 %v3434
    %v4217 = vunpack.c.l.b16 %v3435
    %v4218 = vunpack.c.h.b16 %v3435
    %v4219 = vunpack.c.l.b16 %v3436
    %v4220 = vunpack.c.h.b16 %v3436
    %v4221 = vunpack.c.l.b16 %v3437
    %v4222 = vunpack.c.h.b16 %v3437
    %v4223 = vunpack.c.l.b16 %v3438
    %v4224 = vunpack.c.h.b16 %v3438
    %v4225 = vunpack.c.l.b16 %v3439
    %v4226 = vunpack.c.h.b16 %v3439
    %v4227 = vunpack.c.l.b16 %v3440
    %v4228 = vunpack.c.h.b16 %v3440
    %v4229 = vunpack.c.l.b16 %v3441
    %v4230 = vunpack.c.h.b16 %v3441
    %v4231 = vunpack.c.l.b16 %v3442
    %v4232 = vunpack.c.h.b16 %v3442
    %v4233 = vpack.c.b16 %v3725, %v3721
    %v4234 = vpack.c.b16 %v3726, %v3722
    %v4235 = vpack.c.b16 %v3727, %v3723
    %v4236 = vpack.c.b16 %v3728, %v3724
    %v4237 = vpack.c.b16 %v3733, %v3729
    %v4238 = vpack.c.b16 %v3734, %v3730
    %v4239 = vpack.c.b16 %v3735, %v3731
    %v4240 = vpack.c.b16 %v3736, %v3732
    %v4241 = vpack.c.b16 %v3741, %v3737
    %v4242 = vpack.c.b16 %v3742, %v3738
    %v4243 = vpack.c.b16 %v3743, %v3739
    %v4244 = vpack.c.b16 %v3744, %v3740
    %v4245 = vpack.c.b16 %v3749, %v3745
    %v4246 = vpack.c.b16 %v3750, %v3746
    %v4247 = vpack.c.b16 %v3751, %v3747
    %v4248 = vpack.c.b16 %v3752, %v3748
    %v4249 = vpack.c.b16 %v3757, %v3753
    %v4250 = vpack.c.b16 %v3758, %v3754
    %v4251 = vpack.c.b16 %v3759, %v3755
    %v4252 = vpack.c.b16 %v3760, %v3756
    %v4253 = vpack.c.b16 %v3765, %v3761
    %v4254 = vpack.c.b16 %v3766, %v3762
    %v4255 = vpack.c.b16 %v3767, %v3763
    %v4256 = vpack.c.b16 %v3768, %v3764
    %v4257 = vpack.c.b16 %v3773, %v3769
    %v4258 = vpack.c.b16 %v3774, %v3770
    %v4259 = vpack.c.b16 %v3775, %v3771
    %v4260 = vpack.c.b16 %v3776, %v3772
    %v4261 = vpack.c.b16 %v3781, %v3777
    %v4262 = vpack.c.b16 %v3782, %v3778
    %v4263 = vpack.c.b16 %v3783, %v3779
    %v4264 = vpack.c.b16 %v3784, %v3780
    %v4265 = vpack.c.b16 %v3789, %v3785
    %v4266 = vpack.c.b16 %v3790, %v3786
    %v4267 = vpack.c.b16 %v3791, %v3787
    %v4268 = vpack.c.b16 %v3792, %v3788
    %v4269 = vpack.c.b16 %v3797, %v3793
    %v4270 = vpack.c.b16 %v3798, %v3794
    %v4271 = vpack.c.b16 %v3799, %v3795
    %v4272 = vpack.c.b16 %v3800, %v3796
    %v4273 = vpack.c.b16 %v3805, %v3801
    %v4274 = vpack.c.b16 %v3806, %v3802
    %v4275 = vpack.c.b16 %v3807, %v3803
    %v4276 = vpack.c.b16 %v3808, %v3804
    %v4277 = vpack.c.b16 %v3813, %v3809
    %v4278 = vpack.c.b16 %v3814, %v3810
    %v4279 = vpack.c.b16 %v3815, %v3811
    %v4280 = vpack.c.b16 %v3816, %v3812
    %v4281 = vpack.c.b16 %v3821, %v3817
    %v4282 = vpack.c.b16 %v3822, %v3818
    %v4283 = vpack.c.b16 %v3823, %v3819
    %v4284 = vpack.c.b16 %v3824, %v3820
    %v4285 = vpack.c.b16 %v3829, %v3825
    %v4286 = vpack.c.b16 %v3830, %v3826
    %v4287 = vpack.c.b16 %v3831, %v3827
    %v4288 = vpack.c.b16 %v3832, %v3828
    %v4289 = vpack.c.b16 %v3837, %v3833
    %v4290 = vpack.c.b16 %v3838, %v3834
    %v4291 = vpack.c.b16 %v3839, %v3835
    %v4292 = vpack.c.b16 %v3840, %v3836
    %v4293 = vpack.c.b16 %v3845, %v3841
    %v4294 = vpack.c.b16 %v3846, %v3842
    %v4295 = vpack.c.b16 %v3847, %v3843
    %v4296 = vpack.c.b16 %v3848, %v3844
    %v4297 = vpack.c.b16 %v3853, %v3849
    %v4298 = vpack.c.b16 %v3854, %v3850
    %v4299 = vpack.c.b16 %v3855, %v3851
    %v4300 = vpack.c.b16 %v3856, %v3852
    %v4301 = vpack.c.b16 %v3861, %v3857
    %v4302 = vpack.c.b16 %v3862, %v3858
    %v4303 = vpack.c.b16 %v3863, %v3859
    %v4304 = vpack.c.b16 %v3864, %v3860
    %v4305 = vpack.c.b16 %v3869, %v3865
    %v4306 = vpack.c.b16 %v3870, %v3866
    %v4307 = vpack.c.b16 %v3871, %v3867
    %v4308 = vpack.c.b16 %v3872, %v3868
    %v4309 = vpack.c.b16 %v3877, %v3873
    %v4310 = vpack.c.b16 %v3878, %v3874
    %v4311 = vpack.c.b16 %v3879, %v3875
    %v4312 = vpack.c.b16 %v3880, %v3876
    %v4313 = vpack.c.b16 %v3885, %v3881
    %v4314 = vpack.c.b16 %v3886, %v3882
    %v4315 = vpack.c.b16 %v3887, %v3883
    %v4316 = vpack.c.b16 %v3888, %v3884
    %v4317 = vpack.c.b16 %v3893, %v3889
    %v4318 = vpack.c.b16 %v3894, %v3890
    %v4319 = vpack.c.b16 %v3895, %v3891
    %v4320 = vpack.c.b16 %v3896, %v3892
    %v4321 = vpack.c.b16 %v3901, %v3897
    %v4322 = vpack.c.b16 %v3902, %v3898
    %v4323 = vpack.c.b16 %v3903, %v3899
    %v4324 = vpack.c.b16 %v3904, %v3900
    %v4325 = vpack.c.b16 %v3909, %v3905
    %v4326 = vpack.c.b16 %v3910, %v3906
    %v4327 = vpack.c.b16 %v3911, %v3907
    %v4328 = vpack.c.b16 %v3912, %v3908
    %v4329 = vpack.c.b16 %v3917, %v3913
    %v4330 = vpack.c.b16 %v3918, %v3914
    %v4331 = vpack.c.b16 %v3919, %v3915
    %v4332 = vpack.c.b16 %v3920, %v3916
    %v4333 = vpack.c.b16 %v3925, %v3921
    %v4334 = vpack.c.b16 %v3926, %v3922
    %v4335 = vpack.c.b16 %v3927, %v3923
    %v4336 = vpack.c.b16 %v3928, %v3924
    %v4337 = vpack.c.b16 %v3933, %v3929
    %v4338 = vpack.c.b16 %v3934, %v3930
    %v4339 = vpack.c.b16 %v3935, %v3931
    %v4340 = vpack.c.b16 %v3936, %v3932
    %v4341 = vpack.c.b16 %v3941, %v3937
    %v4342 = vpack.c.b16 %v3942, %v3938
    %v4343 = vpack.c.b16 %v3943, %v3939
    %v4344 = vpack.c.b16 %v3944, %v3940
    %v4345 = vpack.c.b16 %v3949, %v3945
    %v4346 = vpack.c.b16 %v3950, %v3946
    %v4347 = vpack.c.b16 %v3951, %v3947
    %v4348 = vpack.c.b16 %v3952, %v3948
    %v4349 = vpack.c.b16 %v3957, %v3953
    %v4350 = vpack.c.b16 %v3958, %v3954
    %v4351 = vpack.c.b16 %v3959, %v3955
    %v4352 = vpack.c.b16 %v3960, %v3956
    %v4353 = vpack.c.b16 %v3965, %v3961
    %v4354 = vpack.c.b16 %v3966, %v3962
    %v4355 = vpack.c.b16 %v3967, %v3963
    %v4356 = vpack.c.b16 %v3968, %v3964
    %v4357 = vpack.c.b16 %v3973, %v3969
    %v4358 = vpack.c.b16 %v3974, %v3970
    %v4359 = vpack.c.b16 %v3975, %v3971
    %v4360 = vpack.c.b16 %v3976, %v3972
    %v4361 = vpack.c.b16 %v3981, %v3977
    %v4362 = vpack.c.b16 %v3982, %v3978
    %v4363 = vpack.c.b16 %v3983, %v3979
    %v4364 = vpack.c.b16 %v3984, %v3980
    %v4365 = vpack.c.b16 %v3989, %v3985
    %v4366 = vpack.c.b16 %v3990, %v3986
    %v4367 = vpack.c.b16 %v3991, %v3987
    %v4368 = vpack.c.b16 %v3992, %v3988
    %v4369 = vpack.c.b16 %v3997, %v3993
    %v4370 = vpack.c.b16 %v3998, %v3994
    %v4371 = vpack.c.b16 %v3999, %v3995
    %v4372 = vpack.c.b16 %v4000, %v3996
    %v4373 = vpack.c.b16 %v4005, %v4001
    %v4374 = vpack.c.b16 %v4006, %v4002
    %v4375 = vpack.c.b16 %v4007, %v4003
    %v4376 = vpack.c.b16 %v4008, %v4004
    %v4377 = vpack.c.b16 %v4013, %v4009
    %v4378 = vpack.c.b16 %v4014, %v4010
    %v4379 = vpack.c.b16 %v4015, %v4011
    %v4380 = vpack.c.b16 %v4016, %v4012
    %v4381 = vpack.c.b16 %v4021, %v4017
    %v4382 = vpack.c.b16 %v4022, %v4018
    %v4383 = vpack.c.b16 %v4023, %v4019
    %v4384 = vpack.c.b16 %v4024, %v4020
    %v4385 = vpack.c.b16 %v4029, %v4025
    %v4386 = vpack.c.b16 %v4030, %v4026
    %v4387 = vpack.c.b16 %v4031, %v4027
    %v4388 = vpack.c.b16 %v4032, %v4028
    %v4389 = vpack.c.b16 %v4037, %v4033
    %v4390 = vpack.c.b16 %v4038, %v4034
    %v4391 = vpack.c.b16 %v4039, %v4035
    %v4392 = vpack.c.b16 %v4040, %v4036
    %v4393 = vpack.c.b16 %v4045, %v4041
    %v4394 = vpack.c.b16 %v4046, %v4042
    %v4395 = vpack.c.b16 %v4047, %v4043
    %v4396 = vpack.c.b16 %v4048, %v4044
    %v4397 = vpack.c.b16 %v4053, %v4049
    %v4398 = vpack.c.b16 %v4054, %v4050
    %v4399 = vpack.c.b16 %v4055, %v4051
    %v4400 = vpack.c.b16 %v4056, %v4052
    %v4401 = vpack.c.b16 %v4061, %v4057
    %v4402 = vpack.c.b16 %v4062, %v4058
    %v4403 = vpack.c.b16 %v4063, %v4059
    %v4404 = vpack.c.b16 %v4064, %v4060
    %v4405 = vpack.c.b16 %v4069, %v4065
    %v4406 = vpack.c.b16 %v4070, %v4066
    %v4407 = vpack.c.b16 %v4071, %v4067
    %v4408 = vpack.c.b16 %v4072, %v4068
    %v4409 = vpack.c.b16 %v4077, %v4073
    %v4410 = vpack.c.b16 %v4078, %v4074
    %v4411 = vpack.c.b16 %v4079, %v4075
    %v4412 = vpack.c.b16 %v4080, %v4076
    %v4413 = vpack.c.b16 %v4085, %v4081
    %v4414 = vpack.c.b16 %v4086, %v4082
    %v4415 = vpack.c.b16 %v4087, %v4083
    %v4416 = vpack.c.b16 %v4088, %v4084
    %v4417 = vpack.c.b16 %v4093, %v4089
    %v4418 = vpack.c.b16 %v4094, %v4090
    %v4419 = vpack.c.b16 %v4095, %v4091
    %v4420 = vpack.c.b16 %v4096, %v4092
    %v4421 = vpack.c.b16 %v4101, %v4097
    %v4422 = vpack.c.b16 %v4102, %v4098
    %v4423 = vpack.c.b16 %v4103, %v4099
    %v4424 = vpack.c.b16 %v4104, %v4100
    %v4425 = vpack.c.b16 %v4109, %v4105
    %v4426 = vpack.c.b16 %v4110, %v4106
    %v4427 = vpack.c.b16 %v4111, %v4107
    %v4428 = vpack.c.b16 %v4112, %v4108
    %v4429 = vpack.c.b16 %v4117, %v4113
    %v4430 = vpack.c.b16 %v4118, %v4114
    %v4431 = vpack.c.b16 %v4119, %v4115
    %v4432 = vpack.c.b16 %v4120, %v4116
    %v4433 = vpack.c.b16 %v4125, %v4121
    %v4434 = vpack.c.b16 %v4126, %v4122
    %v4435 = vpack.c.b16 %v4127, %v4123
    %v4436 = vpack.c.b16 %v4128, %v4124
    %v4437 = vpack.c.b16 %v4133, %v4129
    %v4438 = vpack.c.b16 %v4134, %v4130
    %v4439 = vpack.c.b16 %v4135, %v4131
    %v4440 = vpack.c.b16 %v4136, %v4132
    %v4441 = vpack.c.b16 %v4141, %v4137
    %v4442 = vpack.c.b16 %v4142, %v4138
    %v4443 = vpack.c.b16 %v4143, %v4139
    %v4444 = vpack.c.b16 %v4144, %v4140
    %v4445 = vpack.c.b16 %v4149, %v4145
    %v4446 = vpack.c.b16 %v4150, %v4146
    %v4447 = vpack.c.b16 %v4151, %v4147
    %v4448 = vpack.c.b16 %v4152, %v4148
    %v4449 = vpack.c.b16 %v4157, %v4153
    %v4450 = vpack.c.b16 %v4158, %v4154
    %v4451 = vpack.c.b16 %v4159, %v4155
    %v4452 = vpack.c.b16 %v4160, %v4156
    %v4453 = vpack.c.b16 %v4165, %v4161
    %v4454 = vpack.c.b16 %v4166, %v4162
    %v4455 = vpack.c.b16 %v4167, %v4163
    %v4456 = vpack.c.b16 %v4168, %v4164
    %v4457 = vpack.c.b16 %v4173, %v4169
    %v4458 = vpack.c.b16 %v4174, %v4170
    %v4459 = vpack.c.b16 %v4175, %v4171
    %v4460 = vpack.c.b16 %v4176, %v4172
    %v4461 = vpack.c.b16 %v4181, %v4177
    %v4462 = vpack.c.b16 %v4182, %v4178
    %v4463 = vpack.c.b16 %v4183, %v4179
    %v4464 = vpack.c.b16 %v4184, %v4180
    %v4465 = vpack.c.b16 %v4189, %v4185
    %v4466 = vpack.c.b16 %v4190, %v4186
    %v4467 = vpack.c.b16 %v4191, %v4187
    %v4468 = vpack.c.b16 %v4192, %v4188
    %v4469 = vpack.c.b16 %v4197, %v4193
    %v4470 = vpack.c.b16 %v4198, %v4194
    %v4471 = vpack.c.b16 %v4199, %v4195
    %v4472 = vpack.c.b16 %v4200, %v4196
    %v4473 = vpack.c.b16 %v4205, %v4201
    %v4474 = vpack.c.b16 %v4206, %v4202
    %v4475 = vpack.c.b16 %v4207, %v4203
    %v4476 = vpack.c.b16 %v4208, %v4204
    %v4477 = vpack.c.b16 %v4213, %v4209
    %v4478 = vpack.c.b16 %v4214, %v4210
    %v4479 = vpack.c.b16 %v4215, %v4211
    %v4480 = vpack.c.b16 %v4216, %v4212
    %v4481 = vpack.c.b16 %v4221, %v4217
    %v4482 = vpack.c.b16 %v4222, %v4218
    %v4483 = vpack.c.b16 %v4223, %v4219
    %v4484 = vpack.c.b16 %v4224, %v4220
    %v4485 = vpack.c.b16 %v4229, %v4225
    %v4486 = vpack.c.b16 %v4230, %v4226
    %v4487 = vpack.c.b16 %v4231, %v4227
    %v4488 = vpack.c.b16 %v4232, %v4228
    %4745 = vmatprep.subr.bf16.mxu0 %v4262
    %4746 = vmatpush1.bf16.msra.mxu0 %v4261
    %4747 = vmatprep.subr.bf16.mxu0 %v4258
    %4748 = vmatpush1.bf16.msra.mxu0 %v4257
    %4749 = vmatprep.subr.bf16.mxu0 %v4254
    %4750 = vmatpush1.bf16.msra.mxu0 %v4253
    %4751 = vmatprep.subr.bf16.mxu0 %v4250
    %4752 = vmatpush1.bf16.msra.mxu0 %v4249
    %4753 = vmatprep.subr.bf16.mxu0 %v4246
    %4754 = vmatpush1.bf16.msra.mxu0 %v4245
    %4755 = vmatprep.subr.bf16.mxu0 %v4242
    %4756 = vmatpush1.bf16.msra.mxu0 %v4241
    %4757 = vmatprep.subr.bf16.mxu0 %v4238
    %4758 = vmatpush1.bf16.msra.mxu0 %v4237
    %4759 = vmatprep.subr.bf16.mxu0 %v4234
    %4760 = vmatpush1.bf16.msra.mxu0 %v4233
    %4761 = vmatprep.subr.bf16.mxu0 %v4294
    %4762 = vmatpush2.bf16.msra.mxu0 %v4293
    %4763 = vmatprep.subr.bf16.mxu0 %v4290
    %4764 = vmatpush2.bf16.msra.mxu0 %v4289
    %4765 = vmatprep.subr.bf16.mxu0 %v4286
    %4766 = vmatpush2.bf16.msra.mxu0 %v4285
    %4767 = vmatprep.subr.bf16.mxu0 %v4282
    %4768 = vmatpush2.bf16.msra.mxu0 %v4281
    %4769 = vmatprep.subr.bf16.mxu0 %v4278
    %4770 = vmatpush2.bf16.msra.mxu0 %v4277
    %4771 = vmatprep.subr.bf16.mxu0 %v4274
    %4772 = vmatpush2.bf16.msra.mxu0 %v4273
    %4773 = vmatprep.subr.bf16.mxu0 %v4270
    %4774 = vmatpush2.bf16.msra.mxu0 %v4269
    %4775 = vmatprep.subr.bf16.mxu0 %v4266
    %4776 = vmatpush2.bf16.msra.mxu0 %v4265
    %4777 = vmatprep.mubr.bf16.mxu0 %v3180
    %4778 = vmatmul.mubr.bf16.gmra.mxu0 %v3179
    %v4779 = vpop.f32.mrf.mxu0
    %v4780 = vadd.f32 %v3448, %v4779
    %v4781 = vpop.f32.mrf.mxu0
    %v4782 = vadd.f32 %v3452, %v4781
    %v4783 = vpop.f32.mrf.mxu0
    %v4784 = vpop.f32.mrf.mxu0
    %4785 = vdwg.mxu0
    %4786 = vmatprep.subr.bf16.mxu0 %v4326
    %4787 = vmatpush1.bf16.msra.mxu0 %v4325
    %4788 = vmatprep.subr.bf16.mxu0 %v4322
    %4789 = vmatpush1.bf16.msra.mxu0 %v4321
    %4790 = vmatprep.subr.bf16.mxu0 %v4318
    %4791 = vmatpush1.bf16.msra.mxu0 %v4317
    %4792 = vmatprep.subr.bf16.mxu0 %v4314
    %4793 = vmatpush1.bf16.msra.mxu0 %v4313
    %4794 = vmatprep.subr.bf16.mxu0 %v4310
    %4795 = vmatpush1.bf16.msra.mxu0 %v4309
    %4796 = vmatprep.subr.bf16.mxu0 %v4306
    %4797 = vmatpush1.bf16.msra.mxu0 %v4305
    %4798 = vmatprep.subr.bf16.mxu0 %v4302
    %4799 = vmatpush1.bf16.msra.mxu0 %v4301
    %4800 = vmatprep.subr.bf16.mxu0 %v4298
    %4801 = vmatpush1.bf16.msra.mxu0 %v4297
    %4802 = vmatprep.subr.bf16.mxu0 %v4358
    %4803 = vmatpush2.bf16.msra.mxu0 %v4357
    %4804 = vmatprep.subr.bf16.mxu0 %v4354
    %4805 = vmatpush2.bf16.msra.mxu0 %v4353
    %4806 = vmatprep.subr.bf16.mxu0 %v4350
    %4807 = vmatpush2.bf16.msra.mxu0 %v4349
    %4808 = vmatprep.subr.bf16.mxu0 %v4346
    %4809 = vmatpush2.bf16.msra.mxu0 %v4345
    %4810 = vmatprep.subr.bf16.mxu0 %v4342
    %4811 = vmatpush2.bf16.msra.mxu0 %v4341
    %4812 = vmatprep.subr.bf16.mxu0 %v4338
    %4813 = vmatpush2.bf16.msra.mxu0 %v4337
    %4814 = vmatprep.subr.bf16.mxu0 %v4334
    %4815 = vmatpush2.bf16.msra.mxu0 %v4333
    %4816 = vmatprep.subr.bf16.mxu0 %v4330
    %4817 = vmatpush2.bf16.msra.mxu0 %v4329
    %4818 = vmatprep.mubr.bf16.mxu0 %v3182
    %4819 = vmatmul.mubr.bf16.gmra.mxu0 %v3181
    %v4820 = vpop.f32.mrf.mxu0
    %v4821 = vadd.f32 %v4780, %v4820
    %v4822 = vpop.f32.mrf.mxu0
    %v4823 = vadd.f32 %v4782, %v4822
    %v4824 = vpop.f32.mrf.mxu0
    %v4825 = vpop.f32.mrf.mxu0
    %4826 = vdwg.mxu0
    %4827 = vmatprep.subr.bf16.mxu0 %v4390
    %4828 = vmatpush1.bf16.msra.mxu0 %v4389
    %4829 = vmatprep.subr.bf16.mxu0 %v4386
    %4830 = vmatpush1.bf16.msra.mxu0 %v4385
    %4831 = vmatprep.subr.bf16.mxu0 %v4382
    %4832 = vmatpush1.bf16.msra.mxu0 %v4381
    %4833 = vmatprep.subr.bf16.mxu0 %v4378
    %4834 = vmatpush1.bf16.msra.mxu0 %v4377
    %4835 = vmatprep.subr.bf16.mxu0 %v4374
    %4836 = vmatpush1.bf16.msra.mxu0 %v4373
    %4837 = vmatprep.subr.bf16.mxu0 %v4370
    %4838 = vmatpush1.bf16.msra.mxu0 %v4369
    %4839 = vmatprep.subr.bf16.mxu0 %v4366
    %4840 = vmatpush1.bf16.msra.mxu0 %v4365
    %4841 = vmatprep.subr.bf16.mxu0 %v4362
    %4842 = vmatpush1.bf16.msra.mxu0 %v4361
    %4843 = vmatprep.subr.bf16.mxu0 %v4422
    %4844 = vmatpush2.bf16.msra.mxu0 %v4421
    %4845 = vmatprep.subr.bf16.mxu0 %v4418
    %4846 = vmatpush2.bf16.msra.mxu0 %v4417
    %4847 = vmatprep.subr.bf16.mxu0 %v4414
    %4848 = vmatpush2.bf16.msra.mxu0 %v4413
    %4849 = vmatprep.subr.bf16.mxu0 %v4410
    %4850 = vmatpush2.bf16.msra.mxu0 %v4409
    %4851 = vmatprep.subr.bf16.mxu0 %v4406
    %4852 = vmatpush2.bf16.msra.mxu0 %v4405
    %4853 = vmatprep.subr.bf16.mxu0 %v4402
    %4854 = vmatpush2.bf16.msra.mxu0 %v4401
    %4855 = vmatprep.subr.bf16.mxu0 %v4398
    %4856 = vmatpush2.bf16.msra.mxu0 %v4397
    %4857 = vmatprep.subr.bf16.mxu0 %v4394
    %4858 = vmatpush2.bf16.msra.mxu0 %v4393
    %4859 = vmatprep.mubr.bf16.mxu0 %v3184
    %4860 = vmatmul.mubr.bf16.gmra.mxu0 %v3183
    %v4861 = vpop.f32.mrf.mxu0
    %v4862 = vadd.f32 %v4821, %v4861
    %v4863 = vpop.f32.mrf.mxu0
    %v4864 = vadd.f32 %v4823, %v4863
    %v4865 = vpop.f32.mrf.mxu0
    %v4866 = vpop.f32.mrf.mxu0
    %4867 = vdwg.mxu0
    %4868 = vmatprep.subr.bf16.mxu0 %v4454
    %4869 = vmatpush1.bf16.msra.mxu0 %v4453
    %4870 = vmatprep.subr.bf16.mxu0 %v4450
    %4871 = vmatpush1.bf16.msra.mxu0 %v4449
    %4872 = vmatprep.subr.bf16.mxu0 %v4446
    %4873 = vmatpush1.bf16.msra.mxu0 %v4445
    %4874 = vmatprep.subr.bf16.mxu0 %v4442
    %4875 = vmatpush1.bf16.msra.mxu0 %v4441
    %4876 = vmatprep.subr.bf16.mxu0 %v4438
    %4877 = vmatpush1.bf16.msra.mxu0 %v4437
    %4878 = vmatprep.subr.bf16.mxu0 %v4434
    %4879 = vmatpush1.bf16.msra.mxu0 %v4433
    %4880 = vmatprep.subr.bf16.mxu0 %v4430
    %4881 = vmatpush1.bf16.msra.mxu0 %v4429
    %4882 = vmatprep.subr.bf16.mxu0 %v4426
    %4883 = vmatpush1.bf16.msra.mxu0 %v4425
    %4884 = vmatprep.subr.bf16.mxu0 %v4486
    %4885 = vmatpush2.bf16.msra.mxu0 %v4485
    %4886 = vmatprep.subr.bf16.mxu0 %v4482
    %4887 = vmatpush2.bf16.msra.mxu0 %v4481
    %4888 = vmatprep.subr.bf16.mxu0 %v4478
    %4889 = vmatpush2.bf16.msra.mxu0 %v4477
    %4890 = vmatprep.subr.bf16.mxu0 %v4474
    %4891 = vmatpush2.bf16.msra.mxu0 %v4473
    %4892 = vmatprep.subr.bf16.mxu0 %v4470
    %4893 = vmatpush2.bf16.msra.mxu0 %v4469
    %4894 = vmatprep.subr.bf16.mxu0 %v4466
    %4895 = vmatpush2.bf16.msra.mxu0 %v4465
    %4896 = vmatprep.subr.bf16.mxu0 %v4462
    %4897 = vmatpush2.bf16.msra.mxu0 %v4461
    %4898 = vmatprep.subr.bf16.mxu0 %v4458
    %4899 = vmatpush2.bf16.msra.mxu0 %v4457
    %4900 = vmatprep.mubr.bf16.mxu0 %v3186
    %4901 = vmatmul.mubr.bf16.gmra.mxu0 %v3185
    %v4902 = vpop.f32.mrf.mxu0
    %v4903 = vadd.f32 %v4862, %v4902
    %v4904 = vpop.f32.mrf.mxu0
    %v4905 = vadd.f32 %v4864, %v4904
    %v4906 = vpop.f32.mrf.mxu0
    %v4907 = vpop.f32.mrf.mxu0
    %4908 = vdwg.mxu0
    %4909 = vmatprep.subr.bf16.mxu0 %v4264
    %4910 = vmatpush1.bf16.msra.mxu0 %v4263
    %4911 = vmatprep.subr.bf16.mxu0 %v4260
    %4912 = vmatpush1.bf16.msra.mxu0 %v4259
    %4913 = vmatprep.subr.bf16.mxu0 %v4256
    %4914 = vmatpush1.bf16.msra.mxu0 %v4255
    %4915 = vmatprep.subr.bf16.mxu0 %v4252
    %4916 = vmatpush1.bf16.msra.mxu0 %v4251
    %4917 = vmatprep.subr.bf16.mxu0 %v4248
    %4918 = vmatpush1.bf16.msra.mxu0 %v4247
    %4919 = vmatprep.subr.bf16.mxu0 %v4244
    %4920 = vmatpush1.bf16.msra.mxu0 %v4243
    %4921 = vmatprep.subr.bf16.mxu0 %v4240
    %4922 = vmatpush1.bf16.msra.mxu0 %v4239
    %4923 = vmatprep.subr.bf16.mxu0 %v4236
    %4924 = vmatpush1.bf16.msra.mxu0 %v4235
    %4925 = vmatprep.subr.bf16.mxu0 %v4296
    %4926 = vmatpush2.bf16.msra.mxu0 %v4295
    %4927 = vmatprep.subr.bf16.mxu0 %v4292
    %4928 = vmatpush2.bf16.msra.mxu0 %v4291
    %4929 = vmatprep.subr.bf16.mxu0 %v4288
    %4930 = vmatpush2.bf16.msra.mxu0 %v4287
    %4931 = vmatprep.subr.bf16.mxu0 %v4284
    %4932 = vmatpush2.bf16.msra.mxu0 %v4283
    %4933 = vmatprep.subr.bf16.mxu0 %v4280
    %4934 = vmatpush2.bf16.msra.mxu0 %v4279
    %4935 = vmatprep.subr.bf16.mxu0 %v4276
    %4936 = vmatpush2.bf16.msra.mxu0 %v4275
    %4937 = vmatprep.subr.bf16.mxu0 %v4272
    %4938 = vmatpush2.bf16.msra.mxu0 %v4271
    %4939 = vmatprep.subr.bf16.mxu0 %v4268
    %4940 = vmatpush2.bf16.msra.mxu0 %v4267
    %4941 = vmatprep.mubr.bf16.mxu0 %v3180
    %4942 = vmatmul.mubr.bf16.gmra.mxu0 %v3179
    %v4943 = vpop.f32.mrf.mxu0
    %v4944 = vadd.f32 %v3456, %v4943
    %v4945 = vpop.f32.mrf.mxu0
    %v4946 = vadd.f32 %v3460, %v4945
    %v4947 = vpop.f32.mrf.mxu0
    %v4948 = vpop.f32.mrf.mxu0
    %4949 = vdwg.mxu0
    %4950 = vmatprep.subr.bf16.mxu0 %v4328
    %4951 = vmatpush1.bf16.msra.mxu0 %v4327
    %4952 = vmatprep.subr.bf16.mxu0 %v4324
    %4953 = vmatpush1.bf16.msra.mxu0 %v4323
    %4954 = vmatprep.subr.bf16.mxu0 %v4320
    %4955 = vmatpush1.bf16.msra.mxu0 %v4319
    %4956 = vmatprep.subr.bf16.mxu0 %v4316
    %4957 = vmatpush1.bf16.msra.mxu0 %v4315
    %4958 = vmatprep.subr.bf16.mxu0 %v4312
    %4959 = vmatpush1.bf16.msra.mxu0 %v4311
    %4960 = vmatprep.subr.bf16.mxu0 %v4308
    %4961 = vmatpush1.bf16.msra.mxu0 %v4307
    %4962 = vmatprep.subr.bf16.mxu0 %v4304
    %4963 = vmatpush1.bf16.msra.mxu0 %v4303
    %4964 = vmatprep.subr.bf16.mxu0 %v4300
    %4965 = vmatpush1.bf16.msra.mxu0 %v4299
    %4966 = vmatprep.subr.bf16.mxu0 %v4360
    %4967 = vmatpush2.bf16.msra.mxu0 %v4359
    %4968 = vmatprep.subr.bf16.mxu0 %v4356
    %4969 = vmatpush2.bf16.msra.mxu0 %v4355
    %4970 = vmatprep.subr.bf16.mxu0 %v4352
    %4971 = vmatpush2.bf16.msra.mxu0 %v4351
    %4972 = vmatprep.subr.bf16.mxu0 %v4348
    %4973 = vmatpush2.bf16.msra.mxu0 %v4347
    %4974 = vmatprep.subr.bf16.mxu0 %v4344
    %4975 = vmatpush2.bf16.msra.mxu0 %v4343
    %4976 = vmatprep.subr.bf16.mxu0 %v4340
    %4977 = vmatpush2.bf16.msra.mxu0 %v4339
    %4978 = vmatprep.subr.bf16.mxu0 %v4336
    %4979 = vmatpush2.bf16.msra.mxu0 %v4335
    %4980 = vmatprep.subr.bf16.mxu0 %v4332
    %4981 = vmatpush2.bf16.msra.mxu0 %v4331
    %4982 = vmatprep.mubr.bf16.mxu0 %v3182
    %4983 = vmatmul.mubr.bf16.gmra.mxu0 %v3181
    %v4984 = vpop.f32.mrf.mxu0
    %v4985 = vadd.f32 %v4944, %v4984
    %v4986 = vpop.f32.mrf.mxu0
    %v4987 = vadd.f32 %v4946, %v4986
    %v4988 = vpop.f32.mrf.mxu0
    %v4989 = vpop.f32.mrf.mxu0
    %4990 = vdwg.mxu0
    %4991 = vmatprep.subr.bf16.mxu0 %v4392
    %4992 = vmatpush1.bf16.msra.mxu0 %v4391
    %4993 = vmatprep.subr.bf16.mxu0 %v4388
    %4994 = vmatpush1.bf16.msra.mxu0 %v4387
    %4995 = vmatprep.subr.bf16.mxu0 %v4384
    %4996 = vmatpush1.bf16.msra.mxu0 %v4383
    %4997 = vmatprep.subr.bf16.mxu0 %v4380
    %4998 = vmatpush1.bf16.msra.mxu0 %v4379
    %4999 = vmatprep.subr.bf16.mxu0 %v4376
    %5000 = vmatpush1.bf16.msra.mxu0 %v4375
    %5001 = vmatprep.subr.bf16.mxu0 %v4372
    %5002 = vmatpush1.bf16.msra.mxu0 %v4371
    %5003 = vmatprep.subr.bf16.mxu0 %v4368
    %5004 = vmatpush1.bf16.msra.mxu0 %v4367
    %5005 = vmatprep.subr.bf16.mxu0 %v4364
    %5006 = vmatpush1.bf16.msra.mxu0 %v4363
    %5007 = vmatprep.subr.bf16.mxu0 %v4424
    %5008 = vmatpush2.bf16.msra.mxu0 %v4423
    %5009 = vmatprep.subr.bf16.mxu0 %v4420
    %5010 = vmatpush2.bf16.msra.mxu0 %v4419
    %5011 = vmatprep.subr.bf16.mxu0 %v4416
    %5012 = vmatpush2.bf16.msra.mxu0 %v4415
    %5013 = vmatprep.subr.bf16.mxu0 %v4412
    %5014 = vmatpush2.bf16.msra.mxu0 %v4411
    %5015 = vmatprep.subr.bf16.mxu0 %v4408
    %5016 = vmatpush2.bf16.msra.mxu0 %v4407
    %5017 = vmatprep.subr.bf16.mxu0 %v4404
    %5018 = vmatpush2.bf16.msra.mxu0 %v4403
    %5019 = vmatprep.subr.bf16.mxu0 %v4400
    %5020 = vmatpush2.bf16.msra.mxu0 %v4399
    %5021 = vmatprep.subr.bf16.mxu0 %v4396
    %5022 = vmatpush2.bf16.msra.mxu0 %v4395
    %5023 = vmatprep.mubr.bf16.mxu0 %v3184
    %5024 = vmatmul.mubr.bf16.gmra.mxu0 %v3183
    %v5025 = vpop.f32.mrf.mxu0
    %v5026 = vadd.f32 %v4985, %v5025
    %v5027 = vpop.f32.mrf.mxu0
    %v5028 = vadd.f32 %v4987, %v5027
    %v5029 = vpop.f32.mrf.mxu0
    %v5030 = vpop.f32.mrf.mxu0
    %5031 = vdwg.mxu0
    %5032 = vmatprep.subr.bf16.mxu0 %v4456
    %5033 = vmatpush1.bf16.msra.mxu0 %v4455
    %5034 = vmatprep.subr.bf16.mxu0 %v4452
    %5035 = vmatpush1.bf16.msra.mxu0 %v4451
    %5036 = vmatprep.subr.bf16.mxu0 %v4448
    %5037 = vmatpush1.bf16.msra.mxu0 %v4447
    %5038 = vmatprep.subr.bf16.mxu0 %v4444
    %5039 = vmatpush1.bf16.msra.mxu0 %v4443
    %5040 = vmatprep.subr.bf16.mxu0 %v4440
    %5041 = vmatpush1.bf16.msra.mxu0 %v4439
    %5042 = vmatprep.subr.bf16.mxu0 %v4436
    %5043 = vmatpush1.bf16.msra.mxu0 %v4435
    %5044 = vmatprep.subr.bf16.mxu0 %v4432
    %5045 = vmatpush1.bf16.msra.mxu0 %v4431
    %5046 = vmatprep.subr.bf16.mxu0 %v4428
    %5047 = vmatpush1.bf16.msra.mxu0 %v4427
    %5048 = vmatprep.subr.bf16.mxu0 %v4488
    %5049 = vmatpush2.bf16.msra.mxu0 %v4487
    %5050 = vmatprep.subr.bf16.mxu0 %v4484
    %5051 = vmatpush2.bf16.msra.mxu0 %v4483
    %5052 = vmatprep.subr.bf16.mxu0 %v4480
    %5053 = vmatpush2.bf16.msra.mxu0 %v4479
    %5054 = vmatprep.subr.bf16.mxu0 %v4476
    %5055 = vmatpush2.bf16.msra.mxu0 %v4475
    %5056 = vmatprep.subr.bf16.mxu0 %v4472
    %5057 = vmatpush2.bf16.msra.mxu0 %v4471
    %5058 = vmatprep.subr.bf16.mxu0 %v4468
    %5059 = vmatpush2.bf16.msra.mxu0 %v4467
    %5060 = vmatprep.subr.bf16.mxu0 %v4464
    %5061 = vmatpush2.bf16.msra.mxu0 %v4463
    %5062 = vmatprep.subr.bf16.mxu0 %v4460
    %5063 = vmatpush2.bf16.msra.mxu0 %v4459
    %5064 = vmatprep.mubr.bf16.mxu0 %v3186
    %5065 = vmatmul.mubr.bf16.gmra.mxu0 %v3185
    %v5066 = vpop.f32.mrf.mxu0
    %v5067 = vadd.f32 %v5026, %v5066
    %v5068 = vpop.f32.mrf.mxu0
    %v5069 = vadd.f32 %v5028, %v5068
    %v5070 = vpop.f32.mrf.mxu0
    %v5071 = vpop.f32.mrf.mxu0
    %5072 = vdwg.mxu0
    %v5073 = vmax.f32 %v4903, 0.0
    %v5074 = vmax.f32 %v4905, 0.0
    %v5075 = vmax.f32 %v5067, 0.0
    %v5076 = vmax.f32 %v5069, 0.0
    %v5077 = vpack.c.bf16 %v5073, %v5073
    %v5078 = vpack.c.bf16 %v5074, %v5074
    %v5079 = vpack.c.bf16 %v5075, %v5075
    %v5080 = vpack.c.bf16 %v5076, %v5076
    %v5081 = vld [vmem:[#allocation9] sm:$0xf]
    %v5082 = vld [vmem:[#allocation9 + $0x4] sm:$0xf]
    %v5083 = vld [vmem:[#allocation9 + $0x8] sm:$0xf]
    %v5084 = vld [vmem:[#allocation9 + $0xc] sm:$0xf]
    %v5085 = vld [vmem:[#allocation9 + $0x10] sm:$0xf]
    %v5086 = vld [vmem:[#allocation9 + $0x14] sm:$0xf]
    %v5087 = vld [vmem:[#allocation9 + $0x18] sm:$0xf]
    %v5088 = vld [vmem:[#allocation9 + $0x1c] sm:$0xf]
    %v5089 = vld [vmem:[#allocation9 + $0x20] sm:$0xf]
    %v5090 = vld [vmem:[#allocation9 + $0x24] sm:$0xf]
    %v5091 = vld [vmem:[#allocation9 + $0x28] sm:$0xf]
    %v5092 = vld [vmem:[#allocation9 + $0x2c] sm:$0xf]
    %v5093 = vld [vmem:[#allocation9 + $0x30] sm:$0xf]
    %v5094 = vld [vmem:[#allocation9 + $0x34] sm:$0xf]
    %v5095 = vld [vmem:[#allocation9 + $0x38] sm:$0xf]
    %v5096 = vld [vmem:[#allocation9 + $0x3c] sm:$0xf]
    %v5097 = vld [vmem:[#allocation9 + $0x40] sm:$0xf]
    %v5098 = vld [vmem:[#allocation9 + $0x44] sm:$0xf]
    %v5099 = vld [vmem:[#allocation9 + $0x48] sm:$0xf]
    %v5100 = vld [vmem:[#allocation9 + $0x4c] sm:$0xf]
    %v5101 = vld [vmem:[#allocation9 + $0x50] sm:$0xf]
    %v5102 = vld [vmem:[#allocation9 + $0x54] sm:$0xf]
    %v5103 = vld [vmem:[#allocation9 + $0x58] sm:$0xf]
    %v5104 = vld [vmem:[#allocation9 + $0x5c] sm:$0xf]
    %v5105 = vld [vmem:[#allocation9 + $0x60] sm:$0xf]
    %v5106 = vld [vmem:[#allocation9 + $0x64] sm:$0xf]
    %v5107 = vld [vmem:[#allocation9 + $0x68] sm:$0xf]
    %v5108 = vld [vmem:[#allocation9 + $0x6c] sm:$0xf]
    %v5109 = vld [vmem:[#allocation9 + $0x70] sm:$0xf]
    %v5110 = vld [vmem:[#allocation9 + $0x74] sm:$0xf]
    %v5111 = vld [vmem:[#allocation9 + $0x78] sm:$0xf]
    %v5112 = vld [vmem:[#allocation9 + $0x7c] sm:$0xf]
    %v5113 = vld [vmem:[#allocation9 + $0x80] sm:$0xf]
    %v5114 = vld [vmem:[#allocation9 + $0x84] sm:$0xf]
    %v5115 = vld [vmem:[#allocation9 + $0x88] sm:$0xf]
    %v5116 = vld [vmem:[#allocation9 + $0x8c] sm:$0xf]
    %v5117 = vld [vmem:[#allocation9 + $0x90] sm:$0xf]
    %v5118 = vld [vmem:[#allocation9 + $0x94] sm:$0xf]
    %v5119 = vld [vmem:[#allocation9 + $0x98] sm:$0xf]
    %v5120 = vld [vmem:[#allocation9 + $0x9c] sm:$0xf]
    %v5121 = vld [vmem:[#allocation9 + $0xa0] sm:$0xf]
    %v5122 = vld [vmem:[#allocation9 + $0xa4] sm:$0xf]
    %v5123 = vld [vmem:[#allocation9 + $0xa8] sm:$0xf]
    %v5124 = vld [vmem:[#allocation9 + $0xac] sm:$0xf]
    %v5125 = vld [vmem:[#allocation9 + $0xb0] sm:$0xf]
    %v5126 = vld [vmem:[#allocation9 + $0xb4] sm:$0xf]
    %v5127 = vld [vmem:[#allocation9 + $0xb8] sm:$0xf]
    %v5128 = vld [vmem:[#allocation9 + $0xbc] sm:$0xf]
    %v5129 = vld [vmem:[#allocation9 + $0xc0] sm:$0xf]
    %v5130 = vld [vmem:[#allocation9 + $0xc4] sm:$0xf]
    %v5131 = vld [vmem:[#allocation9 + $0xc8] sm:$0xf]
    %v5132 = vld [vmem:[#allocation9 + $0xcc] sm:$0xf]
    %v5133 = vld [vmem:[#allocation9 + $0xd0] sm:$0xf]
    %v5134 = vld [vmem:[#allocation9 + $0xd4] sm:$0xf]
    %v5135 = vld [vmem:[#allocation9 + $0xd8] sm:$0xf]
    %v5136 = vld [vmem:[#allocation9 + $0xdc] sm:$0xf]
    %v5137 = vld [vmem:[#allocation9 + $0xe0] sm:$0xf]
    %v5138 = vld [vmem:[#allocation9 + $0xe4] sm:$0xf]
    %v5139 = vld [vmem:[#allocation9 + $0xe8] sm:$0xf]
    %v5140 = vld [vmem:[#allocation9 + $0xec] sm:$0xf]
    %v5141 = vld [vmem:[#allocation9 + $0xf0] sm:$0xf]
    %v5142 = vld [vmem:[#allocation9 + $0xf4] sm:$0xf]
    %v5143 = vld [vmem:[#allocation9 + $0xf8] sm:$0xf]
    %v5144 = vld [vmem:[#allocation9 + $0xfc] sm:$0xf]
    %v5145 = vld [vmem:[#allocation10] sm:$0x1]
    %v5147 = vlaneseq
    %v5148 = vshrl.u32 %v5147, 7
    %v5149 = vsub.s32 0, %v5148
    %v5150 = vrot.slane %v5145, %v5149
    %v5216 = vunpack.c.l.b16 %v5081
    %v5217 = vunpack.c.l.b16 %v5082
    %v5218 = vunpack.c.l.b16 %v5083
    %v5219 = vunpack.c.l.b16 %v5084
    %v5220 = vunpack.c.l.b16 %v5085
    %v5221 = vunpack.c.l.b16 %v5086
    %v5222 = vunpack.c.l.b16 %v5087
    %v5223 = vunpack.c.l.b16 %v5088
    %v5224 = vunpack.c.l.b16 %v5089
    %v5225 = vunpack.c.l.b16 %v5090
    %v5226 = vunpack.c.l.b16 %v5091
    %v5227 = vunpack.c.l.b16 %v5092
    %v5228 = vunpack.c.l.b16 %v5093
    %v5229 = vunpack.c.l.b16 %v5094
    %v5230 = vunpack.c.l.b16 %v5095
    %v5231 = vunpack.c.l.b16 %v5096
    %v5232 = vunpack.c.l.b16 %v5097
    %v5233 = vunpack.c.l.b16 %v5098
    %v5234 = vunpack.c.l.b16 %v5099
    %v5235 = vunpack.c.l.b16 %v5100
    %v5236 = vunpack.c.l.b16 %v5101
    %v5237 = vunpack.c.l.b16 %v5102
    %v5238 = vunpack.c.l.b16 %v5103
    %v5239 = vunpack.c.l.b16 %v5104
    %v5240 = vunpack.c.l.b16 %v5105
    %v5241 = vunpack.c.l.b16 %v5106
    %v5242 = vunpack.c.l.b16 %v5107
    %v5243 = vunpack.c.l.b16 %v5108
    %v5244 = vunpack.c.l.b16 %v5109
    %v5245 = vunpack.c.l.b16 %v5110
    %v5246 = vunpack.c.l.b16 %v5111
    %v5247 = vunpack.c.l.b16 %v5112
    %v5248 = vunpack.c.l.b16 %v5113
    %v5249 = vunpack.c.l.b16 %v5114
    %v5250 = vunpack.c.l.b16 %v5115
    %v5251 = vunpack.c.l.b16 %v5116
    %v5252 = vunpack.c.l.b16 %v5117
    %v5253 = vunpack.c.l.b16 %v5118
    %v5254 = vunpack.c.l.b16 %v5119
    %v5255 = vunpack.c.l.b16 %v5120
    %v5256 = vunpack.c.l.b16 %v5121
    %v5257 = vunpack.c.l.b16 %v5122
    %v5258 = vunpack.c.l.b16 %v5123
    %v5259 = vunpack.c.l.b16 %v5124
    %v5260 = vunpack.c.l.b16 %v5125
    %v5261 = vunpack.c.l.b16 %v5126
    %v5262 = vunpack.c.l.b16 %v5127
    %v5263 = vunpack.c.l.b16 %v5128
    %v5264 = vunpack.c.l.b16 %v5129
    %v5265 = vunpack.c.l.b16 %v5130
    %v5266 = vunpack.c.l.b16 %v5131
    %v5267 = vunpack.c.l.b16 %v5132
    %v5268 = vunpack.c.l.b16 %v5133
    %v5269 = vunpack.c.l.b16 %v5134
    %v5270 = vunpack.c.l.b16 %v5135
    %v5271 = vunpack.c.l.b16 %v5136
    %v5272 = vunpack.c.l.b16 %v5137
    %v5273 = vunpack.c.l.b16 %v5138
    %v5274 = vunpack.c.l.b16 %v5139
    %v5275 = vunpack.c.l.b16 %v5140
    %v5276 = vunpack.c.l.b16 %v5141
    %v5277 = vunpack.c.l.b16 %v5142
    %v5278 = vunpack.c.l.b16 %v5143
    %v5279 = vunpack.c.l.b16 %v5144
    %v5280 = vpack.c.b16 %v5217, %v5216
    %v5281 = vpack.c.b16 %v5219, %v5218
    %v5282 = vpack.c.b16 %v5221, %v5220
    %v5283 = vpack.c.b16 %v5223, %v5222
    %v5284 = vpack.c.b16 %v5225, %v5224
    %v5285 = vpack.c.b16 %v5227, %v5226
    %v5286 = vpack.c.b16 %v5229, %v5228
    %v5287 = vpack.c.b16 %v5231, %v5230
    %v5288 = vpack.c.b16 %v5233, %v5232
    %v5289 = vpack.c.b16 %v5235, %v5234
    %v5290 = vpack.c.b16 %v5237, %v5236
    %v5291 = vpack.c.b16 %v5239, %v5238
    %v5292 = vpack.c.b16 %v5241, %v5240
    %v5293 = vpack.c.b16 %v5243, %v5242
    %v5294 = vpack.c.b16 %v5245, %v5244
    %v5295 = vpack.c.b16 %v5247, %v5246
    %v5296 = vpack.c.b16 %v5249, %v5248
    %v5297 = vpack.c.b16 %v5251, %v5250
    %v5298 = vpack.c.b16 %v5253, %v5252
    %v5299 = vpack.c.b16 %v5255, %v5254
    %v5300 = vpack.c.b16 %v5257, %v5256
    %v5301 = vpack.c.b16 %v5259, %v5258
    %v5302 = vpack.c.b16 %v5261, %v5260
    %v5303 = vpack.c.b16 %v5263, %v5262
    %v5304 = vpack.c.b16 %v5265, %v5264
    %v5305 = vpack.c.b16 %v5267, %v5266
    %v5306 = vpack.c.b16 %v5269, %v5268
    %v5307 = vpack.c.b16 %v5271, %v5270
    %v5308 = vpack.c.b16 %v5273, %v5272
    %v5309 = vpack.c.b16 %v5275, %v5274
    %v5310 = vpack.c.b16 %v5277, %v5276
    %v5311 = vpack.c.b16 %v5279, %v5278
    %5344 = vmatprep.subr.bf16.mxu0 0
    %5345 = vmatpush1.bf16.msra.mxu0 %v5287
    %5346 = vmatprep.subr.bf16.mxu0 0
    %5347 = vmatpush1.bf16.msra.mxu0 %v5286
    %5348 = vmatprep.subr.bf16.mxu0 0
    %5349 = vmatpush1.bf16.msra.mxu0 %v5285
    %5350 = vmatprep.subr.bf16.mxu0 0
    %5351 = vmatpush1.bf16.msra.mxu0 %v5284
    %5352 = vmatprep.subr.bf16.mxu0 0
    %5353 = vmatpush1.bf16.msra.mxu0 %v5283
    %5354 = vmatprep.subr.bf16.mxu0 0
    %5355 = vmatpush1.bf16.msra.mxu0 %v5282
    %5356 = vmatprep.subr.bf16.mxu0 0
    %5357 = vmatpush1.bf16.msra.mxu0 %v5281
    %5358 = vmatprep.subr.bf16.mxu0 0
    %5359 = vmatpush1.bf16.msra.mxu0 %v5280
    %5360 = vmatprep.subr.bf16.mxu0 0
    %5361 = vmatpush2.bf16.msra.mxu0 %v5295
    %5362 = vmatprep.subr.bf16.mxu0 0
    %5363 = vmatpush2.bf16.msra.mxu0 %v5294
    %5364 = vmatprep.subr.bf16.mxu0 0
    %5365 = vmatpush2.bf16.msra.mxu0 %v5293
    %5366 = vmatprep.subr.bf16.mxu0 0
    %5367 = vmatpush2.bf16.msra.mxu0 %v5292
    %5368 = vmatprep.subr.bf16.mxu0 0
    %5369 = vmatpush2.bf16.msra.mxu0 %v5291
    %5370 = vmatprep.subr.bf16.mxu0 0
    %5371 = vmatpush2.bf16.msra.mxu0 %v5290
    %5372 = vmatprep.subr.bf16.mxu0 0
    %5373 = vmatpush2.bf16.msra.mxu0 %v5289
    %5374 = vmatprep.subr.bf16.mxu0 0
    %5375 = vmatpush2.bf16.msra.mxu0 %v5288
    %5376 = vmatprep.mubr.bf16.mxu0 %v5078
    %5377 = vmatmul.mubr.bf16.gmra.mxu0 %v5077
    %v5378 = vpop.f32.mrf.mxu0
    %v5379 = vadd.f32 %v5150, %v5378
    %v5380 = vpop.f32.mrf.mxu0
    %v5381 = vpop.f32.mrf.mxu0
    %v5382 = vpop.f32.mrf.mxu0
    %5383 = vdwg.mxu0
    %5384 = vmatprep.subr.bf16.mxu0 0
    %5385 = vmatpush1.bf16.msra.mxu0 %v5303
    %5386 = vmatprep.subr.bf16.mxu0 0
    %5387 = vmatpush1.bf16.msra.mxu0 %v5302
    %5388 = vmatprep.subr.bf16.mxu0 0
    %5389 = vmatpush1.bf16.msra.mxu0 %v5301
    %5390 = vmatprep.subr.bf16.mxu0 0
    %5391 = vmatpush1.bf16.msra.mxu0 %v5300
    %5392 = vmatprep.subr.bf16.mxu0 0
    %5393 = vmatpush1.bf16.msra.mxu0 %v5299
    %5394 = vmatprep.subr.bf16.mxu0 0
    %5395 = vmatpush1.bf16.msra.mxu0 %v5298
    %5396 = vmatprep.subr.bf16.mxu0 0
    %5397 = vmatpush1.bf16.msra.mxu0 %v5297
    %5398 = vmatprep.subr.bf16.mxu0 0
    %5399 = vmatpush1.bf16.msra.mxu0 %v5296
    %5400 = vmatprep.subr.bf16.mxu0 0
    %5401 = vmatpush2.bf16.msra.mxu0 %v5311
    %5402 = vmatprep.subr.bf16.mxu0 0
    %5403 = vmatpush2.bf16.msra.mxu0 %v5310
    %5404 = vmatprep.subr.bf16.mxu0 0
    %5405 = vmatpush2.bf16.msra.mxu0 %v5309
    %5406 = vmatprep.subr.bf16.mxu0 0
    %5407 = vmatpush2.bf16.msra.mxu0 %v5308
    %5408 = vmatprep.subr.bf16.mxu0 0
    %5409 = vmatpush2.bf16.msra.mxu0 %v5307
    %5410 = vmatprep.subr.bf16.mxu0 0
    %5411 = vmatpush2.bf16.msra.mxu0 %v5306
    %5412 = vmatprep.subr.bf16.mxu0 0
    %5413 = vmatpush2.bf16.msra.mxu0 %v5305
    %5414 = vmatprep.subr.bf16.mxu0 0
    %5415 = vmatpush2.bf16.msra.mxu0 %v5304
    %5416 = vmatprep.mubr.bf16.mxu0 %v5080
    %5417 = vmatmul.mubr.bf16.gmra.mxu0 %v5079
    %v5418 = vpop.f32.mrf.mxu0
    %v5419 = vadd.f32 %v5379, %v5418
    %v5420 = vpop.f32.mrf.mxu0
    %v5421 = vpop.f32.mrf.mxu0
    %v5422 = vpop.f32.mrf.mxu0
    %5423 = vdwg.mxu0
    %v5424 = vpack.c.bf16 %v5419, %v5419
    %5425 = vst [vmem:[%s7] sm:$0xf] %v5424
    // Predicated region
    $region54: #{simple_mlp_forward.1} parent=1 // pred_check
      _
    $region55: #{simple_mlp_forward.1} parent=1 // pred_check_branch
      %5427 = sbr.rel (0) target = $region57
    $region56: #{simple_mlp_forward.1} parent=1 // pred_region
      _
    $region57: #{simple_mlp_forward.1} parent=1 // pred_fallthru
      _
    // Predicated region
    $region58: #{simple_mlp_forward.1} parent=1 // pred_check
      _
    $region59: #{simple_mlp_forward.1} parent=1 // pred_check_branch
      %5429 = sbr.rel (0) target = $region61
    $region60: #{simple_mlp_forward.1} parent=1 // pred_region
      _
    $region61: #{simple_mlp_forward.1} parent=1 // pred_fallthru
      _
    %5430 = vsyncpa [#allocation3], 1
    %5431 = vsyncpa [#allocation5], 1
    %5432 = vsyncpa [#allocation8], 1
    %5433 = vsyncpa [#allocation11], 1

</llo_original>
